<compile_context>
chip_gen: v6e
topology: v6e:2x2x1
jax: 0.10.0
libtpu: 0.0.40
codegen_flags: <defaults>
</compile_context>

<pallas_src>
import jax
import jax.numpy as jnp
from jax.experimental import pallas as pl
from jax.experimental.pallas import tpu as pltpu


def _erf(x):
    # Abramowitz & Stegun 7.1.26 polynomial approximation (|err| < 1.5e-7).
    # Used because nn.GELU() is the exact (erf) GELU and lax.erf has no
    # guaranteed Mosaic lowering; uses only exp / mul / add (EUP + VPU).
    p = 0.3275911
    a1, a2, a3, a4, a5 = (0.254829592, -0.284496736, 1.421413741,
                          -1.453152027, 1.061405429)
    s = jnp.where(x >= 0.0, 1.0, -1.0)
    z = jnp.abs(x)
    t = 1.0 / (1.0 + p * z)
    poly = t * (a1 + t * (a2 + t * (a3 + t * (a4 + t * a5))))
    return s * (1.0 - poly * jnp.exp(-z * z))


def convnext4_block_kernel(x_ref, ws_ref, bs_ref, wsame_ref, wcross_ref,
                           perm_ref, bd_ref, lnw_ref, lnb_ref,
                           w1_ref, b1_ref, w2_ref, b2_ref, gls_ref,
                           o_ref, pad_ref):
    # x_ref:      (H2, W2, 4*dim)  space-to-depth input tile (one batch elem)
    # ws_ref:     (4*dim, C2)      sconv weight as a dense matmul
    # wsame_ref:  (49, C2)         dwconv taps hitting the same channel
    # wcross_ref: (49, C2)         dwconv taps hitting the partner channel
    # perm_ref:   (C2, C2)         channel-pair swap permutation matrix
    # o_ref:      (H2, W2, C2)     final block output (NHWC)
    # pad_ref:    VMEM scratch (H2+6, W2+6, C2) zero-padded dwconv input
    H2, W2, K4 = x_ref.shape
    _, _, C2 = o_ref.shape
    HW = H2 * W2
    KH = KW = 7
    PAD = 3

    # ---- sconv: 2x2 / stride-2 conv as ONE space-to-depth matmul (K=4*dim) ---
    x2d = x_ref[...].reshape(HW, K4)
    inp = jnp.dot(x2d, ws_ref[...], preferred_element_type=jnp.float32)
    inp = inp + bs_ref[...]                       # (HW, C2) = residual branch

    # ---- dwconv 7x7, pad 3, groups=dim (2 in / 2 out channels per group) ----
    pad_ref[...] = jnp.zeros_like(pad_ref)        # in-kernel zero halo
    pad_ref[PAD:PAD + H2, PAD:PAD + W2, :] = inp.reshape(H2, W2, C2)

    acc_same = jnp.zeros((H2, W2, C2), jnp.float32)
    acc_cross = jnp.zeros((H2, W2, C2), jnp.float32)
    for dy in range(KH):                          # static unroll -> 49 taps
        for dx in range(KW):
            tap = dy * KW + dx
            patch = pad_ref[dy:dy + H2, dx:dx + W2, :]
            acc_same = acc_same + patch * wsame_ref[tap:tap + 1, :]
            acc_cross = acc_cross + patch * wcross_ref[tap:tap + 1, :]
    # swap channel pairs of the cross accumulator with one permutation matmul
    cross = jnp.dot(acc_cross.reshape(HW, C2), perm_ref[...],
                    preferred_element_type=jnp.float32)
    dw = acc_same.reshape(HW, C2) + cross + bd_ref[...]

    # ---- LayerNorm over channels (channels_last, eps=1e-6) ----
    mu = jnp.mean(dw, axis=-1, keepdims=True)
    var = jnp.mean((dw - mu) * (dw - mu), axis=-1, keepdims=True)
    xn = (dw - mu) * jax.lax.rsqrt(var + 1e-6)
    xn = xn * lnw_ref[...] + lnb_ref[...]

    # ---- MLP: pwconv1 -> exact GELU -> pwconv2 ----
    h = jnp.dot(xn, w1_ref[...], preferred_element_type=jnp.float32) + b1_ref[...]
    g = 0.5 * h * (1.0 + _erf(h * 0.7071067811865476))
    y = jnp.dot(g, w2_ref[...], preferred_element_type=jnp.float32) + b2_ref[...]

    # ---- layer scale + residual with the sconv output ----
    out = inp + gls_ref[...] * y
    o_ref[...] = out.reshape(H2, W2, C2).astype(o_ref.dtype)


def convnext4_block_forward(x_nchw, params):
    """Forward of convnext4_block. x_nchw: (N, dim, H, W) f32 -> (N, 2*dim, H/2, W/2)."""
    N, dim, H, W = x_nchw.shape
    C2, H4 = 2 * dim, 4 * dim
    H2, W2 = H // 2, W // 2
    K4 = 4 * dim
    KH = KW = 7

    # space-to-depth + NCHW->NHWC folded into a single transpose
    x_s2d = x_nchw.reshape(N, dim, H2, 2, W2, 2)
    x_s2d = jnp.transpose(x_s2d, (0, 2, 4, 3, 5, 1)).reshape(N, H2, W2, K4)
    x_s2d = x_s2d.astype(jnp.float32)

    # sconv weight (C2, dim, 2, 2) -> (dy, dx, ci, co) -> (4*dim, C2)
    ws = jnp.transpose(params["sconv_w"], (2, 3, 1, 0)).reshape(K4, C2)
    bs = params["sconv_b"].reshape(1, C2)

    # grouped dwconv weight (C2, 2, 7, 7); out channel c uses in channels
    # {c, c^1}.  Split into same-channel / partner-channel tap tables (49, C2).
    wd = params["dwconv_w"]
    c_idx = jnp.arange(C2)
    parity = c_idx % 2
    partner = jnp.bitwise_xor(c_idx, 1)
    wsame = jnp.transpose(wd[c_idx, parity, :, :], (1, 2, 0)).reshape(KH * KW, C2)
    wcross = jnp.transpose(wd[partner, parity, :, :], (1, 2, 0)).reshape(KH * KW, C2)
    perm = jax.nn.one_hot(partner, C2, dtype=jnp.float32)   # P[i, i^1] = 1
    bd = params["dwconv_b"].reshape(1, C2)

    lnw = params["ln_w"].reshape(1, C2)
    lnb = params["ln_b"].reshape(1, C2)
    w1 = jnp.transpose(params["pw1_w"])          # Linear stores (out, in)
    b1 = params["pw1_b"].reshape(1, H4)
    w2 = jnp.transpose(params["pw2_w"])
    b2 = params["pw2_b"].reshape(1, C2)
    gls = params["gamma"].reshape(1, C2)

    flops_per_n = (2 * H2 * W2 * (K4 * C2 + C2 * C2 + 2 * C2 * H4)
                   + 4 * KH * KW * H2 * W2 * C2)
    cost = pl.CostEstimate(
        flops=int(N * flops_per_n),
        transcendentals=int(N * H2 * W2 * H4),
        bytes_accessed=int(4 * (N * H2 * W2 * (K4 + C2))))

    f32 = jnp.float32
    out_nhwc = pl.pallas_call(
        convnext4_block_kernel,
        out_shape=jax.ShapeDtypeStruct((N, H2, W2, C2), jnp.float32),
        grid_spec=pltpu.PrefetchScalarGridSpec(
            num_scalar_prefetch=0,
            grid=(N,),
            in_specs=[
                pl.BlockSpec((pl.Squeezed(), H2, W2, K4), lambda n: (n, 0, 0, 0)),
                pl.BlockSpec((K4, C2), lambda n: (0, 0)),
                pl.BlockSpec((1, C2), lambda n: (0, 0)),
                pl.BlockSpec((KH * KW, C2), lambda n: (0, 0)),
                pl.BlockSpec((KH * KW, C2), lambda n: (0, 0)),
                pl.BlockSpec((C2, C2), lambda n: (0, 0)),
                pl.BlockSpec((1, C2), lambda n: (0, 0)),
                pl.BlockSpec((1, C2), lambda n: (0, 0)),
                pl.BlockSpec((1, C2), lambda n: (0, 0)),
                pl.BlockSpec((C2, H4), lambda n: (0, 0)),
                pl.BlockSpec((1, H4), lambda n: (0, 0)),
                pl.BlockSpec((H4, C2), lambda n: (0, 0)),
                pl.BlockSpec((1, C2), lambda n: (0, 0)),
                pl.BlockSpec((1, C2), lambda n: (0, 0)),
            ],
            out_specs=pl.BlockSpec((pl.Squeezed(), H2, W2, C2),
                                   lambda n: (n, 0, 0, 0)),
            scratch_shapes=[pltpu.VMEM((H2 + 6, W2 + 6, C2), jnp.float32)],
        ),
        compiler_params=pltpu.CompilerParams(
            dimension_semantics=("parallel",)),
        cost_estimate=cost,
    )(x_s2d, ws.astype(f32), bs.astype(f32), wsame.astype(f32),
      wcross.astype(f32), perm, bd.astype(f32), lnw.astype(f32),
      lnb.astype(f32), w1.astype(f32), b1.astype(f32), w2.astype(f32),
      b2.astype(f32), gls.astype(f32))

    return jnp.transpose(out_nhwc, (0, 3, 1, 2))   # back to NCHW


def _reference(x, p, dim):
    hp = jax.lax.Precision.HIGHEST
    inp = jax.lax.conv_general_dilated(
        x, p["sconv_w"], window_strides=(2, 2), padding="VALID",
        dimension_numbers=("NCHW", "OIHW", "NCHW"), precision=hp)
    inp = inp + p["sconv_b"].reshape(1, -1, 1, 1)
    dw = jax.lax.conv_general_dilated(
        inp, p["dwconv_w"], window_strides=(1, 1), padding=((3, 3), (3, 3)),
        dimension_numbers=("NCHW", "OIHW", "NCHW"),
        feature_group_count=dim, precision=hp)
    dw = dw + p["dwconv_b"].reshape(1, -1, 1, 1)
    t = jnp.transpose(dw, (0, 2, 3, 1))
    mu = t.mean(-1, keepdims=True)
    var = ((t - mu) ** 2).mean(-1, keepdims=True)
    t = (t - mu) / jnp.sqrt(var + 1e-6)
    t = t * p["ln_w"] + p["ln_b"]
    h = jnp.dot(t, p["pw1_w"].T, precision=hp) + p["pw1_b"]
    h = jax.nn.gelu(h, approximate=False)
    y = jnp.dot(h, p["pw2_w"].T, precision=hp) + p["pw2_b"]
    y = y * p["gamma"]
    y = jnp.transpose(y, (0, 3, 1, 2))
    return inp + y


if __name__ == "__main__":
    key = jax.random.PRNGKey(0)
    ks = jax.random.split(key, 12)

    dim = 4
    N, H, W = 2, 16, 16
    C2, H4 = 2 * dim, 4 * dim

    x = jax.random.normal(ks[0], (N, dim, H, W), dtype=jnp.float32)
    params = {
        "sconv_w": jax.random.normal(ks[1], (C2, dim, 2, 2), jnp.float32) * 0.25,
        "sconv_b": jax.random.normal(ks[2], (C2,), jnp.float32) * 0.1,
        "dwconv_w": jax.random.normal(ks[3], (C2, 2, 7, 7), jnp.float32) * 0.1,
        "dwconv_b": jax.random.normal(ks[4], (C2,), jnp.float32) * 0.1,
        "ln_w": 1.0 + 0.1 * jax.random.normal(ks[5], (C2,), jnp.float32),
        "ln_b": 0.1 * jax.random.normal(ks[6], (C2,), jnp.float32),
        "pw1_w": jax.random.normal(ks[7], (H4, C2), jnp.float32) * 0.3,
        "pw1_b": jax.random.normal(ks[8], (H4,), jnp.float32) * 0.1,
        "pw2_w": jax.random.normal(ks[9], (C2, H4), jnp.float32) * 0.25,
        "pw2_b": jax.random.normal(ks[10], (C2,), jnp.float32) * 0.1,
        # layer-scale gamma: learnable param; set O(1) here (instead of the
        # 1e-6 init) so the MLP branch is numerically exercised by the check.
        "gamma": 0.5 + 0.1 * jax.random.normal(ks[11], (C2,), jnp.float32),
    }

    out = convnext4_block_forward(x, params)
    out = jax.block_until_ready(out)
    assert out.shape == (N, C2, H // 2, W // 2)

    ref = _reference(x, params, dim)
    err = float(jnp.max(jnp.abs(out - ref)))
    assert jnp.allclose(out, ref, atol=1e-3, rtol=1e-3), f"mismatch vs reference, max err {err}"

    print("KERNEL_OK")
</pallas_src>

<mosaic_0001>
module attributes {stable_mosaic.version = 11 : i64} {
  func.func @convnext4_block_kernel(%arg0: i32, %arg1: memref<1x8x8x16xf32, #tpu.memory_space<vmem>>, %arg2: memref<16x8xf32, #tpu.memory_space<vmem>>, %arg3: memref<1x8xf32, #tpu.memory_space<vmem>>, %arg4: memref<49x8xf32, #tpu.memory_space<vmem>>, %arg5: memref<49x8xf32, #tpu.memory_space<vmem>>, %arg6: memref<8x8xf32, #tpu.memory_space<vmem>>, %arg7: memref<1x8xf32, #tpu.memory_space<vmem>>, %arg8: memref<1x8xf32, #tpu.memory_space<vmem>>, %arg9: memref<1x8xf32, #tpu.memory_space<vmem>>, %arg10: memref<8x16xf32, #tpu.memory_space<vmem>>, %arg11: memref<1x16xf32, #tpu.memory_space<vmem>>, %arg12: memref<16x8xf32, #tpu.memory_space<vmem>>, %arg13: memref<1x8xf32, #tpu.memory_space<vmem>>, %arg14: memref<1x8xf32, #tpu.memory_space<vmem>>, %arg15: memref<1x8x8x8xf32, #tpu.memory_space<vmem>>, %arg16: memref<14x14x8xf32, #tpu.memory_space<vmem>>) attributes {dimension_semantics = [#tpu.dimension_semantics<parallel>], iteration_bounds = array<i64: 2>, scalar_prefetch = 0 : i64, scratch_operands = 1 : i64, tpu.core_type = #tpu.core_type<tc>, window_params = [{transform_indices = @transform_0, window_bounds = array<i64: 1, 8, 8, 16>}, {pipeline_mode = #tpu.pipeline_mode<synchronous>, transform_indices = @transform_1, window_bounds = array<i64: 16, 8>}, {pipeline_mode = #tpu.pipeline_mode<synchronous>, transform_indices = @transform_2, window_bounds = array<i64: 1, 8>}, {pipeline_mode = #tpu.pipeline_mode<synchronous>, transform_indices = @transform_3, window_bounds = array<i64: 49, 8>}, {pipeline_mode = #tpu.pipeline_mode<synchronous>, transform_indices = @transform_4, window_bounds = array<i64: 49, 8>}, {pipeline_mode = #tpu.pipeline_mode<synchronous>, transform_indices = @transform_5, window_bounds = array<i64: 8, 8>}, {pipeline_mode = #tpu.pipeline_mode<synchronous>, transform_indices = @transform_6, window_bounds = array<i64: 1, 8>}, {pipeline_mode = #tpu.pipeline_mode<synchronous>, transform_indices = @transform_7, window_bounds = array<i64: 1, 8>}, {pipeline_mode = #tpu.pipeline_mode<synchronous>, transform_indices = @transform_8, window_bounds = array<i64: 1, 8>}, {pipeline_mode = #tpu.pipeline_mode<synchronous>, transform_indices = @transform_9, window_bounds = array<i64: 8, 16>}, {pipeline_mode = #tpu.pipeline_mode<synchronous>, transform_indices = @transform_10, window_bounds = array<i64: 1, 16>}, {pipeline_mode = #tpu.pipeline_mode<synchronous>, transform_indices = @transform_11, window_bounds = array<i64: 16, 8>}, {pipeline_mode = #tpu.pipeline_mode<synchronous>, transform_indices = @transform_12, window_bounds = array<i64: 1, 8>}, {pipeline_mode = #tpu.pipeline_mode<synchronous>, transform_indices = @transform_13, window_bounds = array<i64: 1, 8>}, {transform_indices = @transform_14, window_bounds = array<i64: 1, 8, 8, 8>}]} {
    %c0 = arith.constant 0 : index
    %c0_0 = arith.constant 0 : index
    %c0_1 = arith.constant 0 : index
    %c0_2 = arith.constant 0 : index
    %0 = vector.load %arg1[%c0, %c0_0, %c0_1, %c0_2] : memref<1x8x8x16xf32, #tpu.memory_space<vmem>>, vector<1x8x8x16xf32>
    %1 = vector.shape_cast %0 : vector<1x8x8x16xf32> to vector<8x8x16xf32>
    %2 = vector.shape_cast %1 : vector<8x8x16xf32> to vector<64x16xf32>
    %c0_3 = arith.constant 0 : index
    %c0_4 = arith.constant 0 : index
    %3 = vector.load %arg2[%c0_3, %c0_4] : memref<16x8xf32, #tpu.memory_space<vmem>>, vector<16x8xf32>
    %cst = arith.constant dense<0.000000e+00> : vector<64x8xf32>
    %4 = tpu.matmul %2, %3, %cst {dimension_numbers = #tpu.dot_dimension_numbers<[1], [0], [0], [1], [0, 0, 1, 1], [], []>} : vector<64x16xf32>, vector<16x8xf32>, vector<64x8xf32> -> vector<64x8xf32>
    %c0_5 = arith.constant 0 : index
    %c0_6 = arith.constant 0 : index
    %5 = vector.load %arg3[%c0_5, %c0_6] : memref<1x8xf32, #tpu.memory_space<vmem>>, vector<1x8xf32>
    %6 = vector.broadcast %5 : vector<1x8xf32> to vector<64x8xf32>
    %7 = arith.addf %4, %6 : vector<64x8xf32>
    %cst_7 = arith.constant 0.000000e+00 : f32
    %8 = vector.broadcast %cst_7 : f32 to vector<14x14x8xf32>
    %c0_8 = arith.constant 0 : index
    %c0_9 = arith.constant 0 : index
    %c0_10 = arith.constant 0 : index
    %9 = vector.load %arg16[%c0_8, %c0_9, %c0_10] : memref<14x14x8xf32, #tpu.memory_space<vmem>>, vector<14x14x8xf32>
    tpu.vector_store %arg16[%c0_8, %c0_9, %c0_10], %8 {strides = array<i32>} : memref<14x14x8xf32, #tpu.memory_space<vmem>>, vector<14x14x8xf32>,
    %10 = vector.shape_cast %7 : vector<64x8xf32> to vector<8x8x8xf32>
    %c3 = arith.constant 3 : index
    %c3_11 = arith.constant 3 : index
    %c0_12 = arith.constant 0 : index
    %11 = vector.load %arg16[%c3, %c3_11, %c0_12] : memref<14x14x8xf32, #tpu.memory_space<vmem>>, vector<8x8x8xf32>
    tpu.vector_store %arg16[%c3, %c3_11, %c0_12], %10 {strides = array<i32>} : memref<14x14x8xf32, #tpu.memory_space<vmem>>, vector<8x8x8xf32>,
    %cst_13 = arith.constant 0.000000e+00 : f32
    %12 = vector.broadcast %cst_13 : f32 to vector<8x8x8xf32>
    %cst_14 = arith.constant 0.000000e+00 : f32
    %13 = vector.broadcast %cst_14 : f32 to vector<8x8x8xf32>
    %c0_15 = arith.constant 0 : index
    %c0_16 = arith.constant 0 : index
    %c0_17 = arith.constant 0 : index
    %14 = vector.load %arg16[%c0_15, %c0_16, %c0_17] : memref<14x14x8xf32, #tpu.memory_space<vmem>>, vector<8x8x8xf32>
    %c0_18 = arith.constant 0 : index
    %c0_19 = arith.constant 0 : index
    %15 = vector.load %arg4[%c0_18, %c0_19] : memref<49x8xf32, #tpu.memory_space<vmem>>, vector<1x8xf32>
    %16 = vector.shape_cast %15 : vector<1x8xf32> to vector<1x1x8xf32>
    %17 = vector.broadcast %16 : vector<1x1x8xf32> to vector<8x8x8xf32>
    %18 = arith.mulf %14, %17 : vector<8x8x8xf32>
    %19 = arith.addf %12, %18 : vector<8x8x8xf32>
    %c0_20 = arith.constant 0 : index
    %c0_21 = arith.constant 0 : index
    %20 = vector.load %arg5[%c0_20, %c0_21] : memref<49x8xf32, #tpu.memory_space<vmem>>, vector<1x8xf32>
    %21 = vector.shape_cast %20 : vector<1x8xf32> to vector<1x1x8xf32>
    %22 = vector.broadcast %21 : vector<1x1x8xf32> to vector<8x8x8xf32>
    %23 = arith.mulf %14, %22 : vector<8x8x8xf32>
    %24 = arith.addf %13, %23 : vector<8x8x8xf32>
    %c0_22 = arith.constant 0 : index
    %c1 = arith.constant 1 : index
    %c0_23 = arith.constant 0 : index
    %25 = vector.load %arg16[%c0_22, %c1, %c0_23] : memref<14x14x8xf32, #tpu.memory_space<vmem>>, vector<8x8x8xf32>
    %c1_24 = arith.constant 1 : index
    %c0_25 = arith.constant 0 : index
    %26 = vector.load %arg4[%c1_24, %c0_25] : memref<49x8xf32, #tpu.memory_space<vmem>>, vector<1x8xf32>
    %27 = vector.shape_cast %26 : vector<1x8xf32> to vector<1x1x8xf32>
    %28 = vector.broadcast %27 : vector<1x1x8xf32> to vector<8x8x8xf32>
    %29 = arith.mulf %25, %28 : vector<8x8x8xf32>
    %30 = arith.addf %19, %29 : vector<8x8x8xf32>
    %c1_26 = arith.constant 1 : index
    %c0_27 = arith.constant 0 : index
    %31 = vector.load %arg5[%c1_26, %c0_27] : memref<49x8xf32, #tpu.memory_space<vmem>>, vector<1x8xf32>
    %32 = vector.shape_cast %31 : vector<1x8xf32> to vector<1x1x8xf32>
    %33 = vector.broadcast %32 : vector<1x1x8xf32> to vector<8x8x8xf32>
    %34 = arith.mulf %25, %33 : vector<8x8x8xf32>
    %35 = arith.addf %24, %34 : vector<8x8x8xf32>
    %c0_28 = arith.constant 0 : index
    %c2 = arith.constant 2 : index
    %c0_29 = arith.constant 0 : index
    %36 = vector.load %arg16[%c0_28, %c2, %c0_29] : memref<14x14x8xf32, #tpu.memory_space<vmem>>, vector<8x8x8xf32>
    %c2_30 = arith.constant 2 : index
    %c0_31 = arith.constant 0 : index
    %37 = vector.load %arg4[%c2_30, %c0_31] : memref<49x8xf32, #tpu.memory_space<vmem>>, vector<1x8xf32>
    %38 = vector.shape_cast %37 : vector<1x8xf32> to vector<1x1x8xf32>
    %39 = vector.broadcast %38 : vector<1x1x8xf32> to vector<8x8x8xf32>
    %40 = arith.mulf %36, %39 : vector<8x8x8xf32>
    %41 = arith.addf %30, %40 : vector<8x8x8xf32>
    %c2_32 = arith.constant 2 : index
    %c0_33 = arith.constant 0 : index
    %42 = vector.load %arg5[%c2_32, %c0_33] : memref<49x8xf32, #tpu.memory_space<vmem>>, vector<1x8xf32>
    %43 = vector.shape_cast %42 : vector<1x8xf32> to vector<1x1x8xf32>
    %44 = vector.broadcast %43 : vector<1x1x8xf32> to vector<8x8x8xf32>
    %45 = arith.mulf %36, %44 : vector<8x8x8xf32>
    %46 = arith.addf %35, %45 : vector<8x8x8xf32>
    %c0_34 = arith.constant 0 : index
    %c3_35 = arith.constant 3 : index
    %c0_36 = arith.constant 0 : index
    %47 = vector.load %arg16[%c0_34, %c3_35, %c0_36] : memref<14x14x8xf32, #tpu.memory_space<vmem>>, vector<8x8x8xf32>
    %c3_37 = arith.constant 3 : index
    %c0_38 = arith.constant 0 : index
    %48 = vector.load %arg4[%c3_37, %c0_38] : memref<49x8xf32, #tpu.memory_space<vmem>>, vector<1x8xf32>
    %49 = vector.shape_cast %48 : vector<1x8xf32> to vector<1x1x8xf32>
    %50 = vector.broadcast %49 : vector<1x1x8xf32> to vector<8x8x8xf32>
    %51 = arith.mulf %47, %50 : vector<8x8x8xf32>
    %52 = arith.addf %41, %51 : vector<8x8x8xf32>
    %c3_39 = arith.constant 3 : index
    %c0_40 = arith.constant 0 : index
    %53 = vector.load %arg5[%c3_39, %c0_40] : memref<49x8xf32, #tpu.memory_space<vmem>>, vector<1x8xf32>
    %54 = vector.shape_cast %53 : vector<1x8xf32> to vector<1x1x8xf32>
    %55 = vector.broadcast %54 : vector<1x1x8xf32> to vector<8x8x8xf32>
    %56 = arith.mulf %47, %55 : vector<8x8x8xf32>
    %57 = arith.addf %46, %56 : vector<8x8x8xf32>
    %c0_41 = arith.constant 0 : index
    %c4 = arith.constant 4 : index
    %c0_42 = arith.constant 0 : index
    %58 = vector.load %arg16[%c0_41, %c4, %c0_42] : memref<14x14x8xf32, #tpu.memory_space<vmem>>, vector<8x8x8xf32>
    %c4_43 = arith.constant 4 : index
    %c0_44 = arith.constant 0 : index
    %59 = vector.load %arg4[%c4_43, %c0_44] : memref<49x8xf32, #tpu.memory_space<vmem>>, vector<1x8xf32>
    %60 = vector.shape_cast %59 : vector<1x8xf32> to vector<1x1x8xf32>
    %61 = vector.broadcast %60 : vector<1x1x8xf32> to vector<8x8x8xf32>
    %62 = arith.mulf %58, %61 : vector<8x8x8xf32>
    %63 = arith.addf %52, %62 : vector<8x8x8xf32>
    %c4_45 = arith.constant 4 : index
    %c0_46 = arith.constant 0 : index
    %64 = vector.load %arg5[%c4_45, %c0_46] : memref<49x8xf32, #tpu.memory_space<vmem>>, vector<1x8xf32>
    %65 = vector.shape_cast %64 : vector<1x8xf32> to vector<1x1x8xf32>
    %66 = vector.broadcast %65 : vector<1x1x8xf32> to vector<8x8x8xf32>
    %67 = arith.mulf %58, %66 : vector<8x8x8xf32>
    %68 = arith.addf %57, %67 : vector<8x8x8xf32>
    %c0_47 = arith.constant 0 : index
    %c5 = arith.constant 5 : index
    %c0_48 = arith.constant 0 : index
    %69 = vector.load %arg16[%c0_47, %c5, %c0_48] : memref<14x14x8xf32, #tpu.memory_space<vmem>>, vector<8x8x8xf32>
    %c5_49 = arith.constant 5 : index
    %c0_50 = arith.constant 0 : index
    %70 = vector.load %arg4[%c5_49, %c0_50] : memref<49x8xf32, #tpu.memory_space<vmem>>, vector<1x8xf32>
    %71 = vector.shape_cast %70 : vector<1x8xf32> to vector<1x1x8xf32>
    %72 = vector.broadcast %71 : vector<1x1x8xf32> to vector<8x8x8xf32>
    %73 = arith.mulf %69, %72 : vector<8x8x8xf32>
    %74 = arith.addf %63, %73 : vector<8x8x8xf32>
    %c5_51 = arith.constant 5 : index
    %c0_52 = arith.constant 0 : index
    %75 = vector.load %arg5[%c5_51, %c0_52] : memref<49x8xf32, #tpu.memory_space<vmem>>, vector<1x8xf32>
    %76 = vector.shape_cast %75 : vector<1x8xf32> to vector<1x1x8xf32>
    %77 = vector.broadcast %76 : vector<1x1x8xf32> to vector<8x8x8xf32>
    %78 = arith.mulf %69, %77 : vector<8x8x8xf32>
    %79 = arith.addf %68, %78 : vector<8x8x8xf32>
    %c0_53 = arith.constant 0 : index
    %c6 = arith.constant 6 : index
    %c0_54 = arith.constant 0 : index
    %80 = vector.load %arg16[%c0_53, %c6, %c0_54] : memref<14x14x8xf32, #tpu.memory_space<vmem>>, vector<8x8x8xf32>
    %c6_55 = arith.constant 6 : index
    %c0_56 = arith.constant 0 : index
    %81 = vector.load %arg4[%c6_55, %c0_56] : memref<49x8xf32, #tpu.memory_space<vmem>>, vector<1x8xf32>
    %82 = vector.shape_cast %81 : vector<1x8xf32> to vector<1x1x8xf32>
    %83 = vector.broadcast %82 : vector<1x1x8xf32> to vector<8x8x8xf32>
    %84 = arith.mulf %80, %83 : vector<8x8x8xf32>
    %85 = arith.addf %74, %84 : vector<8x8x8xf32>
    %c6_57 = arith.constant 6 : index
    %c0_58 = arith.constant 0 : index
    %86 = vector.load %arg5[%c6_57, %c0_58] : memref<49x8xf32, #tpu.memory_space<vmem>>, vector<1x8xf32>
    %87 = vector.shape_cast %86 : vector<1x8xf32> to vector<1x1x8xf32>
    %88 = vector.broadcast %87 : vector<1x1x8xf32> to vector<8x8x8xf32>
    %89 = arith.mulf %80, %88 : vector<8x8x8xf32>
    %90 = arith.addf %79, %89 : vector<8x8x8xf32>
    %c1_59 = arith.constant 1 : index
    %c0_60 = arith.constant 0 : index
    %c0_61 = arith.constant 0 : index
    %91 = vector.load %arg16[%c1_59, %c0_60, %c0_61] : memref<14x14x8xf32, #tpu.memory_space<vmem>>, vector<8x8x8xf32>
    %c7 = arith.constant 7 : index
    %c0_62 = arith.constant 0 : index
    %92 = vector.load %arg4[%c7, %c0_62] : memref<49x8xf32, #tpu.memory_space<vmem>>, vector<1x8xf32>
    %93 = vector.shape_cast %92 : vector<1x8xf32> to vector<1x1x8xf32>
    %94 = vector.broadcast %93 : vector<1x1x8xf32> to vector<8x8x8xf32>
    %95 = arith.mulf %91, %94 : vector<8x8x8xf32>
    %96 = arith.addf %85, %95 : vector<8x8x8xf32>
    %c7_63 = arith.constant 7 : index
    %c0_64 = arith.constant 0 : index
    %97 = vector.load %arg5[%c7_63, %c0_64] : memref<49x8xf32, #tpu.memory_space<vmem>>, vector<1x8xf32>
    %98 = vector.shape_cast %97 : vector<1x8xf32> to vector<1x1x8xf32>
    %99 = vector.broadcast %98 : vector<1x1x8xf32> to vector<8x8x8xf32>
    %100 = arith.mulf %91, %99 : vector<8x8x8xf32>
    %101 = arith.addf %90, %100 : vector<8x8x8xf32>
    %c1_65 = arith.constant 1 : index
    %c1_66 = arith.constant 1 : index
    %c0_67 = arith.constant 0 : index
    %102 = vector.load %arg16[%c1_65, %c1_66, %c0_67] : memref<14x14x8xf32, #tpu.memory_space<vmem>>, vector<8x8x8xf32>
    %c8 = arith.constant 8 : index
    %c0_68 = arith.constant 0 : index
    %103 = vector.load %arg4[%c8, %c0_68] : memref<49x8xf32, #tpu.memory_space<vmem>>, vector<1x8xf32>
    %104 = vector.shape_cast %103 : vector<1x8xf32> to vector<1x1x8xf32>
    %105 = vector.broadcast %104 : vector<1x1x8xf32> to vector<8x8x8xf32>
    %106 = arith.mulf %102, %105 : vector<8x8x8xf32>
    %107 = arith.addf %96, %106 : vector<8x8x8xf32>
    %c8_69 = arith.constant 8 : index
    %c0_70 = arith.constant 0 : index
    %108 = vector.load %arg5[%c8_69, %c0_70] : memref<49x8xf32, #tpu.memory_space<vmem>>, vector<1x8xf32>
    %109 = vector.shape_cast %108 : vector<1x8xf32> to vector<1x1x8xf32>
    %110 = vector.broadcast %109 : vector<1x1x8xf32> to vector<8x8x8xf32>
    %111 = arith.mulf %102, %110 : vector<8x8x8xf32>
    %112 = arith.addf %101, %111 : vector<8x8x8xf32>
    %c1_71 = arith.constant 1 : index
    %c2_72 = arith.constant 2 : index
    %c0_73 = arith.constant 0 : index
    %113 = vector.load %arg16[%c1_71, %c2_72, %c0_73] : memref<14x14x8xf32, #tpu.memory_space<vmem>>, vector<8x8x8xf32>
    %c9 = arith.constant 9 : index
    %c0_74 = arith.constant 0 : index
    %114 = vector.load %arg4[%c9, %c0_74] : memref<49x8xf32, #tpu.memory_space<vmem>>, vector<1x8xf32>
    %115 = vector.shape_cast %114 : vector<1x8xf32> to vector<1x1x8xf32>
    %116 = vector.broadcast %115 : vector<1x1x8xf32> to vector<8x8x8xf32>
    %117 = arith.mulf %113, %116 : vector<8x8x8xf32>
    %118 = arith.addf %107, %117 : vector<8x8x8xf32>
    %c9_75 = arith.constant 9 : index
    %c0_76 = arith.constant 0 : index
    %119 = vector.load %arg5[%c9_75, %c0_76] : memref<49x8xf32, #tpu.memory_space<vmem>>, vector<1x8xf32>
    %120 = vector.shape_cast %119 : vector<1x8xf32> to vector<1x1x8xf32>
    %121 = vector.broadcast %120 : vector<1x1x8xf32> to vector<8x8x8xf32>
    %122 = arith.mulf %113, %121 : vector<8x8x8xf32>
    %123 = arith.addf %112, %122 : vector<8x8x8xf32>
    %c1_77 = arith.constant 1 : index
    %c3_78 = arith.constant 3 : index
    %c0_79 = arith.constant 0 : index
    %124 = vector.load %arg16[%c1_77, %c3_78, %c0_79] : memref<14x14x8xf32, #tpu.memory_space<vmem>>, vector<8x8x8xf32>
    %c10 = arith.constant 10 : index
    %c0_80 = arith.constant 0 : index
    %125 = vector.load %arg4[%c10, %c0_80] : memref<49x8xf32, #tpu.memory_space<vmem>>, vector<1x8xf32>
    %126 = vector.shape_cast %125 : vector<1x8xf32> to vector<1x1x8xf32>
    %127 = vector.broadcast %126 : vector<1x1x8xf32> to vector<8x8x8xf32>
    %128 = arith.mulf %124, %127 : vector<8x8x8xf32>
    %129 = arith.addf %118, %128 : vector<8x8x8xf32>
    %c10_81 = arith.constant 10 : index
    %c0_82 = arith.constant 0 : index
    %130 = vector.load %arg5[%c10_81, %c0_82] : memref<49x8xf32, #tpu.memory_space<vmem>>, vector<1x8xf32>
    %131 = vector.shape_cast %130 : vector<1x8xf32> to vector<1x1x8xf32>
    %132 = vector.broadcast %131 : vector<1x1x8xf32> to vector<8x8x8xf32>
    %133 = arith.mulf %124, %132 : vector<8x8x8xf32>
    %134 = arith.addf %123, %133 : vector<8x8x8xf32>
    %c1_83 = arith.constant 1 : index
    %c4_84 = arith.constant 4 : index
    %c0_85 = arith.constant 0 : index
    %135 = vector.load %arg16[%c1_83, %c4_84, %c0_85] : memref<14x14x8xf32, #tpu.memory_space<vmem>>, vector<8x8x8xf32>
    %c11 = arith.constant 11 : index
    %c0_86 = arith.constant 0 : index
    %136 = vector.load %arg4[%c11, %c0_86] : memref<49x8xf32, #tpu.memory_space<vmem>>, vector<1x8xf32>
    %137 = vector.shape_cast %136 : vector<1x8xf32> to vector<1x1x8xf32>
    %138 = vector.broadcast %137 : vector<1x1x8xf32> to vector<8x8x8xf32>
    %139 = arith.mulf %135, %138 : vector<8x8x8xf32>
    %140 = arith.addf %129, %139 : vector<8x8x8xf32>
    %c11_87 = arith.constant 11 : index
    %c0_88 = arith.constant 0 : index
    %141 = vector.load %arg5[%c11_87, %c0_88] : memref<49x8xf32, #tpu.memory_space<vmem>>, vector<1x8xf32>
    %142 = vector.shape_cast %141 : vector<1x8xf32> to vector<1x1x8xf32>
    %143 = vector.broadcast %142 : vector<1x1x8xf32> to vector<8x8x8xf32>
    %144 = arith.mulf %135, %143 : vector<8x8x8xf32>
    %145 = arith.addf %134, %144 : vector<8x8x8xf32>
    %c1_89 = arith.constant 1 : index
    %c5_90 = arith.constant 5 : index
    %c0_91 = arith.constant 0 : index
    %146 = vector.load %arg16[%c1_89, %c5_90, %c0_91] : memref<14x14x8xf32, #tpu.memory_space<vmem>>, vector<8x8x8xf32>
    %c12 = arith.constant 12 : index
    %c0_92 = arith.constant 0 : index
    %147 = vector.load %arg4[%c12, %c0_92] : memref<49x8xf32, #tpu.memory_space<vmem>>, vector<1x8xf32>
    %148 = vector.shape_cast %147 : vector<1x8xf32> to vector<1x1x8xf32>
    %149 = vector.broadcast %148 : vector<1x1x8xf32> to vector<8x8x8xf32>
    %150 = arith.mulf %146, %149 : vector<8x8x8xf32>
    %151 = arith.addf %140, %150 : vector<8x8x8xf32>
    %c12_93 = arith.constant 12 : index
    %c0_94 = arith.constant 0 : index
    %152 = vector.load %arg5[%c12_93, %c0_94] : memref<49x8xf32, #tpu.memory_space<vmem>>, vector<1x8xf32>
    %153 = vector.shape_cast %152 : vector<1x8xf32> to vector<1x1x8xf32>
    %154 = vector.broadcast %153 : vector<1x1x8xf32> to vector<8x8x8xf32>
    %155 = arith.mulf %146, %154 : vector<8x8x8xf32>
    %156 = arith.addf %145, %155 : vector<8x8x8xf32>
    %c1_95 = arith.constant 1 : index
    %c6_96 = arith.constant 6 : index
    %c0_97 = arith.constant 0 : index
    %157 = vector.load %arg16[%c1_95, %c6_96, %c0_97] : memref<14x14x8xf32, #tpu.memory_space<vmem>>, vector<8x8x8xf32>
    %c13 = arith.constant 13 : index
    %c0_98 = arith.constant 0 : index
    %158 = vector.load %arg4[%c13, %c0_98] : memref<49x8xf32, #tpu.memory_space<vmem>>, vector<1x8xf32>
    %159 = vector.shape_cast %158 : vector<1x8xf32> to vector<1x1x8xf32>
    %160 = vector.broadcast %159 : vector<1x1x8xf32> to vector<8x8x8xf32>
    %161 = arith.mulf %157, %160 : vector<8x8x8xf32>
    %162 = arith.addf %151, %161 : vector<8x8x8xf32>
    %c13_99 = arith.constant 13 : index
    %c0_100 = arith.constant 0 : index
    %163 = vector.load %arg5[%c13_99, %c0_100] : memref<49x8xf32, #tpu.memory_space<vmem>>, vector<1x8xf32>
    %164 = vector.shape_cast %163 : vector<1x8xf32> to vector<1x1x8xf32>
    %165 = vector.broadcast %164 : vector<1x1x8xf32> to vector<8x8x8xf32>
    %166 = arith.mulf %157, %165 : vector<8x8x8xf32>
    %167 = arith.addf %156, %166 : vector<8x8x8xf32>
    %c2_101 = arith.constant 2 : index
    %c0_102 = arith.constant 0 : index
    %c0_103 = arith.constant 0 : index
    %168 = vector.load %arg16[%c2_101, %c0_102, %c0_103] : memref<14x14x8xf32, #tpu.memory_space<vmem>>, vector<8x8x8xf32>
    %c14 = arith.constant 14 : index
    %c0_104 = arith.constant 0 : index
    %169 = vector.load %arg4[%c14, %c0_104] : memref<49x8xf32, #tpu.memory_space<vmem>>, vector<1x8xf32>
    %170 = vector.shape_cast %169 : vector<1x8xf32> to vector<1x1x8xf32>
    %171 = vector.broadcast %170 : vector<1x1x8xf32> to vector<8x8x8xf32>
    %172 = arith.mulf %168, %171 : vector<8x8x8xf32>
    %173 = arith.addf %162, %172 : vector<8x8x8xf32>
    %c14_105 = arith.constant 14 : index
    %c0_106 = arith.constant 0 : index
    %174 = vector.load %arg5[%c14_105, %c0_106] : memref<49x8xf32, #tpu.memory_space<vmem>>, vector<1x8xf32>
    %175 = vector.shape_cast %174 : vector<1x8xf32> to vector<1x1x8xf32>
    %176 = vector.broadcast %175 : vector<1x1x8xf32> to vector<8x8x8xf32>
    %177 = arith.mulf %168, %176 : vector<8x8x8xf32>
    %178 = arith.addf %167, %177 : vector<8x8x8xf32>
    %c2_107 = arith.constant 2 : index
    %c1_108 = arith.constant 1 : index
    %c0_109 = arith.constant 0 : index
    %179 = vector.load %arg16[%c2_107, %c1_108, %c0_109] : memref<14x14x8xf32, #tpu.memory_space<vmem>>, vector<8x8x8xf32>
    %c15 = arith.constant 15 : index
    %c0_110 = arith.constant 0 : index
    %180 = vector.load %arg4[%c15, %c0_110] : memref<49x8xf32, #tpu.memory_space<vmem>>, vector<1x8xf32>
    %181 = vector.shape_cast %180 : vector<1x8xf32> to vector<1x1x8xf32>
    %182 = vector.broadcast %181 : vector<1x1x8xf32> to vector<8x8x8xf32>
    %183 = arith.mulf %179, %182 : vector<8x8x8xf32>
    %184 = arith.addf %173, %183 : vector<8x8x8xf32>
    %c15_111 = arith.constant 15 : index
    %c0_112 = arith.constant 0 : index
    %185 = vector.load %arg5[%c15_111, %c0_112] : memref<49x8xf32, #tpu.memory_space<vmem>>, vector<1x8xf32>
    %186 = vector.shape_cast %185 : vector<1x8xf32> to vector<1x1x8xf32>
    %187 = vector.broadcast %186 : vector<1x1x8xf32> to vector<8x8x8xf32>
    %188 = arith.mulf %179, %187 : vector<8x8x8xf32>
    %189 = arith.addf %178, %188 : vector<8x8x8xf32>
    %c2_113 = arith.constant 2 : index
    %c2_114 = arith.constant 2 : index
    %c0_115 = arith.constant 0 : index
    %190 = vector.load %arg16[%c2_113, %c2_114, %c0_115] : memref<14x14x8xf32, #tpu.memory_space<vmem>>, vector<8x8x8xf32>
    %c16 = arith.constant 16 : index
    %c0_116 = arith.constant 0 : index
    %191 = vector.load %arg4[%c16, %c0_116] : memref<49x8xf32, #tpu.memory_space<vmem>>, vector<1x8xf32>
    %192 = vector.shape_cast %191 : vector<1x8xf32> to vector<1x1x8xf32>
    %193 = vector.broadcast %192 : vector<1x1x8xf32> to vector<8x8x8xf32>
    %194 = arith.mulf %190, %193 : vector<8x8x8xf32>
    %195 = arith.addf %184, %194 : vector<8x8x8xf32>
    %c16_117 = arith.constant 16 : index
    %c0_118 = arith.constant 0 : index
    %196 = vector.load %arg5[%c16_117, %c0_118] : memref<49x8xf32, #tpu.memory_space<vmem>>, vector<1x8xf32>
    %197 = vector.shape_cast %196 : vector<1x8xf32> to vector<1x1x8xf32>
    %198 = vector.broadcast %197 : vector<1x1x8xf32> to vector<8x8x8xf32>
    %199 = arith.mulf %190, %198 : vector<8x8x8xf32>
    %200 = arith.addf %189, %199 : vector<8x8x8xf32>
    %c2_119 = arith.constant 2 : index
    %c3_120 = arith.constant 3 : index
    %c0_121 = arith.constant 0 : index
    %201 = vector.load %arg16[%c2_119, %c3_120, %c0_121] : memref<14x14x8xf32, #tpu.memory_space<vmem>>, vector<8x8x8xf32>
    %c17 = arith.constant 17 : index
    %c0_122 = arith.constant 0 : index
    %202 = vector.load %arg4[%c17, %c0_122] : memref<49x8xf32, #tpu.memory_space<vmem>>, vector<1x8xf32>
    %203 = vector.shape_cast %202 : vector<1x8xf32> to vector<1x1x8xf32>
    %204 = vector.broadcast %203 : vector<1x1x8xf32> to vector<8x8x8xf32>
    %205 = arith.mulf %201, %204 : vector<8x8x8xf32>
    %206 = arith.addf %195, %205 : vector<8x8x8xf32>
    %c17_123 = arith.constant 17 : index
    %c0_124 = arith.constant 0 : index
    %207 = vector.load %arg5[%c17_123, %c0_124] : memref<49x8xf32, #tpu.memory_space<vmem>>, vector<1x8xf32>
    %208 = vector.shape_cast %207 : vector<1x8xf32> to vector<1x1x8xf32>
    %209 = vector.broadcast %208 : vector<1x1x8xf32> to vector<8x8x8xf32>
    %210 = arith.mulf %201, %209 : vector<8x8x8xf32>
    %211 = arith.addf %200, %210 : vector<8x8x8xf32>
    %c2_125 = arith.constant 2 : index
    %c4_126 = arith.constant 4 : index
    %c0_127 = arith.constant 0 : index
    %212 = vector.load %arg16[%c2_125, %c4_126, %c0_127] : memref<14x14x8xf32, #tpu.memory_space<vmem>>, vector<8x8x8xf32>
    %c18 = arith.constant 18 : index
    %c0_128 = arith.constant 0 : index
    %213 = vector.load %arg4[%c18, %c0_128] : memref<49x8xf32, #tpu.memory_space<vmem>>, vector<1x8xf32>
    %214 = vector.shape_cast %213 : vector<1x8xf32> to vector<1x1x8xf32>
    %215 = vector.broadcast %214 : vector<1x1x8xf32> to vector<8x8x8xf32>
    %216 = arith.mulf %212, %215 : vector<8x8x8xf32>
    %217 = arith.addf %206, %216 : vector<8x8x8xf32>
    %c18_129 = arith.constant 18 : index
    %c0_130 = arith.constant 0 : index
    %218 = vector.load %arg5[%c18_129, %c0_130] : memref<49x8xf32, #tpu.memory_space<vmem>>, vector<1x8xf32>
    %219 = vector.shape_cast %218 : vector<1x8xf32> to vector<1x1x8xf32>
    %220 = vector.broadcast %219 : vector<1x1x8xf32> to vector<8x8x8xf32>
    %221 = arith.mulf %212, %220 : vector<8x8x8xf32>
    %222 = arith.addf %211, %221 : vector<8x8x8xf32>
    %c2_131 = arith.constant 2 : index
    %c5_132 = arith.constant 5 : index
    %c0_133 = arith.constant 0 : index
    %223 = vector.load %arg16[%c2_131, %c5_132, %c0_133] : memref<14x14x8xf32, #tpu.memory_space<vmem>>, vector<8x8x8xf32>
    %c19 = arith.constant 19 : index
    %c0_134 = arith.constant 0 : index
    %224 = vector.load %arg4[%c19, %c0_134] : memref<49x8xf32, #tpu.memory_space<vmem>>, vector<1x8xf32>
    %225 = vector.shape_cast %224 : vector<1x8xf32> to vector<1x1x8xf32>
    %226 = vector.broadcast %225 : vector<1x1x8xf32> to vector<8x8x8xf32>
    %227 = arith.mulf %223, %226 : vector<8x8x8xf32>
    %228 = arith.addf %217, %227 : vector<8x8x8xf32>
    %c19_135 = arith.constant 19 : index
    %c0_136 = arith.constant 0 : index
    %229 = vector.load %arg5[%c19_135, %c0_136] : memref<49x8xf32, #tpu.memory_space<vmem>>, vector<1x8xf32>
    %230 = vector.shape_cast %229 : vector<1x8xf32> to vector<1x1x8xf32>
    %231 = vector.broadcast %230 : vector<1x1x8xf32> to vector<8x8x8xf32>
    %232 = arith.mulf %223, %231 : vector<8x8x8xf32>
    %233 = arith.addf %222, %232 : vector<8x8x8xf32>
    %c2_137 = arith.constant 2 : index
    %c6_138 = arith.constant 6 : index
    %c0_139 = arith.constant 0 : index
    %234 = vector.load %arg16[%c2_137, %c6_138, %c0_139] : memref<14x14x8xf32, #tpu.memory_space<vmem>>, vector<8x8x8xf32>
    %c20 = arith.constant 20 : index
    %c0_140 = arith.constant 0 : index
    %235 = vector.load %arg4[%c20, %c0_140] : memref<49x8xf32, #tpu.memory_space<vmem>>, vector<1x8xf32>
    %236 = vector.shape_cast %235 : vector<1x8xf32> to vector<1x1x8xf32>
    %237 = vector.broadcast %236 : vector<1x1x8xf32> to vector<8x8x8xf32>
    %238 = arith.mulf %234, %237 : vector<8x8x8xf32>
    %239 = arith.addf %228, %238 : vector<8x8x8xf32>
    %c20_141 = arith.constant 20 : index
    %c0_142 = arith.constant 0 : index
    %240 = vector.load %arg5[%c20_141, %c0_142] : memref<49x8xf32, #tpu.memory_space<vmem>>, vector<1x8xf32>
    %241 = vector.shape_cast %240 : vector<1x8xf32> to vector<1x1x8xf32>
    %242 = vector.broadcast %241 : vector<1x1x8xf32> to vector<8x8x8xf32>
    %243 = arith.mulf %234, %242 : vector<8x8x8xf32>
    %244 = arith.addf %233, %243 : vector<8x8x8xf32>
    %c3_143 = arith.constant 3 : index
    %c0_144 = arith.constant 0 : index
    %c0_145 = arith.constant 0 : index
    %245 = vector.load %arg16[%c3_143, %c0_144, %c0_145] : memref<14x14x8xf32, #tpu.memory_space<vmem>>, vector<8x8x8xf32>
    %c21 = arith.constant 21 : index
    %c0_146 = arith.constant 0 : index
    %246 = vector.load %arg4[%c21, %c0_146] : memref<49x8xf32, #tpu.memory_space<vmem>>, vector<1x8xf32>
    %247 = vector.shape_cast %246 : vector<1x8xf32> to vector<1x1x8xf32>
    %248 = vector.broadcast %247 : vector<1x1x8xf32> to vector<8x8x8xf32>
    %249 = arith.mulf %245, %248 : vector<8x8x8xf32>
    %250 = arith.addf %239, %249 : vector<8x8x8xf32>
    %c21_147 = arith.constant 21 : index
    %c0_148 = arith.constant 0 : index
    %251 = vector.load %arg5[%c21_147, %c0_148] : memref<49x8xf32, #tpu.memory_space<vmem>>, vector<1x8xf32>
    %252 = vector.shape_cast %251 : vector<1x8xf32> to vector<1x1x8xf32>
    %253 = vector.broadcast %252 : vector<1x1x8xf32> to vector<8x8x8xf32>
    %254 = arith.mulf %245, %253 : vector<8x8x8xf32>
    %255 = arith.addf %244, %254 : vector<8x8x8xf32>
    %c3_149 = arith.constant 3 : index
    %c1_150 = arith.constant 1 : index
    %c0_151 = arith.constant 0 : index
    %256 = vector.load %arg16[%c3_149, %c1_150, %c0_151] : memref<14x14x8xf32, #tpu.memory_space<vmem>>, vector<8x8x8xf32>
    %c22 = arith.constant 22 : index
    %c0_152 = arith.constant 0 : index
    %257 = vector.load %arg4[%c22, %c0_152] : memref<49x8xf32, #tpu.memory_space<vmem>>, vector<1x8xf32>
    %258 = vector.shape_cast %257 : vector<1x8xf32> to vector<1x1x8xf32>
    %259 = vector.broadcast %258 : vector<1x1x8xf32> to vector<8x8x8xf32>
    %260 = arith.mulf %256, %259 : vector<8x8x8xf32>
    %261 = arith.addf %250, %260 : vector<8x8x8xf32>
    %c22_153 = arith.constant 22 : index
    %c0_154 = arith.constant 0 : index
    %262 = vector.load %arg5[%c22_153, %c0_154] : memref<49x8xf32, #tpu.memory_space<vmem>>, vector<1x8xf32>
    %263 = vector.shape_cast %262 : vector<1x8xf32> to vector<1x1x8xf32>
    %264 = vector.broadcast %263 : vector<1x1x8xf32> to vector<8x8x8xf32>
    %265 = arith.mulf %256, %264 : vector<8x8x8xf32>
    %266 = arith.addf %255, %265 : vector<8x8x8xf32>
    %c3_155 = arith.constant 3 : index
    %c2_156 = arith.constant 2 : index
    %c0_157 = arith.constant 0 : index
    %267 = vector.load %arg16[%c3_155, %c2_156, %c0_157] : memref<14x14x8xf32, #tpu.memory_space<vmem>>, vector<8x8x8xf32>
    %c23 = arith.constant 23 : index
    %c0_158 = arith.constant 0 : index
    %268 = vector.load %arg4[%c23, %c0_158] : memref<49x8xf32, #tpu.memory_space<vmem>>, vector<1x8xf32>
    %269 = vector.shape_cast %268 : vector<1x8xf32> to vector<1x1x8xf32>
    %270 = vector.broadcast %269 : vector<1x1x8xf32> to vector<8x8x8xf32>
    %271 = arith.mulf %267, %270 : vector<8x8x8xf32>
    %272 = arith.addf %261, %271 : vector<8x8x8xf32>
    %c23_159 = arith.constant 23 : index
    %c0_160 = arith.constant 0 : index
    %273 = vector.load %arg5[%c23_159, %c0_160] : memref<49x8xf32, #tpu.memory_space<vmem>>, vector<1x8xf32>
    %274 = vector.shape_cast %273 : vector<1x8xf32> to vector<1x1x8xf32>
    %275 = vector.broadcast %274 : vector<1x1x8xf32> to vector<8x8x8xf32>
    %276 = arith.mulf %267, %275 : vector<8x8x8xf32>
    %277 = arith.addf %266, %276 : vector<8x8x8xf32>
    %c3_161 = arith.constant 3 : index
    %c3_162 = arith.constant 3 : index
    %c0_163 = arith.constant 0 : index
    %278 = vector.load %arg16[%c3_161, %c3_162, %c0_163] : memref<14x14x8xf32, #tpu.memory_space<vmem>>, vector<8x8x8xf32>
    %c24 = arith.constant 24 : index
    %c0_164 = arith.constant 0 : index
    %279 = vector.load %arg4[%c24, %c0_164] : memref<49x8xf32, #tpu.memory_space<vmem>>, vector<1x8xf32>
    %280 = vector.shape_cast %279 : vector<1x8xf32> to vector<1x1x8xf32>
    %281 = vector.broadcast %280 : vector<1x1x8xf32> to vector<8x8x8xf32>
    %282 = arith.mulf %278, %281 : vector<8x8x8xf32>
    %283 = arith.addf %272, %282 : vector<8x8x8xf32>
    %c24_165 = arith.constant 24 : index
    %c0_166 = arith.constant 0 : index
    %284 = vector.load %arg5[%c24_165, %c0_166] : memref<49x8xf32, #tpu.memory_space<vmem>>, vector<1x8xf32>
    %285 = vector.shape_cast %284 : vector<1x8xf32> to vector<1x1x8xf32>
    %286 = vector.broadcast %285 : vector<1x1x8xf32> to vector<8x8x8xf32>
    %287 = arith.mulf %278, %286 : vector<8x8x8xf32>
    %288 = arith.addf %277, %287 : vector<8x8x8xf32>
    %c3_167 = arith.constant 3 : index
    %c4_168 = arith.constant 4 : index
    %c0_169 = arith.constant 0 : index
    %289 = vector.load %arg16[%c3_167, %c4_168, %c0_169] : memref<14x14x8xf32, #tpu.memory_space<vmem>>, vector<8x8x8xf32>
    %c25 = arith.constant 25 : index
    %c0_170 = arith.constant 0 : index
    %290 = vector.load %arg4[%c25, %c0_170] : memref<49x8xf32, #tpu.memory_space<vmem>>, vector<1x8xf32>
    %291 = vector.shape_cast %290 : vector<1x8xf32> to vector<1x1x8xf32>
    %292 = vector.broadcast %291 : vector<1x1x8xf32> to vector<8x8x8xf32>
    %293 = arith.mulf %289, %292 : vector<8x8x8xf32>
    %294 = arith.addf %283, %293 : vector<8x8x8xf32>
    %c25_171 = arith.constant 25 : index
    %c0_172 = arith.constant 0 : index
    %295 = vector.load %arg5[%c25_171, %c0_172] : memref<49x8xf32, #tpu.memory_space<vmem>>, vector<1x8xf32>
    %296 = vector.shape_cast %295 : vector<1x8xf32> to vector<1x1x8xf32>
    %297 = vector.broadcast %296 : vector<1x1x8xf32> to vector<8x8x8xf32>
    %298 = arith.mulf %289, %297 : vector<8x8x8xf32>
    %299 = arith.addf %288, %298 : vector<8x8x8xf32>
    %c3_173 = arith.constant 3 : index
    %c5_174 = arith.constant 5 : index
    %c0_175 = arith.constant 0 : index
    %300 = vector.load %arg16[%c3_173, %c5_174, %c0_175] : memref<14x14x8xf32, #tpu.memory_space<vmem>>, vector<8x8x8xf32>
    %c26 = arith.constant 26 : index
    %c0_176 = arith.constant 0 : index
    %301 = vector.load %arg4[%c26, %c0_176] : memref<49x8xf32, #tpu.memory_space<vmem>>, vector<1x8xf32>
    %302 = vector.shape_cast %301 : vector<1x8xf32> to vector<1x1x8xf32>
    %303 = vector.broadcast %302 : vector<1x1x8xf32> to vector<8x8x8xf32>
    %304 = arith.mulf %300, %303 : vector<8x8x8xf32>
    %305 = arith.addf %294, %304 : vector<8x8x8xf32>
    %c26_177 = arith.constant 26 : index
    %c0_178 = arith.constant 0 : index
    %306 = vector.load %arg5[%c26_177, %c0_178] : memref<49x8xf32, #tpu.memory_space<vmem>>, vector<1x8xf32>
    %307 = vector.shape_cast %306 : vector<1x8xf32> to vector<1x1x8xf32>
    %308 = vector.broadcast %307 : vector<1x1x8xf32> to vector<8x8x8xf32>
    %309 = arith.mulf %300, %308 : vector<8x8x8xf32>
    %310 = arith.addf %299, %309 : vector<8x8x8xf32>
    %c3_179 = arith.constant 3 : index
    %c6_180 = arith.constant 6 : index
    %c0_181 = arith.constant 0 : index
    %311 = vector.load %arg16[%c3_179, %c6_180, %c0_181] : memref<14x14x8xf32, #tpu.memory_space<vmem>>, vector<8x8x8xf32>
    %c27 = arith.constant 27 : index
    %c0_182 = arith.constant 0 : index
    %312 = vector.load %arg4[%c27, %c0_182] : memref<49x8xf32, #tpu.memory_space<vmem>>, vector<1x8xf32>
    %313 = vector.shape_cast %312 : vector<1x8xf32> to vector<1x1x8xf32>
    %314 = vector.broadcast %313 : vector<1x1x8xf32> to vector<8x8x8xf32>
    %315 = arith.mulf %311, %314 : vector<8x8x8xf32>
    %316 = arith.addf %305, %315 : vector<8x8x8xf32>
    %c27_183 = arith.constant 27 : index
    %c0_184 = arith.constant 0 : index
    %317 = vector.load %arg5[%c27_183, %c0_184] : memref<49x8xf32, #tpu.memory_space<vmem>>, vector<1x8xf32>
    %318 = vector.shape_cast %317 : vector<1x8xf32> to vector<1x1x8xf32>
    %319 = vector.broadcast %318 : vector<1x1x8xf32> to vector<8x8x8xf32>
    %320 = arith.mulf %311, %319 : vector<8x8x8xf32>
    %321 = arith.addf %310, %320 : vector<8x8x8xf32>
    %c4_185 = arith.constant 4 : index
    %c0_186 = arith.constant 0 : index
    %c0_187 = arith.constant 0 : index
    %322 = vector.load %arg16[%c4_185, %c0_186, %c0_187] : memref<14x14x8xf32, #tpu.memory_space<vmem>>, vector<8x8x8xf32>
    %c28 = arith.constant 28 : index
    %c0_188 = arith.constant 0 : index
    %323 = vector.load %arg4[%c28, %c0_188] : memref<49x8xf32, #tpu.memory_space<vmem>>, vector<1x8xf32>
    %324 = vector.shape_cast %323 : vector<1x8xf32> to vector<1x1x8xf32>
    %325 = vector.broadcast %324 : vector<1x1x8xf32> to vector<8x8x8xf32>
    %326 = arith.mulf %322, %325 : vector<8x8x8xf32>
    %327 = arith.addf %316, %326 : vector<8x8x8xf32>
    %c28_189 = arith.constant 28 : index
    %c0_190 = arith.constant 0 : index
    %328 = vector.load %arg5[%c28_189, %c0_190] : memref<49x8xf32, #tpu.memory_space<vmem>>, vector<1x8xf32>
    %329 = vector.shape_cast %328 : vector<1x8xf32> to vector<1x1x8xf32>
    %330 = vector.broadcast %329 : vector<1x1x8xf32> to vector<8x8x8xf32>
    %331 = arith.mulf %322, %330 : vector<8x8x8xf32>
    %332 = arith.addf %321, %331 : vector<8x8x8xf32>
    %c4_191 = arith.constant 4 : index
    %c1_192 = arith.constant 1 : index
    %c0_193 = arith.constant 0 : index
    %333 = vector.load %arg16[%c4_191, %c1_192, %c0_193] : memref<14x14x8xf32, #tpu.memory_space<vmem>>, vector<8x8x8xf32>
    %c29 = arith.constant 29 : index
    %c0_194 = arith.constant 0 : index
    %334 = vector.load %arg4[%c29, %c0_194] : memref<49x8xf32, #tpu.memory_space<vmem>>, vector<1x8xf32>
    %335 = vector.shape_cast %334 : vector<1x8xf32> to vector<1x1x8xf32>
    %336 = vector.broadcast %335 : vector<1x1x8xf32> to vector<8x8x8xf32>
    %337 = arith.mulf %333, %336 : vector<8x8x8xf32>
    %338 = arith.addf %327, %337 : vector<8x8x8xf32>
    %c29_195 = arith.constant 29 : index
    %c0_196 = arith.constant 0 : index
    %339 = vector.load %arg5[%c29_195, %c0_196] : memref<49x8xf32, #tpu.memory_space<vmem>>, vector<1x8xf32>
    %340 = vector.shape_cast %339 : vector<1x8xf32> to vector<1x1x8xf32>
    %341 = vector.broadcast %340 : vector<1x1x8xf32> to vector<8x8x8xf32>
    %342 = arith.mulf %333, %341 : vector<8x8x8xf32>
    %343 = arith.addf %332, %342 : vector<8x8x8xf32>
    %c4_197 = arith.constant 4 : index
    %c2_198 = arith.constant 2 : index
    %c0_199 = arith.constant 0 : index
    %344 = vector.load %arg16[%c4_197, %c2_198, %c0_199] : memref<14x14x8xf32, #tpu.memory_space<vmem>>, vector<8x8x8xf32>
    %c30 = arith.constant 30 : index
    %c0_200 = arith.constant 0 : index
    %345 = vector.load %arg4[%c30, %c0_200] : memref<49x8xf32, #tpu.memory_space<vmem>>, vector<1x8xf32>
    %346 = vector.shape_cast %345 : vector<1x8xf32> to vector<1x1x8xf32>
    %347 = vector.broadcast %346 : vector<1x1x8xf32> to vector<8x8x8xf32>
    %348 = arith.mulf %344, %347 : vector<8x8x8xf32>
    %349 = arith.addf %338, %348 : vector<8x8x8xf32>
    %c30_201 = arith.constant 30 : index
    %c0_202 = arith.constant 0 : index
    %350 = vector.load %arg5[%c30_201, %c0_202] : memref<49x8xf32, #tpu.memory_space<vmem>>, vector<1x8xf32>
    %351 = vector.shape_cast %350 : vector<1x8xf32> to vector<1x1x8xf32>
    %352 = vector.broadcast %351 : vector<1x1x8xf32> to vector<8x8x8xf32>
    %353 = arith.mulf %344, %352 : vector<8x8x8xf32>
    %354 = arith.addf %343, %353 : vector<8x8x8xf32>
    %c4_203 = arith.constant 4 : index
    %c3_204 = arith.constant 3 : index
    %c0_205 = arith.constant 0 : index
    %355 = vector.load %arg16[%c4_203, %c3_204, %c0_205] : memref<14x14x8xf32, #tpu.memory_space<vmem>>, vector<8x8x8xf32>
    %c31 = arith.constant 31 : index
    %c0_206 = arith.constant 0 : index
    %356 = vector.load %arg4[%c31, %c0_206] : memref<49x8xf32, #tpu.memory_space<vmem>>, vector<1x8xf32>
    %357 = vector.shape_cast %356 : vector<1x8xf32> to vector<1x1x8xf32>
    %358 = vector.broadcast %357 : vector<1x1x8xf32> to vector<8x8x8xf32>
    %359 = arith.mulf %355, %358 : vector<8x8x8xf32>
    %360 = arith.addf %349, %359 : vector<8x8x8xf32>
    %c31_207 = arith.constant 31 : index
    %c0_208 = arith.constant 0 : index
    %361 = vector.load %arg5[%c31_207, %c0_208] : memref<49x8xf32, #tpu.memory_space<vmem>>, vector<1x8xf32>
    %362 = vector.shape_cast %361 : vector<1x8xf32> to vector<1x1x8xf32>
    %363 = vector.broadcast %362 : vector<1x1x8xf32> to vector<8x8x8xf32>
    %364 = arith.mulf %355, %363 : vector<8x8x8xf32>
    %365 = arith.addf %354, %364 : vector<8x8x8xf32>
    %c4_209 = arith.constant 4 : index
    %c4_210 = arith.constant 4 : index
    %c0_211 = arith.constant 0 : index
    %366 = vector.load %arg16[%c4_209, %c4_210, %c0_211] : memref<14x14x8xf32, #tpu.memory_space<vmem>>, vector<8x8x8xf32>
    %c32 = arith.constant 32 : index
    %c0_212 = arith.constant 0 : index
    %367 = vector.load %arg4[%c32, %c0_212] : memref<49x8xf32, #tpu.memory_space<vmem>>, vector<1x8xf32>
    %368 = vector.shape_cast %367 : vector<1x8xf32> to vector<1x1x8xf32>
    %369 = vector.broadcast %368 : vector<1x1x8xf32> to vector<8x8x8xf32>
    %370 = arith.mulf %366, %369 : vector<8x8x8xf32>
    %371 = arith.addf %360, %370 : vector<8x8x8xf32>
    %c32_213 = arith.constant 32 : index
    %c0_214 = arith.constant 0 : index
    %372 = vector.load %arg5[%c32_213, %c0_214] : memref<49x8xf32, #tpu.memory_space<vmem>>, vector<1x8xf32>
    %373 = vector.shape_cast %372 : vector<1x8xf32> to vector<1x1x8xf32>
    %374 = vector.broadcast %373 : vector<1x1x8xf32> to vector<8x8x8xf32>
    %375 = arith.mulf %366, %374 : vector<8x8x8xf32>
    %376 = arith.addf %365, %375 : vector<8x8x8xf32>
    %c4_215 = arith.constant 4 : index
    %c5_216 = arith.constant 5 : index
    %c0_217 = arith.constant 0 : index
    %377 = vector.load %arg16[%c4_215, %c5_216, %c0_217] : memref<14x14x8xf32, #tpu.memory_space<vmem>>, vector<8x8x8xf32>
    %c33 = arith.constant 33 : index
    %c0_218 = arith.constant 0 : index
    %378 = vector.load %arg4[%c33, %c0_218] : memref<49x8xf32, #tpu.memory_space<vmem>>, vector<1x8xf32>
    %379 = vector.shape_cast %378 : vector<1x8xf32> to vector<1x1x8xf32>
    %380 = vector.broadcast %379 : vector<1x1x8xf32> to vector<8x8x8xf32>
    %381 = arith.mulf %377, %380 : vector<8x8x8xf32>
    %382 = arith.addf %371, %381 : vector<8x8x8xf32>
    %c33_219 = arith.constant 33 : index
    %c0_220 = arith.constant 0 : index
    %383 = vector.load %arg5[%c33_219, %c0_220] : memref<49x8xf32, #tpu.memory_space<vmem>>, vector<1x8xf32>
    %384 = vector.shape_cast %383 : vector<1x8xf32> to vector<1x1x8xf32>
    %385 = vector.broadcast %384 : vector<1x1x8xf32> to vector<8x8x8xf32>
    %386 = arith.mulf %377, %385 : vector<8x8x8xf32>
    %387 = arith.addf %376, %386 : vector<8x8x8xf32>
    %c4_221 = arith.constant 4 : index
    %c6_222 = arith.constant 6 : index
    %c0_223 = arith.constant 0 : index
    %388 = vector.load %arg16[%c4_221, %c6_222, %c0_223] : memref<14x14x8xf32, #tpu.memory_space<vmem>>, vector<8x8x8xf32>
    %c34 = arith.constant 34 : index
    %c0_224 = arith.constant 0 : index
    %389 = vector.load %arg4[%c34, %c0_224] : memref<49x8xf32, #tpu.memory_space<vmem>>, vector<1x8xf32>
    %390 = vector.shape_cast %389 : vector<1x8xf32> to vector<1x1x8xf32>
    %391 = vector.broadcast %390 : vector<1x1x8xf32> to vector<8x8x8xf32>
    %392 = arith.mulf %388, %391 : vector<8x8x8xf32>
    %393 = arith.addf %382, %392 : vector<8x8x8xf32>
    %c34_225 = arith.constant 34 : index
    %c0_226 = arith.constant 0 : index
    %394 = vector.load %arg5[%c34_225, %c0_226] : memref<49x8xf32, #tpu.memory_space<vmem>>, vector<1x8xf32>
    %395 = vector.shape_cast %394 : vector<1x8xf32> to vector<1x1x8xf32>
    %396 = vector.broadcast %395 : vector<1x1x8xf32> to vector<8x8x8xf32>
    %397 = arith.mulf %388, %396 : vector<8x8x8xf32>
    %398 = arith.addf %387, %397 : vector<8x8x8xf32>
    %c5_227 = arith.constant 5 : index
    %c0_228 = arith.constant 0 : index
    %c0_229 = arith.constant 0 : index
    %399 = vector.load %arg16[%c5_227, %c0_228, %c0_229] : memref<14x14x8xf32, #tpu.memory_space<vmem>>, vector<8x8x8xf32>
    %c35 = arith.constant 35 : index
    %c0_230 = arith.constant 0 : index
    %400 = vector.load %arg4[%c35, %c0_230] : memref<49x8xf32, #tpu.memory_space<vmem>>, vector<1x8xf32>
    %401 = vector.shape_cast %400 : vector<1x8xf32> to vector<1x1x8xf32>
    %402 = vector.broadcast %401 : vector<1x1x8xf32> to vector<8x8x8xf32>
    %403 = arith.mulf %399, %402 : vector<8x8x8xf32>
    %404 = arith.addf %393, %403 : vector<8x8x8xf32>
    %c35_231 = arith.constant 35 : index
    %c0_232 = arith.constant 0 : index
    %405 = vector.load %arg5[%c35_231, %c0_232] : memref<49x8xf32, #tpu.memory_space<vmem>>, vector<1x8xf32>
    %406 = vector.shape_cast %405 : vector<1x8xf32> to vector<1x1x8xf32>
    %407 = vector.broadcast %406 : vector<1x1x8xf32> to vector<8x8x8xf32>
    %408 = arith.mulf %399, %407 : vector<8x8x8xf32>
    %409 = arith.addf %398, %408 : vector<8x8x8xf32>
    %c5_233 = arith.constant 5 : index
    %c1_234 = arith.constant 1 : index
    %c0_235 = arith.constant 0 : index
    %410 = vector.load %arg16[%c5_233, %c1_234, %c0_235] : memref<14x14x8xf32, #tpu.memory_space<vmem>>, vector<8x8x8xf32>
    %c36 = arith.constant 36 : index
    %c0_236 = arith.constant 0 : index
    %411 = vector.load %arg4[%c36, %c0_236] : memref<49x8xf32, #tpu.memory_space<vmem>>, vector<1x8xf32>
    %412 = vector.shape_cast %411 : vector<1x8xf32> to vector<1x1x8xf32>
    %413 = vector.broadcast %412 : vector<1x1x8xf32> to vector<8x8x8xf32>
    %414 = arith.mulf %410, %413 : vector<8x8x8xf32>
    %415 = arith.addf %404, %414 : vector<8x8x8xf32>
    %c36_237 = arith.constant 36 : index
    %c0_238 = arith.constant 0 : index
    %416 = vector.load %arg5[%c36_237, %c0_238] : memref<49x8xf32, #tpu.memory_space<vmem>>, vector<1x8xf32>
    %417 = vector.shape_cast %416 : vector<1x8xf32> to vector<1x1x8xf32>
    %418 = vector.broadcast %417 : vector<1x1x8xf32> to vector<8x8x8xf32>
    %419 = arith.mulf %410, %418 : vector<8x8x8xf32>
    %420 = arith.addf %409, %419 : vector<8x8x8xf32>
    %c5_239 = arith.constant 5 : index
    %c2_240 = arith.constant 2 : index
    %c0_241 = arith.constant 0 : index
    %421 = vector.load %arg16[%c5_239, %c2_240, %c0_241] : memref<14x14x8xf32, #tpu.memory_space<vmem>>, vector<8x8x8xf32>
    %c37 = arith.constant 37 : index
    %c0_242 = arith.constant 0 : index
    %422 = vector.load %arg4[%c37, %c0_242] : memref<49x8xf32, #tpu.memory_space<vmem>>, vector<1x8xf32>
    %423 = vector.shape_cast %422 : vector<1x8xf32> to vector<1x1x8xf32>
    %424 = vector.broadcast %423 : vector<1x1x8xf32> to vector<8x8x8xf32>
    %425 = arith.mulf %421, %424 : vector<8x8x8xf32>
    %426 = arith.addf %415, %425 : vector<8x8x8xf32>
    %c37_243 = arith.constant 37 : index
    %c0_244 = arith.constant 0 : index
    %427 = vector.load %arg5[%c37_243, %c0_244] : memref<49x8xf32, #tpu.memory_space<vmem>>, vector<1x8xf32>
    %428 = vector.shape_cast %427 : vector<1x8xf32> to vector<1x1x8xf32>
    %429 = vector.broadcast %428 : vector<1x1x8xf32> to vector<8x8x8xf32>
    %430 = arith.mulf %421, %429 : vector<8x8x8xf32>
    %431 = arith.addf %420, %430 : vector<8x8x8xf32>
    %c5_245 = arith.constant 5 : index
    %c3_246 = arith.constant 3 : index
    %c0_247 = arith.constant 0 : index
    %432 = vector.load %arg16[%c5_245, %c3_246, %c0_247] : memref<14x14x8xf32, #tpu.memory_space<vmem>>, vector<8x8x8xf32>
    %c38 = arith.constant 38 : index
    %c0_248 = arith.constant 0 : index
    %433 = vector.load %arg4[%c38, %c0_248] : memref<49x8xf32, #tpu.memory_space<vmem>>, vector<1x8xf32>
    %434 = vector.shape_cast %433 : vector<1x8xf32> to vector<1x1x8xf32>
    %435 = vector.broadcast %434 : vector<1x1x8xf32> to vector<8x8x8xf32>
    %436 = arith.mulf %432, %435 : vector<8x8x8xf32>
    %437 = arith.addf %426, %436 : vector<8x8x8xf32>
    %c38_249 = arith.constant 38 : index
    %c0_250 = arith.constant 0 : index
    %438 = vector.load %arg5[%c38_249, %c0_250] : memref<49x8xf32, #tpu.memory_space<vmem>>, vector<1x8xf32>
    %439 = vector.shape_cast %438 : vector<1x8xf32> to vector<1x1x8xf32>
    %440 = vector.broadcast %439 : vector<1x1x8xf32> to vector<8x8x8xf32>
    %441 = arith.mulf %432, %440 : vector<8x8x8xf32>
    %442 = arith.addf %431, %441 : vector<8x8x8xf32>
    %c5_251 = arith.constant 5 : index
    %c4_252 = arith.constant 4 : index
    %c0_253 = arith.constant 0 : index
    %443 = vector.load %arg16[%c5_251, %c4_252, %c0_253] : memref<14x14x8xf32, #tpu.memory_space<vmem>>, vector<8x8x8xf32>
    %c39 = arith.constant 39 : index
    %c0_254 = arith.constant 0 : index
    %444 = vector.load %arg4[%c39, %c0_254] : memref<49x8xf32, #tpu.memory_space<vmem>>, vector<1x8xf32>
    %445 = vector.shape_cast %444 : vector<1x8xf32> to vector<1x1x8xf32>
    %446 = vector.broadcast %445 : vector<1x1x8xf32> to vector<8x8x8xf32>
    %447 = arith.mulf %443, %446 : vector<8x8x8xf32>
    %448 = arith.addf %437, %447 : vector<8x8x8xf32>
    %c39_255 = arith.constant 39 : index
    %c0_256 = arith.constant 0 : index
    %449 = vector.load %arg5[%c39_255, %c0_256] : memref<49x8xf32, #tpu.memory_space<vmem>>, vector<1x8xf32>
    %450 = vector.shape_cast %449 : vector<1x8xf32> to vector<1x1x8xf32>
    %451 = vector.broadcast %450 : vector<1x1x8xf32> to vector<8x8x8xf32>
    %452 = arith.mulf %443, %451 : vector<8x8x8xf32>
    %453 = arith.addf %442, %452 : vector<8x8x8xf32>
    %c5_257 = arith.constant 5 : index
    %c5_258 = arith.constant 5 : index
    %c0_259 = arith.constant 0 : index
    %454 = vector.load %arg16[%c5_257, %c5_258, %c0_259] : memref<14x14x8xf32, #tpu.memory_space<vmem>>, vector<8x8x8xf32>
    %c40 = arith.constant 40 : index
    %c0_260 = arith.constant 0 : index
    %455 = vector.load %arg4[%c40, %c0_260] : memref<49x8xf32, #tpu.memory_space<vmem>>, vector<1x8xf32>
    %456 = vector.shape_cast %455 : vector<1x8xf32> to vector<1x1x8xf32>
    %457 = vector.broadcast %456 : vector<1x1x8xf32> to vector<8x8x8xf32>
    %458 = arith.mulf %454, %457 : vector<8x8x8xf32>
    %459 = arith.addf %448, %458 : vector<8x8x8xf32>
    %c40_261 = arith.constant 40 : index
    %c0_262 = arith.constant 0 : index
    %460 = vector.load %arg5[%c40_261, %c0_262] : memref<49x8xf32, #tpu.memory_space<vmem>>, vector<1x8xf32>
    %461 = vector.shape_cast %460 : vector<1x8xf32> to vector<1x1x8xf32>
    %462 = vector.broadcast %461 : vector<1x1x8xf32> to vector<8x8x8xf32>
    %463 = arith.mulf %454, %462 : vector<8x8x8xf32>
    %464 = arith.addf %453, %463 : vector<8x8x8xf32>
    %c5_263 = arith.constant 5 : index
    %c6_264 = arith.constant 6 : index
    %c0_265 = arith.constant 0 : index
    %465 = vector.load %arg16[%c5_263, %c6_264, %c0_265] : memref<14x14x8xf32, #tpu.memory_space<vmem>>, vector<8x8x8xf32>
    %c41 = arith.constant 41 : index
    %c0_266 = arith.constant 0 : index
    %466 = vector.load %arg4[%c41, %c0_266] : memref<49x8xf32, #tpu.memory_space<vmem>>, vector<1x8xf32>
    %467 = vector.shape_cast %466 : vector<1x8xf32> to vector<1x1x8xf32>
    %468 = vector.broadcast %467 : vector<1x1x8xf32> to vector<8x8x8xf32>
    %469 = arith.mulf %465, %468 : vector<8x8x8xf32>
    %470 = arith.addf %459, %469 : vector<8x8x8xf32>
    %c41_267 = arith.constant 41 : index
    %c0_268 = arith.constant 0 : index
    %471 = vector.load %arg5[%c41_267, %c0_268] : memref<49x8xf32, #tpu.memory_space<vmem>>, vector<1x8xf32>
    %472 = vector.shape_cast %471 : vector<1x8xf32> to vector<1x1x8xf32>
    %473 = vector.broadcast %472 : vector<1x1x8xf32> to vector<8x8x8xf32>
    %474 = arith.mulf %465, %473 : vector<8x8x8xf32>
    %475 = arith.addf %464, %474 : vector<8x8x8xf32>
    %c6_269 = arith.constant 6 : index
    %c0_270 = arith.constant 0 : index
    %c0_271 = arith.constant 0 : index
    %476 = vector.load %arg16[%c6_269, %c0_270, %c0_271] : memref<14x14x8xf32, #tpu.memory_space<vmem>>, vector<8x8x8xf32>
    %c42 = arith.constant 42 : index
    %c0_272 = arith.constant 0 : index
    %477 = vector.load %arg4[%c42, %c0_272] : memref<49x8xf32, #tpu.memory_space<vmem>>, vector<1x8xf32>
    %478 = vector.shape_cast %477 : vector<1x8xf32> to vector<1x1x8xf32>
    %479 = vector.broadcast %478 : vector<1x1x8xf32> to vector<8x8x8xf32>
    %480 = arith.mulf %476, %479 : vector<8x8x8xf32>
    %481 = arith.addf %470, %480 : vector<8x8x8xf32>
    %c42_273 = arith.constant 42 : index
    %c0_274 = arith.constant 0 : index
    %482 = vector.load %arg5[%c42_273, %c0_274] : memref<49x8xf32, #tpu.memory_space<vmem>>, vector<1x8xf32>
    %483 = vector.shape_cast %482 : vector<1x8xf32> to vector<1x1x8xf32>
    %484 = vector.broadcast %483 : vector<1x1x8xf32> to vector<8x8x8xf32>
    %485 = arith.mulf %476, %484 : vector<8x8x8xf32>
    %486 = arith.addf %475, %485 : vector<8x8x8xf32>
    %c6_275 = arith.constant 6 : index
    %c1_276 = arith.constant 1 : index
    %c0_277 = arith.constant 0 : index
    %487 = vector.load %arg16[%c6_275, %c1_276, %c0_277] : memref<14x14x8xf32, #tpu.memory_space<vmem>>, vector<8x8x8xf32>
    %c43 = arith.constant 43 : index
    %c0_278 = arith.constant 0 : index
    %488 = vector.load %arg4[%c43, %c0_278] : memref<49x8xf32, #tpu.memory_space<vmem>>, vector<1x8xf32>
    %489 = vector.shape_cast %488 : vector<1x8xf32> to vector<1x1x8xf32>
    %490 = vector.broadcast %489 : vector<1x1x8xf32> to vector<8x8x8xf32>
    %491 = arith.mulf %487, %490 : vector<8x8x8xf32>
    %492 = arith.addf %481, %491 : vector<8x8x8xf32>
    %c43_279 = arith.constant 43 : index
    %c0_280 = arith.constant 0 : index
    %493 = vector.load %arg5[%c43_279, %c0_280] : memref<49x8xf32, #tpu.memory_space<vmem>>, vector<1x8xf32>
    %494 = vector.shape_cast %493 : vector<1x8xf32> to vector<1x1x8xf32>
    %495 = vector.broadcast %494 : vector<1x1x8xf32> to vector<8x8x8xf32>
    %496 = arith.mulf %487, %495 : vector<8x8x8xf32>
    %497 = arith.addf %486, %496 : vector<8x8x8xf32>
    %c6_281 = arith.constant 6 : index
    %c2_282 = arith.constant 2 : index
    %c0_283 = arith.constant 0 : index
    %498 = vector.load %arg16[%c6_281, %c2_282, %c0_283] : memref<14x14x8xf32, #tpu.memory_space<vmem>>, vector<8x8x8xf32>
    %c44 = arith.constant 44 : index
    %c0_284 = arith.constant 0 : index
    %499 = vector.load %arg4[%c44, %c0_284] : memref<49x8xf32, #tpu.memory_space<vmem>>, vector<1x8xf32>
    %500 = vector.shape_cast %499 : vector<1x8xf32> to vector<1x1x8xf32>
    %501 = vector.broadcast %500 : vector<1x1x8xf32> to vector<8x8x8xf32>
    %502 = arith.mulf %498, %501 : vector<8x8x8xf32>
    %503 = arith.addf %492, %502 : vector<8x8x8xf32>
    %c44_285 = arith.constant 44 : index
    %c0_286 = arith.constant 0 : index
    %504 = vector.load %arg5[%c44_285, %c0_286] : memref<49x8xf32, #tpu.memory_space<vmem>>, vector<1x8xf32>
    %505 = vector.shape_cast %504 : vector<1x8xf32> to vector<1x1x8xf32>
    %506 = vector.broadcast %505 : vector<1x1x8xf32> to vector<8x8x8xf32>
    %507 = arith.mulf %498, %506 : vector<8x8x8xf32>
    %508 = arith.addf %497, %507 : vector<8x8x8xf32>
    %c6_287 = arith.constant 6 : index
    %c3_288 = arith.constant 3 : index
    %c0_289 = arith.constant 0 : index
    %509 = vector.load %arg16[%c6_287, %c3_288, %c0_289] : memref<14x14x8xf32, #tpu.memory_space<vmem>>, vector<8x8x8xf32>
    %c45 = arith.constant 45 : index
    %c0_290 = arith.constant 0 : index
    %510 = vector.load %arg4[%c45, %c0_290] : memref<49x8xf32, #tpu.memory_space<vmem>>, vector<1x8xf32>
    %511 = vector.shape_cast %510 : vector<1x8xf32> to vector<1x1x8xf32>
    %512 = vector.broadcast %511 : vector<1x1x8xf32> to vector<8x8x8xf32>
    %513 = arith.mulf %509, %512 : vector<8x8x8xf32>
    %514 = arith.addf %503, %513 : vector<8x8x8xf32>
    %c45_291 = arith.constant 45 : index
    %c0_292 = arith.constant 0 : index
    %515 = vector.load %arg5[%c45_291, %c0_292] : memref<49x8xf32, #tpu.memory_space<vmem>>, vector<1x8xf32>
    %516 = vector.shape_cast %515 : vector<1x8xf32> to vector<1x1x8xf32>
    %517 = vector.broadcast %516 : vector<1x1x8xf32> to vector<8x8x8xf32>
    %518 = arith.mulf %509, %517 : vector<8x8x8xf32>
    %519 = arith.addf %508, %518 : vector<8x8x8xf32>
    %c6_293 = arith.constant 6 : index
    %c4_294 = arith.constant 4 : index
    %c0_295 = arith.constant 0 : index
    %520 = vector.load %arg16[%c6_293, %c4_294, %c0_295] : memref<14x14x8xf32, #tpu.memory_space<vmem>>, vector<8x8x8xf32>
    %c46 = arith.constant 46 : index
    %c0_296 = arith.constant 0 : index
    %521 = vector.load %arg4[%c46, %c0_296] : memref<49x8xf32, #tpu.memory_space<vmem>>, vector<1x8xf32>
    %522 = vector.shape_cast %521 : vector<1x8xf32> to vector<1x1x8xf32>
    %523 = vector.broadcast %522 : vector<1x1x8xf32> to vector<8x8x8xf32>
    %524 = arith.mulf %520, %523 : vector<8x8x8xf32>
    %525 = arith.addf %514, %524 : vector<8x8x8xf32>
    %c46_297 = arith.constant 46 : index
    %c0_298 = arith.constant 0 : index
    %526 = vector.load %arg5[%c46_297, %c0_298] : memref<49x8xf32, #tpu.memory_space<vmem>>, vector<1x8xf32>
    %527 = vector.shape_cast %526 : vector<1x8xf32> to vector<1x1x8xf32>
    %528 = vector.broadcast %527 : vector<1x1x8xf32> to vector<8x8x8xf32>
    %529 = arith.mulf %520, %528 : vector<8x8x8xf32>
    %530 = arith.addf %519, %529 : vector<8x8x8xf32>
    %c6_299 = arith.constant 6 : index
    %c5_300 = arith.constant 5 : index
    %c0_301 = arith.constant 0 : index
    %531 = vector.load %arg16[%c6_299, %c5_300, %c0_301] : memref<14x14x8xf32, #tpu.memory_space<vmem>>, vector<8x8x8xf32>
    %c47 = arith.constant 47 : index
    %c0_302 = arith.constant 0 : index
    %532 = vector.load %arg4[%c47, %c0_302] : memref<49x8xf32, #tpu.memory_space<vmem>>, vector<1x8xf32>
    %533 = vector.shape_cast %532 : vector<1x8xf32> to vector<1x1x8xf32>
    %534 = vector.broadcast %533 : vector<1x1x8xf32> to vector<8x8x8xf32>
    %535 = arith.mulf %531, %534 : vector<8x8x8xf32>
    %536 = arith.addf %525, %535 : vector<8x8x8xf32>
    %c47_303 = arith.constant 47 : index
    %c0_304 = arith.constant 0 : index
    %537 = vector.load %arg5[%c47_303, %c0_304] : memref<49x8xf32, #tpu.memory_space<vmem>>, vector<1x8xf32>
    %538 = vector.shape_cast %537 : vector<1x8xf32> to vector<1x1x8xf32>
    %539 = vector.broadcast %538 : vector<1x1x8xf32> to vector<8x8x8xf32>
    %540 = arith.mulf %531, %539 : vector<8x8x8xf32>
    %541 = arith.addf %530, %540 : vector<8x8x8xf32>
    %c6_305 = arith.constant 6 : index
    %c6_306 = arith.constant 6 : index
    %c0_307 = arith.constant 0 : index
    %542 = vector.load %arg16[%c6_305, %c6_306, %c0_307] : memref<14x14x8xf32, #tpu.memory_space<vmem>>, vector<8x8x8xf32>
    %c48 = arith.constant 48 : index
    %c0_308 = arith.constant 0 : index
    %543 = vector.load %arg4[%c48, %c0_308] : memref<49x8xf32, #tpu.memory_space<vmem>>, vector<1x8xf32>
    %544 = vector.shape_cast %543 : vector<1x8xf32> to vector<1x1x8xf32>
    %545 = vector.broadcast %544 : vector<1x1x8xf32> to vector<8x8x8xf32>
    %546 = arith.mulf %542, %545 : vector<8x8x8xf32>
    %547 = arith.addf %536, %546 : vector<8x8x8xf32>
    %c48_309 = arith.constant 48 : index
    %c0_310 = arith.constant 0 : index
    %548 = vector.load %arg5[%c48_309, %c0_310] : memref<49x8xf32, #tpu.memory_space<vmem>>, vector<1x8xf32>
    %549 = vector.shape_cast %548 : vector<1x8xf32> to vector<1x1x8xf32>
    %550 = vector.broadcast %549 : vector<1x1x8xf32> to vector<8x8x8xf32>
    %551 = arith.mulf %542, %550 : vector<8x8x8xf32>
    %552 = arith.addf %541, %551 : vector<8x8x8xf32>
    %553 = vector.shape_cast %552 : vector<8x8x8xf32> to vector<64x8xf32>
    %c0_311 = arith.constant 0 : index
    %c0_312 = arith.constant 0 : index
    %554 = vector.load %arg6[%c0_311, %c0_312] : memref<8x8xf32, #tpu.memory_space<vmem>>, vector<8x8xf32>
    %cst_313 = arith.constant dense<0.000000e+00> : vector<64x8xf32>
    %555 = tpu.matmul %553, %554, %cst_313 {dimension_numbers = #tpu.dot_dimension_numbers<[1], [0], [0], [1], [0, 0, 1, 1], [], []>} : vector<64x8xf32>, vector<8x8xf32>, vector<64x8xf32> -> vector<64x8xf32>
    %556 = vector.shape_cast %547 : vector<8x8x8xf32> to vector<64x8xf32>
    %557 = arith.addf %556, %555 : vector<64x8xf32>
    %c0_314 = arith.constant 0 : index
    %c0_315 = arith.constant 0 : index
    %558 = vector.load %arg7[%c0_314, %c0_315] : memref<1x8xf32, #tpu.memory_space<vmem>>, vector<1x8xf32>
    %559 = vector.broadcast %558 : vector<1x8xf32> to vector<64x8xf32>
    %560 = arith.addf %557, %559 : vector<64x8xf32>
    %cst_316 = arith.constant dense<0.000000e+00> : vector<64xf32>
    %561 = vector.multi_reduction <add>, %560, %cst_316 [1] : vector<64x8xf32> to vector<64xf32>
    %562 = vector.shape_cast %561 : vector<64xf32> to vector<64x1xf32>
    %cst_317 = arith.constant 8.000000e+00 : f32
    %563 = vector.broadcast %cst_317 : f32 to vector<64x1xf32>
    %564 = arith.divf %562, %563 : vector<64x1xf32>
    %565 = vector.broadcast %564 : vector<64x1xf32> to vector<64x8xf32>
    %566 = arith.subf %560, %565 : vector<64x8xf32>
    %567 = vector.broadcast %564 : vector<64x1xf32> to vector<64x8xf32>
    %568 = arith.subf %560, %567 : vector<64x8xf32>
    %569 = arith.mulf %566, %568 : vector<64x8xf32>
    %cst_318 = arith.constant dense<0.000000e+00> : vector<64xf32>
    %570 = vector.multi_reduction <add>, %569, %cst_318 [1] : vector<64x8xf32> to vector<64xf32>
    %571 = vector.shape_cast %570 : vector<64xf32> to vector<64x1xf32>
    %cst_319 = arith.constant 8.000000e+00 : f32
    %572 = vector.broadcast %cst_319 : f32 to vector<64x1xf32>
    %573 = arith.divf %571, %572 : vector<64x1xf32>
    %574 = vector.broadcast %564 : vector<64x1xf32> to vector<64x8xf32>
    %575 = arith.subf %560, %574 : vector<64x8xf32>
    %cst_320 = arith.constant 9.99999997E-7 : f32
    %576 = vector.broadcast %cst_320 : f32 to vector<64x1xf32>
    %577 = arith.addf %573, %576 : vector<64x1xf32>
    %578 = math.rsqrt %577 : vector<64x1xf32>
    %579 = vector.broadcast %578 : vector<64x1xf32> to vector<64x8xf32>
    %580 = arith.mulf %575, %579 : vector<64x8xf32>
    %c0_321 = arith.constant 0 : index
    %c0_322 = arith.constant 0 : index
    %581 = vector.load %arg8[%c0_321, %c0_322] : memref<1x8xf32, #tpu.memory_space<vmem>>, vector<1x8xf32>
    %582 = vector.broadcast %581 : vector<1x8xf32> to vector<64x8xf32>
    %583 = arith.mulf %580, %582 : vector<64x8xf32>
    %c0_323 = arith.constant 0 : index
    %c0_324 = arith.constant 0 : index
    %584 = vector.load %arg9[%c0_323, %c0_324] : memref<1x8xf32, #tpu.memory_space<vmem>>, vector<1x8xf32>
    %585 = vector.broadcast %584 : vector<1x8xf32> to vector<64x8xf32>
    %586 = arith.addf %583, %585 : vector<64x8xf32>
    %c0_325 = arith.constant 0 : index
    %c0_326 = arith.constant 0 : index
    %587 = vector.load %arg10[%c0_325, %c0_326] : memref<8x16xf32, #tpu.memory_space<vmem>>, vector<8x16xf32>
    %cst_327 = arith.constant dense<0.000000e+00> : vector<64x16xf32>
    %588 = tpu.matmul %586, %587, %cst_327 {dimension_numbers = #tpu.dot_dimension_numbers<[1], [0], [0], [1], [0, 0, 1, 1], [], []>} : vector<64x8xf32>, vector<8x16xf32>, vector<64x16xf32> -> vector<64x16xf32>
    %c0_328 = arith.constant 0 : index
    %c0_329 = arith.constant 0 : index
    %589 = vector.load %arg11[%c0_328, %c0_329] : memref<1x16xf32, #tpu.memory_space<vmem>>, vector<1x16xf32>
    %590 = vector.broadcast %589 : vector<1x16xf32> to vector<64x16xf32>
    %591 = arith.addf %588, %590 : vector<64x16xf32>
    %cst_330 = arith.constant 5.000000e-01 : f32
    %592 = vector.broadcast %cst_330 : f32 to vector<64x16xf32>
    %593 = arith.mulf %592, %591 : vector<64x16xf32>
    %cst_331 = arith.constant 0.707106769 : f32
    %594 = vector.broadcast %cst_331 : f32 to vector<64x16xf32>
    %595 = arith.mulf %591, %594 : vector<64x16xf32>
    %cst_332 = arith.constant 0.000000e+00 : f32
    %596 = vector.broadcast %cst_332 : f32 to vector<64x16xf32>
    %597 = arith.cmpf oge, %595, %596 : vector<64x16xf32>
    %cst_333 = arith.constant 1.000000e+00 : f32
    %cst_334 = arith.constant -1.000000e+00 : f32
    %598 = vector.broadcast %cst_333 : f32 to vector<64x16xf32>
    %599 = vector.broadcast %cst_334 : f32 to vector<64x16xf32>
    %600 = arith.select %597, %598, %599 : vector<64x16xi1>, vector<64x16xf32>
    %601 = math.absf %595 : vector<64x16xf32>
    %cst_335 = arith.constant 0.327591091 : f32
    %602 = vector.broadcast %cst_335 : f32 to vector<64x16xf32>
    %603 = arith.mulf %602, %601 : vector<64x16xf32>
    %cst_336 = arith.constant 1.000000e+00 : f32
    %604 = vector.broadcast %cst_336 : f32 to vector<64x16xf32>
    %605 = arith.addf %604, %603 : vector<64x16xf32>
    %cst_337 = arith.constant 1.000000e+00 : f32
    %606 = vector.broadcast %cst_337 : f32 to vector<64x16xf32>
    %607 = arith.divf %606, %605 : vector<64x16xf32>
    %cst_338 = arith.constant 1.06140542 : f32
    %608 = vector.broadcast %cst_338 : f32 to vector<64x16xf32>
    %609 = arith.mulf %607, %608 : vector<64x16xf32>
    %cst_339 = arith.constant -1.45315206 : f32
    %610 = vector.broadcast %cst_339 : f32 to vector<64x16xf32>
    %611 = arith.addf %610, %609 : vector<64x16xf32>
    %612 = arith.mulf %607, %611 : vector<64x16xf32>
    %cst_340 = arith.constant 1.42141378 : f32
    %613 = vector.broadcast %cst_340 : f32 to vector<64x16xf32>
    %614 = arith.addf %613, %612 : vector<64x16xf32>
    %615 = arith.mulf %607, %614 : vector<64x16xf32>
    %cst_341 = arith.constant -0.284496725 : f32
    %616 = vector.broadcast %cst_341 : f32 to vector<64x16xf32>
    %617 = arith.addf %616, %615 : vector<64x16xf32>
    %618 = arith.mulf %607, %617 : vector<64x16xf32>
    %cst_342 = arith.constant 0.254829586 : f32
    %619 = vector.broadcast %cst_342 : f32 to vector<64x16xf32>
    %620 = arith.addf %619, %618 : vector<64x16xf32>
    %621 = arith.mulf %607, %620 : vector<64x16xf32>
    %cst_343 = arith.constant 0.000000e+00 : f32
    %622 = vector.broadcast %cst_343 : f32 to vector<64x16xf32>
    %623 = arith.subf %622, %601 : vector<64x16xf32>
    %624 = arith.mulf %623, %601 : vector<64x16xf32>
    %625 = math.exp %624 : vector<64x16xf32>
    %626 = arith.mulf %621, %625 : vector<64x16xf32>
    %cst_344 = arith.constant 1.000000e+00 : f32
    %627 = vector.broadcast %cst_344 : f32 to vector<64x16xf32>
    %628 = arith.subf %627, %626 : vector<64x16xf32>
    %629 = arith.mulf %600, %628 : vector<64x16xf32>
    %cst_345 = arith.constant 1.000000e+00 : f32
    %630 = vector.broadcast %cst_345 : f32 to vector<64x16xf32>
    %631 = arith.addf %630, %629 : vector<64x16xf32>
    %632 = arith.mulf %593, %631 : vector<64x16xf32>
    %c0_346 = arith.constant 0 : index
    %c0_347 = arith.constant 0 : index
    %633 = vector.load %arg12[%c0_346, %c0_347] : memref<16x8xf32, #tpu.memory_space<vmem>>, vector<16x8xf32>
    %cst_348 = arith.constant dense<0.000000e+00> : vector<64x8xf32>
    %634 = tpu.matmul %632, %633, %cst_348 {dimension_numbers = #tpu.dot_dimension_numbers<[1], [0], [0], [1], [0, 0, 1, 1], [], []>} : vector<64x16xf32>, vector<16x8xf32>, vector<64x8xf32> -> vector<64x8xf32>
    %c0_349 = arith.constant 0 : index
    %c0_350 = arith.constant 0 : index
    %635 = vector.load %arg13[%c0_349, %c0_350] : memref<1x8xf32, #tpu.memory_space<vmem>>, vector<1x8xf32>
    %636 = vector.broadcast %635 : vector<1x8xf32> to vector<64x8xf32>
    %637 = arith.addf %634, %636 : vector<64x8xf32>
    %c0_351 = arith.constant 0 : index
    %c0_352 = arith.constant 0 : index
    %638 = vector.load %arg14[%c0_351, %c0_352] : memref<1x8xf32, #tpu.memory_space<vmem>>, vector<1x8xf32>
    %639 = vector.broadcast %638 : vector<1x8xf32> to vector<64x8xf32>
    %640 = arith.mulf %639, %637 : vector<64x8xf32>
    %641 = arith.addf %7, %640 : vector<64x8xf32>
    %642 = vector.shape_cast %641 : vector<64x8xf32> to vector<8x8x8xf32>
    %c0_353 = arith.constant 0 : index
    %c0_354 = arith.constant 0 : index
    %c0_355 = arith.constant 0 : index
    %c0_356 = arith.constant 0 : index
    %643 = vector.load %arg15[%c0_353, %c0_354, %c0_355, %c0_356] : memref<1x8x8x8xf32, #tpu.memory_space<vmem>>, vector<1x8x8x8xf32>
    %644 = vector.shape_cast %643 : vector<1x8x8x8xf32> to vector<8x8x8xf32>
    %645 = vector.shape_cast %642 : vector<8x8x8xf32> to vector<1x8x8x8xf32>
    tpu.vector_store %arg15[%c0_353, %c0_354, %c0_355, %c0_356], %645 {strides = array<i32>} : memref<1x8x8x8xf32, #tpu.memory_space<vmem>>, vector<1x8x8x8xf32>,
    return
  }
  func.func @transform_0(%arg0: i32) -> (i32, i32, i32, i32) {
    %c0_i32 = arith.constant 0 : i32
    %c0_i32_0 = arith.constant 0 : i32
    %c0_i32_1 = arith.constant 0 : i32
    %c0_i32_2 = arith.constant 0 : i32
    return %arg0, %c0_i32, %c0_i32_0, %c0_i32_1 : i32, i32, i32, i32
  }
  func.func @transform_1(%arg0: i32) -> (i32, i32) {
    %c0_i32 = arith.constant 0 : i32
    %c0_i32_0 = arith.constant 0 : i32
    %c0_i32_1 = arith.constant 0 : i32
    return %c0_i32, %c0_i32_0 : i32, i32
  }
  func.func @transform_2(%arg0: i32) -> (i32, i32) {
    %c0_i32 = arith.constant 0 : i32
    %c0_i32_0 = arith.constant 0 : i32
    %c0_i32_1 = arith.constant 0 : i32
    return %c0_i32, %c0_i32_0 : i32, i32
  }
  func.func @transform_3(%arg0: i32) -> (i32, i32) {
    %c0_i32 = arith.constant 0 : i32
    %c0_i32_0 = arith.constant 0 : i32
    %c0_i32_1 = arith.constant 0 : i32
    return %c0_i32, %c0_i32_0 : i32, i32
  }
  func.func @transform_4(%arg0: i32) -> (i32, i32) {
    %c0_i32 = arith.constant 0 : i32
    %c0_i32_0 = arith.constant 0 : i32
    %c0_i32_1 = arith.constant 0 : i32
    return %c0_i32, %c0_i32_0 : i32, i32
  }
  func.func @transform_5(%arg0: i32) -> (i32, i32) {
    %c0_i32 = arith.constant 0 : i32
    %c0_i32_0 = arith.constant 0 : i32
    %c0_i32_1 = arith.constant 0 : i32
    return %c0_i32, %c0_i32_0 : i32, i32
  }
  func.func @transform_6(%arg0: i32) -> (i32, i32) {
    %c0_i32 = arith.constant 0 : i32
    %c0_i32_0 = arith.constant 0 : i32
    %c0_i32_1 = arith.constant 0 : i32
    return %c0_i32, %c0_i32_0 : i32, i32
  }
  func.func @transform_7(%arg0: i32) -> (i32, i32) {
    %c0_i32 = arith.constant 0 : i32
    %c0_i32_0 = arith.constant 0 : i32
    %c0_i32_1 = arith.constant 0 : i32
    return %c0_i32, %c0_i32_0 : i32, i32
  }
  func.func @transform_8(%arg0: i32) -> (i32, i32) {
    %c0_i32 = arith.constant 0 : i32
    %c0_i32_0 = arith.constant 0 : i32
    %c0_i32_1 = arith.constant 0 : i32
    return %c0_i32, %c0_i32_0 : i32, i32
  }
  func.func @transform_9(%arg0: i32) -> (i32, i32) {
    %c0_i32 = arith.constant 0 : i32
    %c0_i32_0 = arith.constant 0 : i32
    %c0_i32_1 = arith.constant 0 : i32
    return %c0_i32, %c0_i32_0 : i32, i32
  }
  func.func @transform_10(%arg0: i32) -> (i32, i32) {
    %c0_i32 = arith.constant 0 : i32
    %c0_i32_0 = arith.constant 0 : i32
    %c0_i32_1 = arith.constant 0 : i32
    return %c0_i32, %c0_i32_0 : i32, i32
  }
  func.func @transform_11(%arg0: i32) -> (i32, i32) {
    %c0_i32 = arith.constant 0 : i32
    %c0_i32_0 = arith.constant 0 : i32
    %c0_i32_1 = arith.constant 0 : i32
    return %c0_i32, %c0_i32_0 : i32, i32
  }
  func.func @transform_12(%arg0: i32) -> (i32, i32) {
    %c0_i32 = arith.constant 0 : i32
    %c0_i32_0 = arith.constant 0 : i32
    %c0_i32_1 = arith.constant 0 : i32
    return %c0_i32, %c0_i32_0 : i32, i32
  }
  func.func @transform_13(%arg0: i32) -> (i32, i32) {
    %c0_i32 = arith.constant 0 : i32
    %c0_i32_0 = arith.constant 0 : i32
    %c0_i32_1 = arith.constant 0 : i32
    return %c0_i32, %c0_i32_0 : i32, i32
  }
  func.func @transform_14(%arg0: i32) -> (i32, i32, i32, i32) {
    %c0_i32 = arith.constant 0 : i32
    %c0_i32_0 = arith.constant 0 : i32
    %c0_i32_1 = arith.constant 0 : i32
    %c0_i32_2 = arith.constant 0 : i32
    return %arg0, %c0_i32, %c0_i32_0, %c0_i32_1 : i32, i32, i32, i32
  }
}

</mosaic_0001>

<llo_original>
// kernel: tpu_custom_call.1
$region0: #{tpu_custom_call.1}
  #allocation0 [shape = 'u32[]', space=smem, size = 0x4, offset = 0x4, fixed_abs, tag = 'smem constant byte address 0x4 - core index']
  #allocation1 [shape = 'u32[144,128]{1,0:T(1,128)}', space=vmem, size = 0x12000, scoped, tag = 'internal scratch']
  #allocation2 [shape = 'f32[14,14,8]{2,1,0:T(8,128)}', space=vmem, size = 0x1c000, scoped, tag = 'scratch operand']
  %s0 = inlined_call_operand.vmem [shape: f32[2,8,8,16], index: 0, kind: input, shape index: {}]
  %s1 = inlined_call_operand.vmem [shape: f32[16,8], index: 1, kind: input, shape index: {}]
  %s2 = inlined_call_operand.vmem [shape: f32[1,8], index: 2, kind: input, shape index: {}]
  %s3 = inlined_call_operand.vmem [shape: f32[49,8], index: 3, kind: input, shape index: {}]
  %s4 = inlined_call_operand.vmem [shape: f32[49,8], index: 4, kind: input, shape index: {}]
  %s5 = inlined_call_operand.vmem [shape: f32[8,8], index: 5, kind: input, shape index: {}]
  %s6 = inlined_call_operand.vmem [shape: f32[1,8], index: 6, kind: input, shape index: {}]
  %s7 = inlined_call_operand.vmem [shape: f32[1,8], index: 7, kind: input, shape index: {}]
  %s8 = inlined_call_operand.vmem [shape: f32[1,8], index: 8, kind: input, shape index: {}]
  %s9 = inlined_call_operand.vmem [shape: f32[8,16], index: 9, kind: input, shape index: {}]
  %s10 = inlined_call_operand.vmem [shape: f32[1,16], index: 10, kind: input, shape index: {}]
  %s11 = inlined_call_operand.vmem [shape: f32[16,8], index: 11, kind: input, shape index: {}]
  %s12 = inlined_call_operand.vmem [shape: f32[1,8], index: 12, kind: input, shape index: {}]
  %s13 = inlined_call_operand.vmem [shape: f32[1,8], index: 13, kind: input, shape index: {}]
  %s14 = inlined_call_operand.hbm [shape: f32[2,8,8,8], index: 14, kind: output, shape index: {}]
  %s15 = sld [smem:[#allocation0]]
  $region89: #{tpu_custom_call.1} parent=0
    _
  %s17 = ssub.s32 1, %s15
  %s18 = scalar_select 0, %s17, %s15
  $region1: #{tpu_custom_call.1} parent=0
    #allocation3 [shape = 'u8[65536]{0}', space=vmem, size = 0x10000, scoped, tag = 'output window, operand 0']
    #allocation4 [shape = 's32[2]{0}', space=sflag, size = 0x8, scoped, tag = 'scoped memory for tpu_custom_call.1']
    %19 = vsyncpa [#allocation4], 0
    %s20 = scalar_lea.sflag [#allocation4], 1
    %21 = vsyncpa %s20, 0
    loop: start=0, step=1, limit=4
    $region2: #{tpu_custom_call.1} parent=1 // loop_pre_header
      _
    $region3: #{tpu_custom_call.1} parent=1 // loop_header
      %s23 = sphi 0, %s27
      %p24 = scmp.ge.s32.totalorder %s23, 4
      %s33 = sphi 0, %s35
      %s36 = sphi 0, %s33
      %s37 = sphi 0, %s36
      %s53 = sphi 0, %s37
      %s57 = sphi 0, %s57
      %s59 = sphi 0, %s57
      %s60 = sphi 0, %s59
      %s74 = sphi 0, %s60
      %s78 = sphi 0, %s78
      %s80 = sphi 0, %s78
      %s81 = sphi 0, %s80
      %s95 = sphi 0, %s81
      %s99 = sphi 0, %s99
      %s101 = sphi 0, %s99
      %s102 = sphi 0, %s101
      %s116 = sphi 0, %s102
      %s120 = sphi 0, %s120
      %s122 = sphi 0, %s120
      %s123 = sphi 0, %s122
      %s137 = sphi 0, %s123
      %s141 = sphi 0, %s141
      %s143 = sphi 0, %s141
      %s144 = sphi 0, %s143
      %s158 = sphi 0, %s144
      %s162 = sphi 0, %s162
      %s164 = sphi 0, %s162
      %s165 = sphi 0, %s164
      %s179 = sphi 0, %s165
      %s183 = sphi 0, %s183
      %s185 = sphi 0, %s183
      %s186 = sphi 0, %s185
      %s200 = sphi 0, %s186
      %s204 = sphi 0, %s204
      %s206 = sphi 0, %s204
      %s207 = sphi 0, %s206
      %s221 = sphi 0, %s207
      %s225 = sphi 0, %s225
      %s227 = sphi 0, %s225
      %s228 = sphi 0, %s227
      %s242 = sphi 0, %s228
      %s246 = sphi 0, %s246
      %s248 = sphi 0, %s246
      %s249 = sphi 0, %s248
      %s263 = sphi 0, %s249
      %s267 = sphi 0, %s267
      %s269 = sphi 0, %s267
      %s270 = sphi 0, %s269
      %s284 = sphi 0, %s270
      %s288 = sphi 0, %s288
      %s290 = sphi 0, %s288
      %s291 = sphi 0, %s290
      %s305 = sphi 0, %s291
      %s309 = sphi 0, %s309
      %s311 = sphi 0, %s309
      %s312 = sphi 0, %s311
      %s326 = sphi 0, %s312
      %s332 = sphi 0, %s334
      %s335 = sphi 0, %s332
      %s336 = sphi 0, %s335
      %s352 = sphi 0, %s336
    $region4: #{tpu_custom_call.1} parent=1 // loop_header_branch
      %26 = sbr.rel (%p24) target = $region8
    $region5: #{tpu_custom_call.1} parent=1 // loop_body
      %s28 = ssub.s32 %s23, 1
      %s29 = ssub.s32 %s23, 2
      %s30 = sadd.s32 %s23, 1
      %s31 = ssub.s32 %s23, %s30
      %p32 = scmp.eq.s32.totalorder %s31, 0
      %s34 = sadd.s32 %s33, 1
      %s35 = scalar_select %p32, %s33, %s34
      %p38 = pneg %p32
      %p39 = scmp.eq.s32.totalorder %s23, 1
      %p40 = por %p38, %p39
      %p41 = scmp.ne.s32.totalorder %s33, %s36
      %p42 = scmp.eq.s32.totalorder %s23, 0
      %p43 = por %p41, %p42
      %p44 = scmp.ne.s32.totalorder %s33, %s36
      %p45 = scmp.eq.s32.totalorder %s28, 1
      %p46 = por %p44, %p45
      %p47 = scmp.ne.s32.totalorder %s36, %s37
      %p48 = scmp.eq.s32.totalorder %s28, 0
      %p49 = por %p47, %p48
      %p50 = scmp.ne.s32.totalorder %s36, %s37
      %p51 = scmp.eq.s32.totalorder %s29, 1
      %p52 = por %p50, %p51
      %p54 = scmp.ne.s32.totalorder %s37, %s53
      %p55 = scmp.eq.s32.totalorder %s29, 0
      %p56 = por %p54, %p55
      %s58 = sadd.s32 %s57, 1
      %p61 = scmp.eq.s32.totalorder %s23, 1
      %p62 = scmp.ne.s32.totalorder %s57, %s59
      %p63 = scmp.eq.s32.totalorder %s23, 0
      %p64 = por %p62, %p63
      %p65 = scmp.ne.s32.totalorder %s57, %s59
      %p66 = scmp.eq.s32.totalorder %s28, 1
      %p67 = por %p65, %p66
      %p68 = scmp.ne.s32.totalorder %s59, %s60
      %p69 = scmp.eq.s32.totalorder %s28, 0
      %p70 = por %p68, %p69
      %p71 = scmp.ne.s32.totalorder %s59, %s60
      %p72 = scmp.eq.s32.totalorder %s29, 1
      %p73 = por %p71, %p72
      %p75 = scmp.ne.s32.totalorder %s60, %s74
      %p76 = scmp.eq.s32.totalorder %s29, 0
      %p77 = por %p75, %p76
      %s79 = sadd.s32 %s78, 1
      %p82 = scmp.eq.s32.totalorder %s23, 1
      %p83 = scmp.ne.s32.totalorder %s78, %s80
      %p84 = scmp.eq.s32.totalorder %s23, 0
      %p85 = por %p83, %p84
      %p86 = scmp.ne.s32.totalorder %s78, %s80
      %p87 = scmp.eq.s32.totalorder %s28, 1
      %p88 = por %p86, %p87
      %p89 = scmp.ne.s32.totalorder %s80, %s81
      %p90 = scmp.eq.s32.totalorder %s28, 0
      %p91 = por %p89, %p90
      %p92 = scmp.ne.s32.totalorder %s80, %s81
      %p93 = scmp.eq.s32.totalorder %s29, 1
      %p94 = por %p92, %p93
      %p96 = scmp.ne.s32.totalorder %s81, %s95
      %p97 = scmp.eq.s32.totalorder %s29, 0
      %p98 = por %p96, %p97
      %s100 = sadd.s32 %s99, 1
      %p103 = scmp.eq.s32.totalorder %s23, 1
      %p104 = scmp.ne.s32.totalorder %s99, %s101
      %p105 = scmp.eq.s32.totalorder %s23, 0
      %p106 = por %p104, %p105
      %p107 = scmp.ne.s32.totalorder %s99, %s101
      %p108 = scmp.eq.s32.totalorder %s28, 1
      %p109 = por %p107, %p108
      %p110 = scmp.ne.s32.totalorder %s101, %s102
      %p111 = scmp.eq.s32.totalorder %s28, 0
      %p112 = por %p110, %p111
      %p113 = scmp.ne.s32.totalorder %s101, %s102
      %p114 = scmp.eq.s32.totalorder %s29, 1
      %p115 = por %p113, %p114
      %p117 = scmp.ne.s32.totalorder %s102, %s116
      %p118 = scmp.eq.s32.totalorder %s29, 0
      %p119 = por %p117, %p118
      %s121 = sadd.s32 %s120, 1
      %p124 = scmp.eq.s32.totalorder %s23, 1
      %p125 = scmp.ne.s32.totalorder %s120, %s122
      %p126 = scmp.eq.s32.totalorder %s23, 0
      %p127 = por %p125, %p126
      %p128 = scmp.ne.s32.totalorder %s120, %s122
      %p129 = scmp.eq.s32.totalorder %s28, 1
      %p130 = por %p128, %p129
      %p131 = scmp.ne.s32.totalorder %s122, %s123
      %p132 = scmp.eq.s32.totalorder %s28, 0
      %p133 = por %p131, %p132
      %p134 = scmp.ne.s32.totalorder %s122, %s123
      %p135 = scmp.eq.s32.totalorder %s29, 1
      %p136 = por %p134, %p135
      %p138 = scmp.ne.s32.totalorder %s123, %s137
      %p139 = scmp.eq.s32.totalorder %s29, 0
      %p140 = por %p138, %p139
      %s142 = sadd.s32 %s141, 1
      %p145 = scmp.eq.s32.totalorder %s23, 1
      %p146 = scmp.ne.s32.totalorder %s141, %s143
      %p147 = scmp.eq.s32.totalorder %s23, 0
      %p148 = por %p146, %p147
      %p149 = scmp.ne.s32.totalorder %s141, %s143
      %p150 = scmp.eq.s32.totalorder %s28, 1
      %p151 = por %p149, %p150
      %p152 = scmp.ne.s32.totalorder %s143, %s144
      %p153 = scmp.eq.s32.totalorder %s28, 0
      %p154 = por %p152, %p153
      %p155 = scmp.ne.s32.totalorder %s143, %s144
      %p156 = scmp.eq.s32.totalorder %s29, 1
      %p157 = por %p155, %p156
      %p159 = scmp.ne.s32.totalorder %s144, %s158
      %p160 = scmp.eq.s32.totalorder %s29, 0
      %p161 = por %p159, %p160
      %s163 = sadd.s32 %s162, 1
      %p166 = scmp.eq.s32.totalorder %s23, 1
      %p167 = scmp.ne.s32.totalorder %s162, %s164
      %p168 = scmp.eq.s32.totalorder %s23, 0
      %p169 = por %p167, %p168
      %p170 = scmp.ne.s32.totalorder %s162, %s164
      %p171 = scmp.eq.s32.totalorder %s28, 1
      %p172 = por %p170, %p171
      %p173 = scmp.ne.s32.totalorder %s164, %s165
      %p174 = scmp.eq.s32.totalorder %s28, 0
      %p175 = por %p173, %p174
      %p176 = scmp.ne.s32.totalorder %s164, %s165
      %p177 = scmp.eq.s32.totalorder %s29, 1
      %p178 = por %p176, %p177
      %p180 = scmp.ne.s32.totalorder %s165, %s179
      %p181 = scmp.eq.s32.totalorder %s29, 0
      %p182 = por %p180, %p181
      %s184 = sadd.s32 %s183, 1
      %p187 = scmp.eq.s32.totalorder %s23, 1
      %p188 = scmp.ne.s32.totalorder %s183, %s185
      %p189 = scmp.eq.s32.totalorder %s23, 0
      %p190 = por %p188, %p189
      %p191 = scmp.ne.s32.totalorder %s183, %s185
      %p192 = scmp.eq.s32.totalorder %s28, 1
      %p193 = por %p191, %p192
      %p194 = scmp.ne.s32.totalorder %s185, %s186
      %p195 = scmp.eq.s32.totalorder %s28, 0
      %p196 = por %p194, %p195
      %p197 = scmp.ne.s32.totalorder %s185, %s186
      %p198 = scmp.eq.s32.totalorder %s29, 1
      %p199 = por %p197, %p198
      %p201 = scmp.ne.s32.totalorder %s186, %s200
      %p202 = scmp.eq.s32.totalorder %s29, 0
      %p203 = por %p201, %p202
      %s205 = sadd.s32 %s204, 1
      %p208 = scmp.eq.s32.totalorder %s23, 1
      %p209 = scmp.ne.s32.totalorder %s204, %s206
      %p210 = scmp.eq.s32.totalorder %s23, 0
      %p211 = por %p209, %p210
      %p212 = scmp.ne.s32.totalorder %s204, %s206
      %p213 = scmp.eq.s32.totalorder %s28, 1
      %p214 = por %p212, %p213
      %p215 = scmp.ne.s32.totalorder %s206, %s207
      %p216 = scmp.eq.s32.totalorder %s28, 0
      %p217 = por %p215, %p216
      %p218 = scmp.ne.s32.totalorder %s206, %s207
      %p219 = scmp.eq.s32.totalorder %s29, 1
      %p220 = por %p218, %p219
      %p222 = scmp.ne.s32.totalorder %s207, %s221
      %p223 = scmp.eq.s32.totalorder %s29, 0
      %p224 = por %p222, %p223
      %s226 = sadd.s32 %s225, 1
      %p229 = scmp.eq.s32.totalorder %s23, 1
      %p230 = scmp.ne.s32.totalorder %s225, %s227
      %p231 = scmp.eq.s32.totalorder %s23, 0
      %p232 = por %p230, %p231
      %p233 = scmp.ne.s32.totalorder %s225, %s227
      %p234 = scmp.eq.s32.totalorder %s28, 1
      %p235 = por %p233, %p234
      %p236 = scmp.ne.s32.totalorder %s227, %s228
      %p237 = scmp.eq.s32.totalorder %s28, 0
      %p238 = por %p236, %p237
      %p239 = scmp.ne.s32.totalorder %s227, %s228
      %p240 = scmp.eq.s32.totalorder %s29, 1
      %p241 = por %p239, %p240
      %p243 = scmp.ne.s32.totalorder %s228, %s242
      %p244 = scmp.eq.s32.totalorder %s29, 0
      %p245 = por %p243, %p244
      %s247 = sadd.s32 %s246, 1
      %p250 = scmp.eq.s32.totalorder %s23, 1
      %p251 = scmp.ne.s32.totalorder %s246, %s248
      %p252 = scmp.eq.s32.totalorder %s23, 0
      %p253 = por %p251, %p252
      %p254 = scmp.ne.s32.totalorder %s246, %s248
      %p255 = scmp.eq.s32.totalorder %s28, 1
      %p256 = por %p254, %p255
      %p257 = scmp.ne.s32.totalorder %s248, %s249
      %p258 = scmp.eq.s32.totalorder %s28, 0
      %p259 = por %p257, %p258
      %p260 = scmp.ne.s32.totalorder %s248, %s249
      %p261 = scmp.eq.s32.totalorder %s29, 1
      %p262 = por %p260, %p261
      %p264 = scmp.ne.s32.totalorder %s249, %s263
      %p265 = scmp.eq.s32.totalorder %s29, 0
      %p266 = por %p264, %p265
      %s268 = sadd.s32 %s267, 1
      %p271 = scmp.eq.s32.totalorder %s23, 1
      %p272 = scmp.ne.s32.totalorder %s267, %s269
      %p273 = scmp.eq.s32.totalorder %s23, 0
      %p274 = por %p272, %p273
      %p275 = scmp.ne.s32.totalorder %s267, %s269
      %p276 = scmp.eq.s32.totalorder %s28, 1
      %p277 = por %p275, %p276
      %p278 = scmp.ne.s32.totalorder %s269, %s270
      %p279 = scmp.eq.s32.totalorder %s28, 0
      %p280 = por %p278, %p279
      %p281 = scmp.ne.s32.totalorder %s269, %s270
      %p282 = scmp.eq.s32.totalorder %s29, 1
      %p283 = por %p281, %p282
      %p285 = scmp.ne.s32.totalorder %s270, %s284
      %p286 = scmp.eq.s32.totalorder %s29, 0
      %p287 = por %p285, %p286
      %s289 = sadd.s32 %s288, 1
      %p292 = scmp.eq.s32.totalorder %s23, 1
      %p293 = scmp.ne.s32.totalorder %s288, %s290
      %p294 = scmp.eq.s32.totalorder %s23, 0
      %p295 = por %p293, %p294
      %p296 = scmp.ne.s32.totalorder %s288, %s290
      %p297 = scmp.eq.s32.totalorder %s28, 1
      %p298 = por %p296, %p297
      %p299 = scmp.ne.s32.totalorder %s290, %s291
      %p300 = scmp.eq.s32.totalorder %s28, 0
      %p301 = por %p299, %p300
      %p302 = scmp.ne.s32.totalorder %s290, %s291
      %p303 = scmp.eq.s32.totalorder %s29, 1
      %p304 = por %p302, %p303
      %p306 = scmp.ne.s32.totalorder %s291, %s305
      %p307 = scmp.eq.s32.totalorder %s29, 0
      %p308 = por %p306, %p307
      %s310 = sadd.s32 %s309, 1
      %p313 = scmp.eq.s32.totalorder %s23, 1
      %p314 = scmp.ne.s32.totalorder %s309, %s311
      %p315 = scmp.eq.s32.totalorder %s23, 0
      %p316 = por %p314, %p315
      %p317 = scmp.ne.s32.totalorder %s309, %s311
      %p318 = scmp.eq.s32.totalorder %s28, 1
      %p319 = por %p317, %p318
      %p320 = scmp.ne.s32.totalorder %s311, %s312
      %p321 = scmp.eq.s32.totalorder %s28, 0
      %p322 = por %p320, %p321
      %p323 = scmp.ne.s32.totalorder %s311, %s312
      %p324 = scmp.eq.s32.totalorder %s29, 1
      %p325 = por %p323, %p324
      %p327 = scmp.ne.s32.totalorder %s312, %s326
      %p328 = scmp.eq.s32.totalorder %s29, 0
      %p329 = por %p327, %p328
      %s330 = ssub.s32 %s23, %s30
      %p331 = scmp.eq.s32.totalorder %s330, 0
      %s333 = sadd.s32 %s332, 1
      %s334 = scalar_select %p331, %s332, %s333
      %p337 = pneg %p331
      %p338 = scmp.eq.s32.totalorder %s23, 1
      %p339 = por %p337, %p338
      %p340 = scmp.ne.s32.totalorder %s332, %s335
      %p341 = scmp.eq.s32.totalorder %s23, 0
      %p342 = por %p340, %p341
      %p343 = scmp.ne.s32.totalorder %s332, %s335
      %p344 = scmp.eq.s32.totalorder %s28, 1
      %p345 = por %p343, %p344
      %p346 = scmp.ne.s32.totalorder %s335, %s336
      %p347 = scmp.eq.s32.totalorder %s28, 0
      %p348 = por %p346, %p347
      %p349 = scmp.ne.s32.totalorder %s335, %s336
      %p350 = scmp.eq.s32.totalorder %s29, 1
      %p351 = por %p349, %p350
      %p353 = scmp.ne.s32.totalorder %s336, %s352
      %p354 = scmp.eq.s32.totalorder %s29, 0
      %p355 = por %p353, %p354
      %p356 = scmp.le.s32.totalorder 1, %s23
      %p357 = scmp.lt.s32.totalorder %s23, 3
      %p358 = pnand %p356, %p357
      %p359 = pneg %p358
      // Predicated region
      $region9: #{tpu_custom_call.1} parent=5 // pred_check
        _
      $region10: #{tpu_custom_call.1} parent=5 // pred_check_branch
        %361 = sbr.rel (%p358) target = $region12
      $region11: #{tpu_custom_call.1} parent=5 // pred_region
        %s362 = ssub.s32 %s23, 1
        // Predicated region
        $region13: #{tpu_custom_call.1} parent=11 // pred_check
          %p363 = pneg %p70
        $region14: #{tpu_custom_call.1} parent=11 // pred_check_branch
          %365 = sbr.rel (%p363) target = $region16
        $region15: #{tpu_custom_call.1} parent=11 // pred_region
          _
        $region16: #{tpu_custom_call.1} parent=11 // pred_fallthru
          _
        // Predicated region
        $region17: #{tpu_custom_call.1} parent=11 // pred_check
          %p366 = pneg %p91
        $region18: #{tpu_custom_call.1} parent=11 // pred_check_branch
          %368 = sbr.rel (%p366) target = $region20
        $region19: #{tpu_custom_call.1} parent=11 // pred_region
          _
        $region20: #{tpu_custom_call.1} parent=11 // pred_fallthru
          _
        // Predicated region
        $region21: #{tpu_custom_call.1} parent=11 // pred_check
          %p369 = pneg %p112
        $region22: #{tpu_custom_call.1} parent=11 // pred_check_branch
          %371 = sbr.rel (%p369) target = $region24
        $region23: #{tpu_custom_call.1} parent=11 // pred_region
          _
        $region24: #{tpu_custom_call.1} parent=11 // pred_fallthru
          _
        // Predicated region
        $region25: #{tpu_custom_call.1} parent=11 // pred_check
          %p372 = pneg %p133
        $region26: #{tpu_custom_call.1} parent=11 // pred_check_branch
          %374 = sbr.rel (%p372) target = $region28
        $region27: #{tpu_custom_call.1} parent=11 // pred_region
          _
        $region28: #{tpu_custom_call.1} parent=11 // pred_fallthru
          _
        // Predicated region
        $region29: #{tpu_custom_call.1} parent=11 // pred_check
          %p375 = pneg %p154
        $region30: #{tpu_custom_call.1} parent=11 // pred_check_branch
          %377 = sbr.rel (%p375) target = $region32
        $region31: #{tpu_custom_call.1} parent=11 // pred_region
          _
        $region32: #{tpu_custom_call.1} parent=11 // pred_fallthru
          _
        // Predicated region
        $region33: #{tpu_custom_call.1} parent=11 // pred_check
          %p378 = pneg %p175
        $region34: #{tpu_custom_call.1} parent=11 // pred_check_branch
          %380 = sbr.rel (%p378) target = $region36
        $region35: #{tpu_custom_call.1} parent=11 // pred_region
          _
        $region36: #{tpu_custom_call.1} parent=11 // pred_fallthru
          _
        // Predicated region
        $region37: #{tpu_custom_call.1} parent=11 // pred_check
          %p381 = pneg %p196
        $region38: #{tpu_custom_call.1} parent=11 // pred_check_branch
          %383 = sbr.rel (%p381) target = $region40
        $region39: #{tpu_custom_call.1} parent=11 // pred_region
          _
        $region40: #{tpu_custom_call.1} parent=11 // pred_fallthru
          _
        // Predicated region
        $region41: #{tpu_custom_call.1} parent=11 // pred_check
          %p384 = pneg %p217
        $region42: #{tpu_custom_call.1} parent=11 // pred_check_branch
          %386 = sbr.rel (%p384) target = $region44
        $region43: #{tpu_custom_call.1} parent=11 // pred_region
          _
        $region44: #{tpu_custom_call.1} parent=11 // pred_fallthru
          _
        // Predicated region
        $region45: #{tpu_custom_call.1} parent=11 // pred_check
          %p387 = pneg %p238
        $region46: #{tpu_custom_call.1} parent=11 // pred_check_branch
          %389 = sbr.rel (%p387) target = $region48
        $region47: #{tpu_custom_call.1} parent=11 // pred_region
          _
        $region48: #{tpu_custom_call.1} parent=11 // pred_fallthru
          _
        // Predicated region
        $region49: #{tpu_custom_call.1} parent=11 // pred_check
          %p390 = pneg %p259
        $region50: #{tpu_custom_call.1} parent=11 // pred_check_branch
          %392 = sbr.rel (%p390) target = $region52
        $region51: #{tpu_custom_call.1} parent=11 // pred_region
          _
        $region52: #{tpu_custom_call.1} parent=11 // pred_fallthru
          _
        // Predicated region
        $region53: #{tpu_custom_call.1} parent=11 // pred_check
          %p393 = pneg %p280
        $region54: #{tpu_custom_call.1} parent=11 // pred_check_branch
          %395 = sbr.rel (%p393) target = $region56
        $region55: #{tpu_custom_call.1} parent=11 // pred_region
          _
        $region56: #{tpu_custom_call.1} parent=11 // pred_fallthru
          _
        // Predicated region
        $region57: #{tpu_custom_call.1} parent=11 // pred_check
          %p396 = pneg %p301
        $region58: #{tpu_custom_call.1} parent=11 // pred_check_branch
          %398 = sbr.rel (%p396) target = $region60
        $region59: #{tpu_custom_call.1} parent=11 // pred_region
          _
        $region60: #{tpu_custom_call.1} parent=11 // pred_fallthru
          _
        // Predicated region
        $region61: #{tpu_custom_call.1} parent=11 // pred_check
          %p399 = pneg %p322
        $region62: #{tpu_custom_call.1} parent=11 // pred_check_branch
          %401 = sbr.rel (%p399) target = $region64
        $region63: #{tpu_custom_call.1} parent=11 // pred_region
          _
        $region64: #{tpu_custom_call.1} parent=11 // pred_fallthru
          _
      $region12: #{tpu_custom_call.1} parent=5 // pred_fallthru
        _
      %p402 = scmp.lt.s32.totalorder %s23, 2
      // Predicated region
      $region65: #{tpu_custom_call.1} parent=5 // pred_check
        %p403 = pneg %p402
      $region66: #{tpu_custom_call.1} parent=5 // pred_check_branch
        %405 = sbr.rel (%p403) target = $region68
      $region67: #{tpu_custom_call.1} parent=5 // pred_region
        // Predicated region
        $region69: #{tpu_custom_call.1} parent=67 // pred_check
          %p406 = pneg %p43
        $region70: #{tpu_custom_call.1} parent=67 // pred_check_branch
          %408 = sbr.rel (%p406) target = $region72
        $region71: #{tpu_custom_call.1} parent=67 // pred_region
          %p409 = scmp.lt.s32.totalorder %s23, 1
          %s410 = scalar_select %p409, %s23, 1
          %s411 = smul.addr %s410, 8
          %s412 = smul.addr %s411, 8
          %s413 = scalar_lea.vmem %s0, %s412
        $region72: #{tpu_custom_call.1} parent=67 // pred_fallthru
          _
      $region68: #{tpu_custom_call.1} parent=5 // pred_fallthru
        _
      %p414 = scmp.le.s32.totalorder 1, %s23
      %p415 = scmp.lt.s32.totalorder %s23, 3
      %p416 = pnand %p414, %p415
      %p417 = pneg %p416
      // Predicated region
      $region73: #{tpu_custom_call.1} parent=5 // pred_check
        _
      $region74: #{tpu_custom_call.1} parent=5 // pred_check_branch
        %419 = sbr.rel (%p416) target = $region76
      $region75: #{tpu_custom_call.1} parent=5 // pred_region
        %s420 = ssub.s32 %s23, 1
        %p421 = scmp.lt.s32.totalorder %s28, 1
        %s422 = scalar_select %p421, %s28, 1
        %s423 = smul.addr %s422, 8
        %s424 = smul.addr %s423, 8
        %s425 = scalar_lea.vmem %s0, %s424
        %p426 = pneg %p49
        %p427 = pneg %p46
        %p428 = pneg %p70
        %p429 = pneg %p67
        %p430 = pneg %p91
        %p431 = pneg %p88
        %p432 = pneg %p112
        %p433 = pneg %p109
        %p434 = pneg %p133
        %p435 = pneg %p130
        %p436 = pneg %p154
        %p437 = pneg %p151
        %p438 = pneg %p175
        %p439 = pneg %p172
        %p440 = pneg %p196
        %p441 = pneg %p193
        %p442 = pneg %p217
        %p443 = pneg %p214
        %p444 = pneg %p238
        %p445 = pneg %p235
        %p446 = pneg %p259
        %p447 = pneg %p256
        %p448 = pneg %p280
        %p449 = pneg %p277
        %p450 = pneg %p301
        %p451 = pneg %p298
        %p452 = pneg %p322
        %p453 = pneg %p319
        %p454 = pneg %p348
        %p455 = pneg %p345
        %s456 = sand.u32 %s335, 1
        %s457 = scalar_lea.sflag [#allocation4], %s456
        %s458 = sand.u32 %s335, 1
        %s459 = smul.addr %s458, 64
        %s460 = scalar_lea.vmem [#allocation3], %s459
        %p461 = scmp.lt.s32.totalorder %s28, 1
        %s462 = scalar_select %p461, %s28, 1
        %s463 = smul.addr %s462, 8
        %s464 = smul.addr %s463, 8
        %s465 = scalar_lea.vmem %s0, %s464
        %v466 = vld [vmem:[%s465] sm:$0xff]
        %v467 = vld [vmem:[%s465 + $0x8] sm:$0xff]
        %v468 = vld [vmem:[%s465 + $0x10] sm:$0xff]
        %v469 = vld [vmem:[%s465 + $0x18] sm:$0xff]
        %v470 = vld [vmem:[%s465 + $0x20] sm:$0xff]
        %v471 = vld [vmem:[%s465 + $0x28] sm:$0xff]
        %v472 = vld [vmem:[%s465 + $0x30] sm:$0xff]
        %v473 = vld [vmem:[%s465 + $0x38] sm:$0xff]
        %v474 = vld [vmem:[%s1] sm:$0xff]
        %v475 = vld [vmem:[%s1 + $0x8] sm:$0xff]
        %v476 = vld [vmem:[%s2] sm:$0x1]
        %v478 = vlaneseq
        %v479 = vshrl.u32 %v478, 7
        %v480 = vsub.s32 0, %v479
        %v481 = vrot.slane %v476, %v480
        %vm483 = vcmask 130048
        %v485 = vsel %vm483, %v466, 0
        %v488 = vsel %vm483, %v467, 0
        %v491 = vsel %vm483, %v468, 0
        %v494 = vsel %vm483, %v469, 0
        %v497 = vsel %vm483, %v470, 0
        %v500 = vsel %vm483, %v471, 0
        %v503 = vsel %vm483, %v472, 0
        %v506 = vsel %vm483, %v473, 0
        %508 = vmatprep.subr.mxu0 0.0
        %509 = vmatpush1.msra.mxu0 0.0
        %510 = vmatprep.subr.mxu0 0.0
        %511 = vmatpush1.msra.mxu0 0.0
        %512 = vmatprep.subr.mxu0 0.0
        %513 = vmatpush1.msra.mxu0 0.0
        %514 = vmatprep.subr.mxu0 0.0
        %515 = vmatpush1.msra.mxu0 0.0
        %516 = vmatprep.subr.mxu0 0.0
        %517 = vmatpush1.msra.mxu0 0.0
        %518 = vmatprep.subr.mxu0 0.0
        %519 = vmatpush1.msra.mxu0 0.0
        %520 = vmatprep.subr.mxu0 0.0
        %521 = vmatpush1.msra.mxu0 0.0
        %522 = vmatprep.subr.mxu0 0.0
        %523 = vmatpush1.msra.mxu0 0.0
        %524 = vmatprep.subr.mxu0 0.0
        %525 = vmatpush1.msra.mxu0 0.0
        %526 = vmatprep.subr.mxu0 0.0
        %527 = vmatpush1.msra.mxu0 0.0
        %528 = vmatprep.subr.mxu0 0.0
        %529 = vmatpush1.msra.mxu0 0.0
        %530 = vmatprep.subr.mxu0 0.0
        %531 = vmatpush1.msra.mxu0 0.0
        %532 = vmatprep.subr.mxu0 0.0
        %533 = vmatpush1.msra.mxu0 0.0
        %534 = vmatprep.subr.mxu0 0.0
        %535 = vmatpush1.msra.mxu0 0.0
        %536 = vmatprep.subr.mxu0 0.0
        %537 = vmatpush1.msra.mxu0 %v475
        %538 = vmatprep.subr.mxu0 0.0
        %539 = vmatpush1.msra.mxu0 %v474
        %540 = vmatprep.subr.mxu0 0.0
        %541 = vmatpush2.msra.mxu0 0.0
        %542 = vmatprep.subr.mxu0 0.0
        %543 = vmatpush2.msra.mxu0 0.0
        %544 = vmatprep.subr.mxu0 0.0
        %545 = vmatpush2.msra.mxu0 0.0
        %546 = vmatprep.subr.mxu0 0.0
        %547 = vmatpush2.msra.mxu0 0.0
        %548 = vmatprep.subr.mxu0 0.0
        %549 = vmatpush2.msra.mxu0 0.0
        %550 = vmatprep.subr.mxu0 0.0
        %551 = vmatpush2.msra.mxu0 0.0
        %552 = vmatprep.subr.mxu0 0.0
        %553 = vmatpush2.msra.mxu0 0.0
        %554 = vmatprep.subr.mxu0 0.0
        %555 = vmatpush2.msra.mxu0 0.0
        %556 = vmatprep.subr.mxu0 0.0
        %557 = vmatpush2.msra.mxu0 0.0
        %558 = vmatprep.subr.mxu0 0.0
        %559 = vmatpush2.msra.mxu0 0.0
        %560 = vmatprep.subr.mxu0 0.0
        %561 = vmatpush2.msra.mxu0 0.0
        %562 = vmatprep.subr.mxu0 0.0
        %563 = vmatpush2.msra.mxu0 0.0
        %564 = vmatprep.subr.mxu0 0.0
        %565 = vmatpush2.msra.mxu0 0.0
        %566 = vmatprep.subr.mxu0 0.0
        %567 = vmatpush2.msra.mxu0 0.0
        %568 = vmatprep.subr.mxu0 0.0
        %569 = vmatpush2.msra.mxu0 0.0
        %570 = vmatprep.subr.mxu0 0.0
        %571 = vmatpush2.msra.mxu0 0.0
        %572 = vmatprep.mubr.f32.mxu0 0.0
        %573 = vmatmul.mubr.f32.gmra.mxu0 %v485
        %v574 = vpop.f32.mrf.mxu0
        %v575 = vadd.f32 %v481, %v574
        %v576 = vpop.f32.mrf.mxu0
        %577 = vmatprep.mubr.f32.mxu0 0.0
        %578 = vmatmul.mubr.f32.gmra.mxu0 %v488
        %v579 = vpop.f32.mrf.mxu0
        %v580 = vadd.f32 %v481, %v579
        %v581 = vpop.f32.mrf.mxu0
        %582 = vmatprep.mubr.f32.mxu0 0.0
        %583 = vmatmul.mubr.f32.gmra.mxu0 %v491
        %v584 = vpop.f32.mrf.mxu0
        %v585 = vadd.f32 %v481, %v584
        %v586 = vpop.f32.mrf.mxu0
        %587 = vmatprep.mubr.f32.mxu0 0.0
        %588 = vmatmul.mubr.f32.gmra.mxu0 %v494
        %v589 = vpop.f32.mrf.mxu0
        %v590 = vadd.f32 %v481, %v589
        %v591 = vpop.f32.mrf.mxu0
        %592 = vmatprep.mubr.f32.mxu0 0.0
        %593 = vmatmul.mubr.f32.gmra.mxu0 %v497
        %v594 = vpop.f32.mrf.mxu0
        %v595 = vadd.f32 %v481, %v594
        %v596 = vpop.f32.mrf.mxu0
        %597 = vmatprep.mubr.f32.mxu0 0.0
        %598 = vmatmul.mubr.f32.gmra.mxu0 %v500
        %v599 = vpop.f32.mrf.mxu0
        %v600 = vadd.f32 %v481, %v599
        %v601 = vpop.f32.mrf.mxu0
        %602 = vmatprep.mubr.f32.mxu0 0.0
        %603 = vmatmul.mubr.f32.gmra.mxu0 %v503
        %v604 = vpop.f32.mrf.mxu0
        %v605 = vadd.f32 %v481, %v604
        %v606 = vpop.f32.mrf.mxu0
        %607 = vmatprep.mubr.f32.mxu0 0.0
        %608 = vmatmul.mubr.f32.gmra.mxu0 %v506
        %v609 = vpop.f32.mrf.mxu0
        %v610 = vadd.f32 %v481, %v609
        %v611 = vpop.f32.mrf.mxu0
        %612 = vdwg.mxu0
        %vm613 = vcmask 64512
        %614 = vst.msk [vmem:[#allocation2] sm:$0xff] %vm613, 0.0
        %vm615 = vcmask 62464
        %616 = vst.msk [vmem:[#allocation2 + $0x8] sm:$0x3f] %vm615, 0.0
        %617 = vst.msk [vmem:[#allocation2 + $0x10] sm:$0xff] %vm613, 0.0
        %618 = vst.msk [vmem:[#allocation2 + $0x18] sm:$0x3f] %vm615, 0.0
        %619 = vst.msk [vmem:[#allocation2 + $0x20] sm:$0xff] %vm613, 0.0
        %620 = vst.msk [vmem:[#allocation2 + $0x28] sm:$0x3f] %vm615, 0.0
        %621 = vst.msk [vmem:[#allocation2 + $0x30] sm:$0xff] %vm613, 0.0
        %622 = vst.msk [vmem:[#allocation2 + $0x38] sm:$0x3f] %vm615, 0.0
        %623 = vst.msk [vmem:[#allocation2 + $0x40] sm:$0xff] %vm613, 0.0
        %624 = vst.msk [vmem:[#allocation2 + $0x48] sm:$0x3f] %vm615, 0.0
        %625 = vst.msk [vmem:[#allocation2 + $0x50] sm:$0xff] %vm613, 0.0
        %626 = vst.msk [vmem:[#allocation2 + $0x58] sm:$0x3f] %vm615, 0.0
        %627 = vst.msk [vmem:[#allocation2 + $0x60] sm:$0xff] %vm613, 0.0
        %628 = vst.msk [vmem:[#allocation2 + $0x68] sm:$0x3f] %vm615, 0.0
        %629 = vst.msk [vmem:[#allocation2 + $0x70] sm:$0xff] %vm613, 0.0
        %630 = vst.msk [vmem:[#allocation2 + $0x78] sm:$0x3f] %vm615, 0.0
        %631 = vst.msk [vmem:[#allocation2 + $0x80] sm:$0xff] %vm613, 0.0
        %632 = vst.msk [vmem:[#allocation2 + $0x88] sm:$0x3f] %vm615, 0.0
        %633 = vst.msk [vmem:[#allocation2 + $0x90] sm:$0xff] %vm613, 0.0
        %634 = vst.msk [vmem:[#allocation2 + $0x98] sm:$0x3f] %vm615, 0.0
        %635 = vst.msk [vmem:[#allocation2 + $0xa0] sm:$0xff] %vm613, 0.0
        %636 = vst.msk [vmem:[#allocation2 + $0xa8] sm:$0x3f] %vm615, 0.0
        %637 = vst.msk [vmem:[#allocation2 + $0xb0] sm:$0xff] %vm613, 0.0
        %638 = vst.msk [vmem:[#allocation2 + $0xb8] sm:$0x3f] %vm615, 0.0
        %639 = vst.msk [vmem:[#allocation2 + $0xc0] sm:$0xff] %vm613, 0.0
        %640 = vst.msk [vmem:[#allocation2 + $0xc8] sm:$0x3f] %vm615, 0.0
        %641 = vst.msk [vmem:[#allocation2 + $0xd0] sm:$0xff] %vm613, 0.0
        %642 = vst.msk [vmem:[#allocation2 + $0xd8] sm:$0x3f] %vm615, 0.0
        %s643 = scalar_lea.vmem [#allocation2], 48
        %644 = vst.msk [vmem:[%s643 + $0x3] sm:$0xff] %vm613, %v575
        %645 = vst.msk [vmem:[%s643 + $0x13] sm:$0xff] %vm613, %v580
        %646 = vst.msk [vmem:[%s643 + $0x23] sm:$0xff] %vm613, %v585
        %647 = vst.msk [vmem:[%s643 + $0x33] sm:$0xff] %vm613, %v590
        %648 = vst.msk [vmem:[%s643 + $0x43] sm:$0xff] %vm613, %v595
        %649 = vst.msk [vmem:[%s643 + $0x53] sm:$0xff] %vm613, %v600
        %650 = vst.msk [vmem:[%s643 + $0x63] sm:$0xff] %vm613, %v605
        %651 = vst.msk [vmem:[%s643 + $0x73] sm:$0xff] %vm613, %v610
        %v652 = vld [vmem:[#allocation2] sm:$0xff]
        %v653 = vld [vmem:[#allocation2 + $0x10] sm:$0xff]
        %v654 = vld [vmem:[#allocation2 + $0x20] sm:$0xff]
        %v655 = vld [vmem:[#allocation2 + $0x30] sm:$0xff]
        %v656 = vld [vmem:[#allocation2 + $0x40] sm:$0xff]
        %v657 = vld [vmem:[#allocation2 + $0x50] sm:$0xff]
        %v658 = vld [vmem:[#allocation2 + $0x60] sm:$0xff]
        %v659 = vld [vmem:[#allocation2 + $0x70] sm:$0xff]
        %v660 = vld [vmem:[%s3] sm:$0x1]
        %v661 = vlaneseq
        %v662 = vshrl.u32 %v661, 7
        %v663 = vsub.s32 0, %v662
        %v664 = vrot.slane %v660, %v663
        %v665 = vmul.f32 %v652, %v664
        %v666 = vmul.f32 %v653, %v664
        %v667 = vmul.f32 %v654, %v664
        %v668 = vmul.f32 %v655, %v664
        %v669 = vmul.f32 %v656, %v664
        %v670 = vmul.f32 %v657, %v664
        %v671 = vmul.f32 %v658, %v664
        %v672 = vmul.f32 %v659, %v664
        %v673 = vadd.f32 %v665, 0.0
        %v674 = vadd.f32 %v666, 0.0
        %v675 = vadd.f32 %v667, 0.0
        %v676 = vadd.f32 %v668, 0.0
        %v677 = vadd.f32 %v669, 0.0
        %v678 = vadd.f32 %v670, 0.0
        %v679 = vadd.f32 %v671, 0.0
        %v680 = vadd.f32 %v672, 0.0
        %v681 = vld [vmem:[%s4] sm:$0x1]
        %v682 = vlaneseq
        %v683 = vshrl.u32 %v682, 7
        %v684 = vsub.s32 0, %v683
        %v685 = vrot.slane %v681, %v684
        %v686 = vmul.f32 %v652, %v685
        %v687 = vmul.f32 %v653, %v685
        %v688 = vmul.f32 %v654, %v685
        %v689 = vmul.f32 %v655, %v685
        %v690 = vmul.f32 %v656, %v685
        %v691 = vmul.f32 %v657, %v685
        %v692 = vmul.f32 %v658, %v685
        %v693 = vmul.f32 %v659, %v685
        %v694 = vadd.f32 %v686, 0.0
        %v695 = vadd.f32 %v687, 0.0
        %v696 = vadd.f32 %v688, 0.0
        %v697 = vadd.f32 %v689, 0.0
        %v698 = vadd.f32 %v690, 0.0
        %v699 = vadd.f32 %v691, 0.0
        %v700 = vadd.f32 %v692, 0.0
        %v701 = vadd.f32 %v693, 0.0
        %v702 = vld [vmem:[#allocation2 + $0x1] sm:$0xff]
        %v703 = vld [vmem:[#allocation2 + $0x11] sm:$0xff]
        %v704 = vld [vmem:[#allocation2 + $0x21] sm:$0xff]
        %v705 = vld [vmem:[#allocation2 + $0x31] sm:$0xff]
        %v706 = vld [vmem:[#allocation2 + $0x41] sm:$0xff]
        %v707 = vld [vmem:[#allocation2 + $0x51] sm:$0xff]
        %v708 = vld [vmem:[#allocation2 + $0x61] sm:$0xff]
        %v709 = vld [vmem:[#allocation2 + $0x71] sm:$0xff]
        %v710 = vld [vmem:[%s3 + $0x1] sm:$0x1]
        %v711 = vlaneseq
        %v712 = vshrl.u32 %v711, 7
        %v713 = vsub.s32 0, %v712
        %v714 = vrot.slane %v710, %v713
        %v715 = vmul.f32 %v702, %v714
        %v716 = vmul.f32 %v703, %v714
        %v717 = vmul.f32 %v704, %v714
        %v718 = vmul.f32 %v705, %v714
        %v719 = vmul.f32 %v706, %v714
        %v720 = vmul.f32 %v707, %v714
        %v721 = vmul.f32 %v708, %v714
        %v722 = vmul.f32 %v709, %v714
        %v723 = vadd.f32 %v673, %v715
        %v724 = vadd.f32 %v674, %v716
        %v725 = vadd.f32 %v675, %v717
        %v726 = vadd.f32 %v676, %v718
        %v727 = vadd.f32 %v677, %v719
        %v728 = vadd.f32 %v678, %v720
        %v729 = vadd.f32 %v679, %v721
        %v730 = vadd.f32 %v680, %v722
        %v731 = vld [vmem:[%s4 + $0x1] sm:$0x1]
        %v732 = vlaneseq
        %v733 = vshrl.u32 %v732, 7
        %v734 = vsub.s32 0, %v733
        %v735 = vrot.slane %v731, %v734
        %v736 = vmul.f32 %v702, %v735
        %v737 = vmul.f32 %v703, %v735
        %v738 = vmul.f32 %v704, %v735
        %v739 = vmul.f32 %v705, %v735
        %v740 = vmul.f32 %v706, %v735
        %v741 = vmul.f32 %v707, %v735
        %v742 = vmul.f32 %v708, %v735
        %v743 = vmul.f32 %v709, %v735
        %v744 = vadd.f32 %v694, %v736
        %v745 = vadd.f32 %v695, %v737
        %v746 = vadd.f32 %v696, %v738
        %v747 = vadd.f32 %v697, %v739
        %v748 = vadd.f32 %v698, %v740
        %v749 = vadd.f32 %v699, %v741
        %v750 = vadd.f32 %v700, %v742
        %v751 = vadd.f32 %v701, %v743
        %v752 = vld [vmem:[#allocation2 + $0x2] sm:$0xff]
        %v753 = vld [vmem:[#allocation2 + $0x12] sm:$0xff]
        %v754 = vld [vmem:[#allocation2 + $0x22] sm:$0xff]
        %v755 = vld [vmem:[#allocation2 + $0x32] sm:$0xff]
        %v756 = vld [vmem:[#allocation2 + $0x42] sm:$0xff]
        %v757 = vld [vmem:[#allocation2 + $0x52] sm:$0xff]
        %v758 = vld [vmem:[#allocation2 + $0x62] sm:$0xff]
        %v759 = vld [vmem:[#allocation2 + $0x72] sm:$0xff]
        %v760 = vld [vmem:[%s3 + $0x2] sm:$0x1]
        %v761 = vlaneseq
        %v762 = vshrl.u32 %v761, 7
        %v763 = vsub.s32 0, %v762
        %v764 = vrot.slane %v760, %v763
        %v765 = vmul.f32 %v752, %v764
        %v766 = vmul.f32 %v753, %v764
        %v767 = vmul.f32 %v754, %v764
        %v768 = vmul.f32 %v755, %v764
        %v769 = vmul.f32 %v756, %v764
        %v770 = vmul.f32 %v757, %v764
        %v771 = vmul.f32 %v758, %v764
        %v772 = vmul.f32 %v759, %v764
        %v773 = vadd.f32 %v723, %v765
        %v774 = vadd.f32 %v724, %v766
        %v775 = vadd.f32 %v725, %v767
        %v776 = vadd.f32 %v726, %v768
        %v777 = vadd.f32 %v727, %v769
        %v778 = vadd.f32 %v728, %v770
        %v779 = vadd.f32 %v729, %v771
        %v780 = vadd.f32 %v730, %v772
        %v781 = vld [vmem:[%s4 + $0x2] sm:$0x1]
        %v782 = vlaneseq
        %v783 = vshrl.u32 %v782, 7
        %v784 = vsub.s32 0, %v783
        %v785 = vrot.slane %v781, %v784
        %v786 = vmul.f32 %v752, %v785
        %v787 = vmul.f32 %v753, %v785
        %v788 = vmul.f32 %v754, %v785
        %v789 = vmul.f32 %v755, %v785
        %v790 = vmul.f32 %v756, %v785
        %v791 = vmul.f32 %v757, %v785
        %v792 = vmul.f32 %v758, %v785
        %v793 = vmul.f32 %v759, %v785
        %v794 = vadd.f32 %v744, %v786
        %v795 = vadd.f32 %v745, %v787
        %v796 = vadd.f32 %v746, %v788
        %v797 = vadd.f32 %v747, %v789
        %v798 = vadd.f32 %v748, %v790
        %v799 = vadd.f32 %v749, %v791
        %v800 = vadd.f32 %v750, %v792
        %v801 = vadd.f32 %v751, %v793
        %v802 = vld [vmem:[#allocation2 + $0x3] sm:$0xff]
        %v803 = vld [vmem:[#allocation2 + $0x13] sm:$0xff]
        %v804 = vld [vmem:[#allocation2 + $0x23] sm:$0xff]
        %v805 = vld [vmem:[#allocation2 + $0x33] sm:$0xff]
        %v806 = vld [vmem:[#allocation2 + $0x43] sm:$0xff]
        %v807 = vld [vmem:[#allocation2 + $0x53] sm:$0xff]
        %v808 = vld [vmem:[#allocation2 + $0x63] sm:$0xff]
        %v809 = vld [vmem:[#allocation2 + $0x73] sm:$0xff]
        %v810 = vld [vmem:[%s3 + $0x3] sm:$0x1]
        %v811 = vlaneseq
        %v812 = vshrl.u32 %v811, 7
        %v813 = vsub.s32 0, %v812
        %v814 = vrot.slane %v810, %v813
        %v815 = vmul.f32 %v802, %v814
        %v816 = vmul.f32 %v803, %v814
        %v817 = vmul.f32 %v804, %v814
        %v818 = vmul.f32 %v805, %v814
        %v819 = vmul.f32 %v806, %v814
        %v820 = vmul.f32 %v807, %v814
        %v821 = vmul.f32 %v808, %v814
        %v822 = vmul.f32 %v809, %v814
        %v823 = vadd.f32 %v773, %v815
        %v824 = vadd.f32 %v774, %v816
        %v825 = vadd.f32 %v775, %v817
        %v826 = vadd.f32 %v776, %v818
        %v827 = vadd.f32 %v777, %v819
        %v828 = vadd.f32 %v778, %v820
        %v829 = vadd.f32 %v779, %v821
        %v830 = vadd.f32 %v780, %v822
        %v831 = vld [vmem:[%s4 + $0x3] sm:$0x1]
        %v832 = vlaneseq
        %v833 = vshrl.u32 %v832, 7
        %v834 = vsub.s32 0, %v833
        %v835 = vrot.slane %v831, %v834
        %v836 = vmul.f32 %v802, %v835
        %v837 = vmul.f32 %v803, %v835
        %v838 = vmul.f32 %v804, %v835
        %v839 = vmul.f32 %v805, %v835
        %v840 = vmul.f32 %v806, %v835
        %v841 = vmul.f32 %v807, %v835
        %v842 = vmul.f32 %v808, %v835
        %v843 = vmul.f32 %v809, %v835
        %v844 = vadd.f32 %v794, %v836
        %v845 = vadd.f32 %v795, %v837
        %v846 = vadd.f32 %v796, %v838
        %v847 = vadd.f32 %v797, %v839
        %v848 = vadd.f32 %v798, %v840
        %v849 = vadd.f32 %v799, %v841
        %v850 = vadd.f32 %v800, %v842
        %v851 = vadd.f32 %v801, %v843
        %v852 = vld [vmem:[#allocation2 + $0x4] sm:$0xff]
        %v853 = vld [vmem:[#allocation2 + $0x14] sm:$0xff]
        %v854 = vld [vmem:[#allocation2 + $0x24] sm:$0xff]
        %v855 = vld [vmem:[#allocation2 + $0x34] sm:$0xff]
        %v856 = vld [vmem:[#allocation2 + $0x44] sm:$0xff]
        %v857 = vld [vmem:[#allocation2 + $0x54] sm:$0xff]
        %v858 = vld [vmem:[#allocation2 + $0x64] sm:$0xff]
        %v859 = vld [vmem:[#allocation2 + $0x74] sm:$0xff]
        %v860 = vld [vmem:[%s3 + $0x4] sm:$0x1]
        %v861 = vlaneseq
        %v862 = vshrl.u32 %v861, 7
        %v863 = vsub.s32 0, %v862
        %v864 = vrot.slane %v860, %v863
        %v865 = vmul.f32 %v852, %v864
        %v866 = vmul.f32 %v853, %v864
        %v867 = vmul.f32 %v854, %v864
        %v868 = vmul.f32 %v855, %v864
        %v869 = vmul.f32 %v856, %v864
        %v870 = vmul.f32 %v857, %v864
        %v871 = vmul.f32 %v858, %v864
        %v872 = vmul.f32 %v859, %v864
        %v873 = vadd.f32 %v823, %v865
        %v874 = vadd.f32 %v824, %v866
        %v875 = vadd.f32 %v825, %v867
        %v876 = vadd.f32 %v826, %v868
        %v877 = vadd.f32 %v827, %v869
        %v878 = vadd.f32 %v828, %v870
        %v879 = vadd.f32 %v829, %v871
        %v880 = vadd.f32 %v830, %v872
        %v881 = vld [vmem:[%s4 + $0x4] sm:$0x1]
        %v882 = vlaneseq
        %v883 = vshrl.u32 %v882, 7
        %v884 = vsub.s32 0, %v883
        %v885 = vrot.slane %v881, %v884
        %v886 = vmul.f32 %v852, %v885
        %v887 = vmul.f32 %v853, %v885
        %v888 = vmul.f32 %v854, %v885
        %v889 = vmul.f32 %v855, %v885
        %v890 = vmul.f32 %v856, %v885
        %v891 = vmul.f32 %v857, %v885
        %v892 = vmul.f32 %v858, %v885
        %v893 = vmul.f32 %v859, %v885
        %v894 = vadd.f32 %v844, %v886
        %v895 = vadd.f32 %v845, %v887
        %v896 = vadd.f32 %v846, %v888
        %v897 = vadd.f32 %v847, %v889
        %v898 = vadd.f32 %v848, %v890
        %v899 = vadd.f32 %v849, %v891
        %v900 = vadd.f32 %v850, %v892
        %v901 = vadd.f32 %v851, %v893
        %v902 = vld [vmem:[#allocation2 + $0x5] sm:$0xff]
        %v903 = vld [vmem:[#allocation2 + $0x15] sm:$0xff]
        %v904 = vld [vmem:[#allocation2 + $0x25] sm:$0xff]
        %v905 = vld [vmem:[#allocation2 + $0x35] sm:$0xff]
        %v906 = vld [vmem:[#allocation2 + $0x45] sm:$0xff]
        %v907 = vld [vmem:[#allocation2 + $0x55] sm:$0xff]
        %v908 = vld [vmem:[#allocation2 + $0x65] sm:$0xff]
        %v909 = vld [vmem:[#allocation2 + $0x75] sm:$0xff]
        %v910 = vld [vmem:[%s3 + $0x5] sm:$0x1]
        %v911 = vlaneseq
        %v912 = vshrl.u32 %v911, 7
        %v913 = vsub.s32 0, %v912
        %v914 = vrot.slane %v910, %v913
        %v915 = vmul.f32 %v902, %v914
        %v916 = vmul.f32 %v903, %v914
        %v917 = vmul.f32 %v904, %v914
        %v918 = vmul.f32 %v905, %v914
        %v919 = vmul.f32 %v906, %v914
        %v920 = vmul.f32 %v907, %v914
        %v921 = vmul.f32 %v908, %v914
        %v922 = vmul.f32 %v909, %v914
        %v923 = vadd.f32 %v873, %v915
        %v924 = vadd.f32 %v874, %v916
        %v925 = vadd.f32 %v875, %v917
        %v926 = vadd.f32 %v876, %v918
        %v927 = vadd.f32 %v877, %v919
        %v928 = vadd.f32 %v878, %v920
        %v929 = vadd.f32 %v879, %v921
        %v930 = vadd.f32 %v880, %v922
        %v931 = vld [vmem:[%s4 + $0x5] sm:$0x1]
        %v932 = vlaneseq
        %v933 = vshrl.u32 %v932, 7
        %v934 = vsub.s32 0, %v933
        %v935 = vrot.slane %v931, %v934
        %v936 = vmul.f32 %v902, %v935
        %v937 = vmul.f32 %v903, %v935
        %v938 = vmul.f32 %v904, %v935
        %v939 = vmul.f32 %v905, %v935
        %v940 = vmul.f32 %v906, %v935
        %v941 = vmul.f32 %v907, %v935
        %v942 = vmul.f32 %v908, %v935
        %v943 = vmul.f32 %v909, %v935
        %v944 = vadd.f32 %v894, %v936
        %v945 = vadd.f32 %v895, %v937
        %v946 = vadd.f32 %v896, %v938
        %v947 = vadd.f32 %v897, %v939
        %v948 = vadd.f32 %v898, %v940
        %v949 = vadd.f32 %v899, %v941
        %v950 = vadd.f32 %v900, %v942
        %v951 = vadd.f32 %v901, %v943
        %v952 = vld [vmem:[#allocation2 + $0x6] sm:$0xff]
        %v953 = vld [vmem:[#allocation2 + $0x16] sm:$0xff]
        %v954 = vld [vmem:[#allocation2 + $0x26] sm:$0xff]
        %v955 = vld [vmem:[#allocation2 + $0x36] sm:$0xff]
        %v956 = vld [vmem:[#allocation2 + $0x46] sm:$0xff]
        %v957 = vld [vmem:[#allocation2 + $0x56] sm:$0xff]
        %v958 = vld [vmem:[#allocation2 + $0x66] sm:$0xff]
        %v959 = vld [vmem:[#allocation2 + $0x76] sm:$0xff]
        %v960 = vld [vmem:[%s3 + $0x6] sm:$0x1]
        %v961 = vlaneseq
        %v962 = vshrl.u32 %v961, 7
        %v963 = vsub.s32 0, %v962
        %v964 = vrot.slane %v960, %v963
        %v965 = vmul.f32 %v952, %v964
        %v966 = vmul.f32 %v953, %v964
        %v967 = vmul.f32 %v954, %v964
        %v968 = vmul.f32 %v955, %v964
        %v969 = vmul.f32 %v956, %v964
        %v970 = vmul.f32 %v957, %v964
        %v971 = vmul.f32 %v958, %v964
        %v972 = vmul.f32 %v959, %v964
        %v973 = vadd.f32 %v923, %v965
        %v974 = vadd.f32 %v924, %v966
        %v975 = vadd.f32 %v925, %v967
        %v976 = vadd.f32 %v926, %v968
        %v977 = vadd.f32 %v927, %v969
        %v978 = vadd.f32 %v928, %v970
        %v979 = vadd.f32 %v929, %v971
        %v980 = vadd.f32 %v930, %v972
        %v981 = vld [vmem:[%s4 + $0x6] sm:$0x1]
        %v982 = vlaneseq
        %v983 = vshrl.u32 %v982, 7
        %v984 = vsub.s32 0, %v983
        %v985 = vrot.slane %v981, %v984
        %v986 = vmul.f32 %v952, %v985
        %v987 = vmul.f32 %v953, %v985
        %v988 = vmul.f32 %v954, %v985
        %v989 = vmul.f32 %v955, %v985
        %v990 = vmul.f32 %v956, %v985
        %v991 = vmul.f32 %v957, %v985
        %v992 = vmul.f32 %v958, %v985
        %v993 = vmul.f32 %v959, %v985
        %v994 = vadd.f32 %v944, %v986
        %v995 = vadd.f32 %v945, %v987
        %v996 = vadd.f32 %v946, %v988
        %v997 = vadd.f32 %v947, %v989
        %v998 = vadd.f32 %v948, %v990
        %v999 = vadd.f32 %v949, %v991
        %v1000 = vadd.f32 %v950, %v992
        %v1001 = vadd.f32 %v951, %v993
        %s1002 = scalar_lea.vmem [#allocation2], 16
        %v1003 = vld [vmem:[%s1002] sm:$0xff]
        %v1004 = vld [vmem:[%s1002 + $0x10] sm:$0xff]
        %v1005 = vld [vmem:[%s1002 + $0x20] sm:$0xff]
        %v1006 = vld [vmem:[%s1002 + $0x30] sm:$0xff]
        %v1007 = vld [vmem:[%s1002 + $0x40] sm:$0xff]
        %v1008 = vld [vmem:[%s1002 + $0x50] sm:$0xff]
        %v1009 = vld [vmem:[%s1002 + $0x60] sm:$0xff]
        %v1010 = vld [vmem:[%s1002 + $0x70] sm:$0xff]
        %v1011 = vld [vmem:[%s3 + $0x7] sm:$0x1]
        %v1012 = vlaneseq
        %v1013 = vshrl.u32 %v1012, 7
        %v1014 = vsub.s32 0, %v1013
        %v1015 = vrot.slane %v1011, %v1014
        %v1016 = vmul.f32 %v1003, %v1015
        %v1017 = vmul.f32 %v1004, %v1015
        %v1018 = vmul.f32 %v1005, %v1015
        %v1019 = vmul.f32 %v1006, %v1015
        %v1020 = vmul.f32 %v1007, %v1015
        %v1021 = vmul.f32 %v1008, %v1015
        %v1022 = vmul.f32 %v1009, %v1015
        %v1023 = vmul.f32 %v1010, %v1015
        %v1024 = vadd.f32 %v973, %v1016
        %v1025 = vadd.f32 %v974, %v1017
        %v1026 = vadd.f32 %v975, %v1018
        %v1027 = vadd.f32 %v976, %v1019
        %v1028 = vadd.f32 %v977, %v1020
        %v1029 = vadd.f32 %v978, %v1021
        %v1030 = vadd.f32 %v979, %v1022
        %v1031 = vadd.f32 %v980, %v1023
        %v1032 = vld [vmem:[%s4 + $0x7] sm:$0x1]
        %v1033 = vlaneseq
        %v1034 = vshrl.u32 %v1033, 7
        %v1035 = vsub.s32 0, %v1034
        %v1036 = vrot.slane %v1032, %v1035
        %v1037 = vmul.f32 %v1003, %v1036
        %v1038 = vmul.f32 %v1004, %v1036
        %v1039 = vmul.f32 %v1005, %v1036
        %v1040 = vmul.f32 %v1006, %v1036
        %v1041 = vmul.f32 %v1007, %v1036
        %v1042 = vmul.f32 %v1008, %v1036
        %v1043 = vmul.f32 %v1009, %v1036
        %v1044 = vmul.f32 %v1010, %v1036
        %v1045 = vadd.f32 %v994, %v1037
        %v1046 = vadd.f32 %v995, %v1038
        %v1047 = vadd.f32 %v996, %v1039
        %v1048 = vadd.f32 %v997, %v1040
        %v1049 = vadd.f32 %v998, %v1041
        %v1050 = vadd.f32 %v999, %v1042
        %v1051 = vadd.f32 %v1000, %v1043
        %v1052 = vadd.f32 %v1001, %v1044
        %v1053 = vld [vmem:[%s1002 + $0x1] sm:$0xff]
        %v1054 = vld [vmem:[%s1002 + $0x11] sm:$0xff]
        %v1055 = vld [vmem:[%s1002 + $0x21] sm:$0xff]
        %v1056 = vld [vmem:[%s1002 + $0x31] sm:$0xff]
        %v1057 = vld [vmem:[%s1002 + $0x41] sm:$0xff]
        %v1058 = vld [vmem:[%s1002 + $0x51] sm:$0xff]
        %v1059 = vld [vmem:[%s1002 + $0x61] sm:$0xff]
        %v1060 = vld [vmem:[%s1002 + $0x71] sm:$0xff]
        %v1061 = vld [vmem:[%s3 + $0x8] sm:$0x1]
        %v1062 = vlaneseq
        %v1063 = vshrl.u32 %v1062, 7
        %v1064 = vsub.s32 0, %v1063
        %v1065 = vrot.slane %v1061, %v1064
        %v1066 = vmul.f32 %v1053, %v1065
        %v1067 = vmul.f32 %v1054, %v1065
        %v1068 = vmul.f32 %v1055, %v1065
        %v1069 = vmul.f32 %v1056, %v1065
        %v1070 = vmul.f32 %v1057, %v1065
        %v1071 = vmul.f32 %v1058, %v1065
        %v1072 = vmul.f32 %v1059, %v1065
        %v1073 = vmul.f32 %v1060, %v1065
        %v1074 = vadd.f32 %v1024, %v1066
        %v1075 = vadd.f32 %v1025, %v1067
        %v1076 = vadd.f32 %v1026, %v1068
        %v1077 = vadd.f32 %v1027, %v1069
        %v1078 = vadd.f32 %v1028, %v1070
        %v1079 = vadd.f32 %v1029, %v1071
        %v1080 = vadd.f32 %v1030, %v1072
        %v1081 = vadd.f32 %v1031, %v1073
        %v1082 = vld [vmem:[%s4 + $0x8] sm:$0x1]
        %v1083 = vlaneseq
        %v1084 = vshrl.u32 %v1083, 7
        %v1085 = vsub.s32 0, %v1084
        %v1086 = vrot.slane %v1082, %v1085
        %v1087 = vmul.f32 %v1053, %v1086
        %v1088 = vmul.f32 %v1054, %v1086
        %v1089 = vmul.f32 %v1055, %v1086
        %v1090 = vmul.f32 %v1056, %v1086
        %v1091 = vmul.f32 %v1057, %v1086
        %v1092 = vmul.f32 %v1058, %v1086
        %v1093 = vmul.f32 %v1059, %v1086
        %v1094 = vmul.f32 %v1060, %v1086
        %v1095 = vadd.f32 %v1045, %v1087
        %v1096 = vadd.f32 %v1046, %v1088
        %v1097 = vadd.f32 %v1047, %v1089
        %v1098 = vadd.f32 %v1048, %v1090
        %v1099 = vadd.f32 %v1049, %v1091
        %v1100 = vadd.f32 %v1050, %v1092
        %v1101 = vadd.f32 %v1051, %v1093
        %v1102 = vadd.f32 %v1052, %v1094
        %v1103 = vld [vmem:[%s1002 + $0x2] sm:$0xff]
        %v1104 = vld [vmem:[%s1002 + $0x12] sm:$0xff]
        %v1105 = vld [vmem:[%s1002 + $0x22] sm:$0xff]
        %v1106 = vld [vmem:[%s1002 + $0x32] sm:$0xff]
        %v1107 = vld [vmem:[%s1002 + $0x42] sm:$0xff]
        %v1108 = vld [vmem:[%s1002 + $0x52] sm:$0xff]
        %v1109 = vld [vmem:[%s1002 + $0x62] sm:$0xff]
        %v1110 = vld [vmem:[%s1002 + $0x72] sm:$0xff]
        %v1111 = vld [vmem:[%s3 + $0x9] sm:$0x1]
        %v1112 = vlaneseq
        %v1113 = vshrl.u32 %v1112, 7
        %v1114 = vsub.s32 0, %v1113
        %v1115 = vrot.slane %v1111, %v1114
        %v1116 = vmul.f32 %v1103, %v1115
        %v1117 = vmul.f32 %v1104, %v1115
        %v1118 = vmul.f32 %v1105, %v1115
        %v1119 = vmul.f32 %v1106, %v1115
        %v1120 = vmul.f32 %v1107, %v1115
        %v1121 = vmul.f32 %v1108, %v1115
        %v1122 = vmul.f32 %v1109, %v1115
        %v1123 = vmul.f32 %v1110, %v1115
        %v1124 = vadd.f32 %v1074, %v1116
        %v1125 = vadd.f32 %v1075, %v1117
        %v1126 = vadd.f32 %v1076, %v1118
        %v1127 = vadd.f32 %v1077, %v1119
        %v1128 = vadd.f32 %v1078, %v1120
        %v1129 = vadd.f32 %v1079, %v1121
        %v1130 = vadd.f32 %v1080, %v1122
        %v1131 = vadd.f32 %v1081, %v1123
        %v1132 = vld [vmem:[%s4 + $0x9] sm:$0x1]
        %v1133 = vlaneseq
        %v1134 = vshrl.u32 %v1133, 7
        %v1135 = vsub.s32 0, %v1134
        %v1136 = vrot.slane %v1132, %v1135
        %v1137 = vmul.f32 %v1103, %v1136
        %v1138 = vmul.f32 %v1104, %v1136
        %v1139 = vmul.f32 %v1105, %v1136
        %v1140 = vmul.f32 %v1106, %v1136
        %v1141 = vmul.f32 %v1107, %v1136
        %v1142 = vmul.f32 %v1108, %v1136
        %v1143 = vmul.f32 %v1109, %v1136
        %v1144 = vmul.f32 %v1110, %v1136
        %v1145 = vadd.f32 %v1095, %v1137
        %v1146 = vadd.f32 %v1096, %v1138
        %v1147 = vadd.f32 %v1097, %v1139
        %v1148 = vadd.f32 %v1098, %v1140
        %v1149 = vadd.f32 %v1099, %v1141
        %v1150 = vadd.f32 %v1100, %v1142
        %v1151 = vadd.f32 %v1101, %v1143
        %v1152 = vadd.f32 %v1102, %v1144
        %v1153 = vld [vmem:[%s1002 + $0x3] sm:$0xff]
        %v1154 = vld [vmem:[%s1002 + $0x13] sm:$0xff]
        %v1155 = vld [vmem:[%s1002 + $0x23] sm:$0xff]
        %v1156 = vld [vmem:[%s1002 + $0x33] sm:$0xff]
        %v1157 = vld [vmem:[%s1002 + $0x43] sm:$0xff]
        %v1158 = vld [vmem:[%s1002 + $0x53] sm:$0xff]
        %v1159 = vld [vmem:[%s1002 + $0x63] sm:$0xff]
        %v1160 = vld [vmem:[%s1002 + $0x73] sm:$0xff]
        %v1161 = vld [vmem:[%s3 + $0xa] sm:$0x1]
        %v1162 = vlaneseq
        %v1163 = vshrl.u32 %v1162, 7
        %v1164 = vsub.s32 0, %v1163
        %v1165 = vrot.slane %v1161, %v1164
        %v1166 = vmul.f32 %v1153, %v1165
        %v1167 = vmul.f32 %v1154, %v1165
        %v1168 = vmul.f32 %v1155, %v1165
        %v1169 = vmul.f32 %v1156, %v1165
        %v1170 = vmul.f32 %v1157, %v1165
        %v1171 = vmul.f32 %v1158, %v1165
        %v1172 = vmul.f32 %v1159, %v1165
        %v1173 = vmul.f32 %v1160, %v1165
        %v1174 = vadd.f32 %v1124, %v1166
        %v1175 = vadd.f32 %v1125, %v1167
        %v1176 = vadd.f32 %v1126, %v1168
        %v1177 = vadd.f32 %v1127, %v1169
        %v1178 = vadd.f32 %v1128, %v1170
        %v1179 = vadd.f32 %v1129, %v1171
        %v1180 = vadd.f32 %v1130, %v1172
        %v1181 = vadd.f32 %v1131, %v1173
        %v1182 = vld [vmem:[%s4 + $0xa] sm:$0x1]
        %v1183 = vlaneseq
        %v1184 = vshrl.u32 %v1183, 7
        %v1185 = vsub.s32 0, %v1184
        %v1186 = vrot.slane %v1182, %v1185
        %v1187 = vmul.f32 %v1153, %v1186
        %v1188 = vmul.f32 %v1154, %v1186
        %v1189 = vmul.f32 %v1155, %v1186
        %v1190 = vmul.f32 %v1156, %v1186
        %v1191 = vmul.f32 %v1157, %v1186
        %v1192 = vmul.f32 %v1158, %v1186
        %v1193 = vmul.f32 %v1159, %v1186
        %v1194 = vmul.f32 %v1160, %v1186
        %v1195 = vadd.f32 %v1145, %v1187
        %v1196 = vadd.f32 %v1146, %v1188
        %v1197 = vadd.f32 %v1147, %v1189
        %v1198 = vadd.f32 %v1148, %v1190
        %v1199 = vadd.f32 %v1149, %v1191
        %v1200 = vadd.f32 %v1150, %v1192
        %v1201 = vadd.f32 %v1151, %v1193
        %v1202 = vadd.f32 %v1152, %v1194
        %v1203 = vld [vmem:[%s1002 + $0x4] sm:$0xff]
        %v1204 = vld [vmem:[%s1002 + $0x14] sm:$0xff]
        %v1205 = vld [vmem:[%s1002 + $0x24] sm:$0xff]
        %v1206 = vld [vmem:[%s1002 + $0x34] sm:$0xff]
        %v1207 = vld [vmem:[%s1002 + $0x44] sm:$0xff]
        %v1208 = vld [vmem:[%s1002 + $0x54] sm:$0xff]
        %v1209 = vld [vmem:[%s1002 + $0x64] sm:$0xff]
        %v1210 = vld [vmem:[%s1002 + $0x74] sm:$0xff]
        %v1211 = vld [vmem:[%s3 + $0xb] sm:$0x1]
        %v1212 = vlaneseq
        %v1213 = vshrl.u32 %v1212, 7
        %v1214 = vsub.s32 0, %v1213
        %v1215 = vrot.slane %v1211, %v1214
        %v1216 = vmul.f32 %v1203, %v1215
        %v1217 = vmul.f32 %v1204, %v1215
        %v1218 = vmul.f32 %v1205, %v1215
        %v1219 = vmul.f32 %v1206, %v1215
        %v1220 = vmul.f32 %v1207, %v1215
        %v1221 = vmul.f32 %v1208, %v1215
        %v1222 = vmul.f32 %v1209, %v1215
        %v1223 = vmul.f32 %v1210, %v1215
        %v1224 = vadd.f32 %v1174, %v1216
        %v1225 = vadd.f32 %v1175, %v1217
        %v1226 = vadd.f32 %v1176, %v1218
        %v1227 = vadd.f32 %v1177, %v1219
        %v1228 = vadd.f32 %v1178, %v1220
        %v1229 = vadd.f32 %v1179, %v1221
        %v1230 = vadd.f32 %v1180, %v1222
        %v1231 = vadd.f32 %v1181, %v1223
        %v1232 = vld [vmem:[%s4 + $0xb] sm:$0x1]
        %v1233 = vlaneseq
        %v1234 = vshrl.u32 %v1233, 7
        %v1235 = vsub.s32 0, %v1234
        %v1236 = vrot.slane %v1232, %v1235
        %v1237 = vmul.f32 %v1203, %v1236
        %v1238 = vmul.f32 %v1204, %v1236
        %v1239 = vmul.f32 %v1205, %v1236
        %v1240 = vmul.f32 %v1206, %v1236
        %v1241 = vmul.f32 %v1207, %v1236
        %v1242 = vmul.f32 %v1208, %v1236
        %v1243 = vmul.f32 %v1209, %v1236
        %v1244 = vmul.f32 %v1210, %v1236
        %v1245 = vadd.f32 %v1195, %v1237
        %v1246 = vadd.f32 %v1196, %v1238
        %v1247 = vadd.f32 %v1197, %v1239
        %v1248 = vadd.f32 %v1198, %v1240
        %v1249 = vadd.f32 %v1199, %v1241
        %v1250 = vadd.f32 %v1200, %v1242
        %v1251 = vadd.f32 %v1201, %v1243
        %v1252 = vadd.f32 %v1202, %v1244
        %v1253 = vld [vmem:[%s1002 + $0x5] sm:$0xff]
        %v1254 = vld [vmem:[%s1002 + $0x15] sm:$0xff]
        %v1255 = vld [vmem:[%s1002 + $0x25] sm:$0xff]
        %v1256 = vld [vmem:[%s1002 + $0x35] sm:$0xff]
        %v1257 = vld [vmem:[%s1002 + $0x45] sm:$0xff]
        %v1258 = vld [vmem:[%s1002 + $0x55] sm:$0xff]
        %v1259 = vld [vmem:[%s1002 + $0x65] sm:$0xff]
        %v1260 = vld [vmem:[%s1002 + $0x75] sm:$0xff]
        %v1261 = vld [vmem:[%s3 + $0xc] sm:$0x1]
        %v1262 = vlaneseq
        %v1263 = vshrl.u32 %v1262, 7
        %v1264 = vsub.s32 0, %v1263
        %v1265 = vrot.slane %v1261, %v1264
        %v1266 = vmul.f32 %v1253, %v1265
        %v1267 = vmul.f32 %v1254, %v1265
        %v1268 = vmul.f32 %v1255, %v1265
        %v1269 = vmul.f32 %v1256, %v1265
        %v1270 = vmul.f32 %v1257, %v1265
        %v1271 = vmul.f32 %v1258, %v1265
        %v1272 = vmul.f32 %v1259, %v1265
        %v1273 = vmul.f32 %v1260, %v1265
        %v1274 = vadd.f32 %v1224, %v1266
        %v1275 = vadd.f32 %v1225, %v1267
        %v1276 = vadd.f32 %v1226, %v1268
        %v1277 = vadd.f32 %v1227, %v1269
        %v1278 = vadd.f32 %v1228, %v1270
        %v1279 = vadd.f32 %v1229, %v1271
        %v1280 = vadd.f32 %v1230, %v1272
        %v1281 = vadd.f32 %v1231, %v1273
        %v1282 = vld [vmem:[%s4 + $0xc] sm:$0x1]
        %v1283 = vlaneseq
        %v1284 = vshrl.u32 %v1283, 7
        %v1285 = vsub.s32 0, %v1284
        %v1286 = vrot.slane %v1282, %v1285
        %v1287 = vmul.f32 %v1253, %v1286
        %v1288 = vmul.f32 %v1254, %v1286
        %v1289 = vmul.f32 %v1255, %v1286
        %v1290 = vmul.f32 %v1256, %v1286
        %v1291 = vmul.f32 %v1257, %v1286
        %v1292 = vmul.f32 %v1258, %v1286
        %v1293 = vmul.f32 %v1259, %v1286
        %v1294 = vmul.f32 %v1260, %v1286
        %v1295 = vadd.f32 %v1245, %v1287
        %v1296 = vadd.f32 %v1246, %v1288
        %v1297 = vadd.f32 %v1247, %v1289
        %v1298 = vadd.f32 %v1248, %v1290
        %v1299 = vadd.f32 %v1249, %v1291
        %v1300 = vadd.f32 %v1250, %v1292
        %v1301 = vadd.f32 %v1251, %v1293
        %v1302 = vadd.f32 %v1252, %v1294
        %v1303 = vld [vmem:[%s1002 + $0x6] sm:$0xff]
        %v1304 = vld [vmem:[%s1002 + $0x16] sm:$0xff]
        %v1305 = vld [vmem:[%s1002 + $0x26] sm:$0xff]
        %v1306 = vld [vmem:[%s1002 + $0x36] sm:$0xff]
        %v1307 = vld [vmem:[%s1002 + $0x46] sm:$0xff]
        %v1308 = vld [vmem:[%s1002 + $0x56] sm:$0xff]
        %v1309 = vld [vmem:[%s1002 + $0x66] sm:$0xff]
        %v1310 = vld [vmem:[%s1002 + $0x76] sm:$0xff]
        %v1311 = vld [vmem:[%s3 + $0xd] sm:$0x1]
        %v1312 = vlaneseq
        %v1313 = vshrl.u32 %v1312, 7
        %v1314 = vsub.s32 0, %v1313
        %v1315 = vrot.slane %v1311, %v1314
        %v1316 = vmul.f32 %v1303, %v1315
        %v1317 = vmul.f32 %v1304, %v1315
        %v1318 = vmul.f32 %v1305, %v1315
        %v1319 = vmul.f32 %v1306, %v1315
        %v1320 = vmul.f32 %v1307, %v1315
        %v1321 = vmul.f32 %v1308, %v1315
        %v1322 = vmul.f32 %v1309, %v1315
        %v1323 = vmul.f32 %v1310, %v1315
        %v1324 = vadd.f32 %v1274, %v1316
        %v1325 = vadd.f32 %v1275, %v1317
        %v1326 = vadd.f32 %v1276, %v1318
        %v1327 = vadd.f32 %v1277, %v1319
        %v1328 = vadd.f32 %v1278, %v1320
        %v1329 = vadd.f32 %v1279, %v1321
        %v1330 = vadd.f32 %v1280, %v1322
        %v1331 = vadd.f32 %v1281, %v1323
        %v1332 = vld [vmem:[%s4 + $0xd] sm:$0x1]
        %v1333 = vlaneseq
        %v1334 = vshrl.u32 %v1333, 7
        %v1335 = vsub.s32 0, %v1334
        %v1336 = vrot.slane %v1332, %v1335
        %v1337 = vmul.f32 %v1303, %v1336
        %v1338 = vmul.f32 %v1304, %v1336
        %v1339 = vmul.f32 %v1305, %v1336
        %v1340 = vmul.f32 %v1306, %v1336
        %v1341 = vmul.f32 %v1307, %v1336
        %v1342 = vmul.f32 %v1308, %v1336
        %v1343 = vmul.f32 %v1309, %v1336
        %v1344 = vmul.f32 %v1310, %v1336
        %v1345 = vadd.f32 %v1295, %v1337
        %v1346 = vadd.f32 %v1296, %v1338
        %v1347 = vadd.f32 %v1297, %v1339
        %v1348 = vadd.f32 %v1298, %v1340
        %v1349 = vadd.f32 %v1299, %v1341
        %v1350 = vadd.f32 %v1300, %v1342
        %v1351 = vadd.f32 %v1301, %v1343
        %v1352 = vadd.f32 %v1302, %v1344
        %s1353 = scalar_lea.vmem [#allocation2], 32
        %v1354 = vld [vmem:[%s1353] sm:$0xff]
        %v1355 = vld [vmem:[%s1353 + $0x10] sm:$0xff]
        %v1356 = vld [vmem:[%s1353 + $0x20] sm:$0xff]
        %v1357 = vld [vmem:[%s1353 + $0x30] sm:$0xff]
        %v1358 = vld [vmem:[%s1353 + $0x40] sm:$0xff]
        %v1359 = vld [vmem:[%s1353 + $0x50] sm:$0xff]
        %v1360 = vld [vmem:[%s1353 + $0x60] sm:$0xff]
        %v1361 = vld [vmem:[%s1353 + $0x70] sm:$0xff]
        %v1362 = vld [vmem:[%s3 + $0xe] sm:$0x1]
        %v1363 = vlaneseq
        %v1364 = vshrl.u32 %v1363, 7
        %v1365 = vsub.s32 0, %v1364
        %v1366 = vrot.slane %v1362, %v1365
        %v1367 = vmul.f32 %v1354, %v1366
        %v1368 = vmul.f32 %v1355, %v1366
        %v1369 = vmul.f32 %v1356, %v1366
        %v1370 = vmul.f32 %v1357, %v1366
        %v1371 = vmul.f32 %v1358, %v1366
        %v1372 = vmul.f32 %v1359, %v1366
        %v1373 = vmul.f32 %v1360, %v1366
        %v1374 = vmul.f32 %v1361, %v1366
        %v1375 = vadd.f32 %v1324, %v1367
        %v1376 = vadd.f32 %v1325, %v1368
        %v1377 = vadd.f32 %v1326, %v1369
        %v1378 = vadd.f32 %v1327, %v1370
        %v1379 = vadd.f32 %v1328, %v1371
        %v1380 = vadd.f32 %v1329, %v1372
        %v1381 = vadd.f32 %v1330, %v1373
        %v1382 = vadd.f32 %v1331, %v1374
        %v1383 = vld [vmem:[%s4 + $0xe] sm:$0x1]
        %v1384 = vlaneseq
        %v1385 = vshrl.u32 %v1384, 7
        %v1386 = vsub.s32 0, %v1385
        %v1387 = vrot.slane %v1383, %v1386
        %v1388 = vmul.f32 %v1354, %v1387
        %v1389 = vmul.f32 %v1355, %v1387
        %v1390 = vmul.f32 %v1356, %v1387
        %v1391 = vmul.f32 %v1357, %v1387
        %v1392 = vmul.f32 %v1358, %v1387
        %v1393 = vmul.f32 %v1359, %v1387
        %v1394 = vmul.f32 %v1360, %v1387
        %v1395 = vmul.f32 %v1361, %v1387
        %v1396 = vadd.f32 %v1345, %v1388
        %v1397 = vadd.f32 %v1346, %v1389
        %v1398 = vadd.f32 %v1347, %v1390
        %v1399 = vadd.f32 %v1348, %v1391
        %v1400 = vadd.f32 %v1349, %v1392
        %v1401 = vadd.f32 %v1350, %v1393
        %v1402 = vadd.f32 %v1351, %v1394
        %v1403 = vadd.f32 %v1352, %v1395
        %v1404 = vld [vmem:[%s1353 + $0x1] sm:$0xff]
        %v1405 = vld [vmem:[%s1353 + $0x11] sm:$0xff]
        %v1406 = vld [vmem:[%s1353 + $0x21] sm:$0xff]
        %v1407 = vld [vmem:[%s1353 + $0x31] sm:$0xff]
        %v1408 = vld [vmem:[%s1353 + $0x41] sm:$0xff]
        %v1409 = vld [vmem:[%s1353 + $0x51] sm:$0xff]
        %v1410 = vld [vmem:[%s1353 + $0x61] sm:$0xff]
        %v1411 = vld [vmem:[%s1353 + $0x71] sm:$0xff]
        %v1412 = vld [vmem:[%s3 + $0xf] sm:$0x1]
        %v1413 = vlaneseq
        %v1414 = vshrl.u32 %v1413, 7
        %v1415 = vsub.s32 0, %v1414
        %v1416 = vrot.slane %v1412, %v1415
        %v1417 = vmul.f32 %v1404, %v1416
        %v1418 = vmul.f32 %v1405, %v1416
        %v1419 = vmul.f32 %v1406, %v1416
        %v1420 = vmul.f32 %v1407, %v1416
        %v1421 = vmul.f32 %v1408, %v1416
        %v1422 = vmul.f32 %v1409, %v1416
        %v1423 = vmul.f32 %v1410, %v1416
        %v1424 = vmul.f32 %v1411, %v1416
        %v1425 = vadd.f32 %v1375, %v1417
        %v1426 = vadd.f32 %v1376, %v1418
        %v1427 = vadd.f32 %v1377, %v1419
        %v1428 = vadd.f32 %v1378, %v1420
        %v1429 = vadd.f32 %v1379, %v1421
        %v1430 = vadd.f32 %v1380, %v1422
        %v1431 = vadd.f32 %v1381, %v1423
        %v1432 = vadd.f32 %v1382, %v1424
        %v1433 = vld [vmem:[%s4 + $0xf] sm:$0x1]
        %v1434 = vlaneseq
        %v1435 = vshrl.u32 %v1434, 7
        %v1436 = vsub.s32 0, %v1435
        %v1437 = vrot.slane %v1433, %v1436
        %v1438 = vmul.f32 %v1404, %v1437
        %v1439 = vmul.f32 %v1405, %v1437
        %v1440 = vmul.f32 %v1406, %v1437
        %v1441 = vmul.f32 %v1407, %v1437
        %v1442 = vmul.f32 %v1408, %v1437
        %v1443 = vmul.f32 %v1409, %v1437
        %v1444 = vmul.f32 %v1410, %v1437
        %v1445 = vmul.f32 %v1411, %v1437
        %v1446 = vadd.f32 %v1396, %v1438
        %v1447 = vadd.f32 %v1397, %v1439
        %v1448 = vadd.f32 %v1398, %v1440
        %v1449 = vadd.f32 %v1399, %v1441
        %v1450 = vadd.f32 %v1400, %v1442
        %v1451 = vadd.f32 %v1401, %v1443
        %v1452 = vadd.f32 %v1402, %v1444
        %v1453 = vadd.f32 %v1403, %v1445
        %v1454 = vld [vmem:[%s1353 + $0x2] sm:$0xff]
        %v1455 = vld [vmem:[%s1353 + $0x12] sm:$0xff]
        %v1456 = vld [vmem:[%s1353 + $0x22] sm:$0xff]
        %v1457 = vld [vmem:[%s1353 + $0x32] sm:$0xff]
        %v1458 = vld [vmem:[%s1353 + $0x42] sm:$0xff]
        %v1459 = vld [vmem:[%s1353 + $0x52] sm:$0xff]
        %v1460 = vld [vmem:[%s1353 + $0x62] sm:$0xff]
        %v1461 = vld [vmem:[%s1353 + $0x72] sm:$0xff]
        %v1462 = vld [vmem:[%s3 + $0x10] sm:$0x1]
        %v1463 = vlaneseq
        %v1464 = vshrl.u32 %v1463, 7
        %v1465 = vsub.s32 0, %v1464
        %v1466 = vrot.slane %v1462, %v1465
        %v1467 = vmul.f32 %v1454, %v1466
        %v1468 = vmul.f32 %v1455, %v1466
        %v1469 = vmul.f32 %v1456, %v1466
        %v1470 = vmul.f32 %v1457, %v1466
        %v1471 = vmul.f32 %v1458, %v1466
        %v1472 = vmul.f32 %v1459, %v1466
        %v1473 = vmul.f32 %v1460, %v1466
        %v1474 = vmul.f32 %v1461, %v1466
        %v1475 = vadd.f32 %v1425, %v1467
        %v1476 = vadd.f32 %v1426, %v1468
        %v1477 = vadd.f32 %v1427, %v1469
        %v1478 = vadd.f32 %v1428, %v1470
        %v1479 = vadd.f32 %v1429, %v1471
        %v1480 = vadd.f32 %v1430, %v1472
        %v1481 = vadd.f32 %v1431, %v1473
        %v1482 = vadd.f32 %v1432, %v1474
        %v1483 = vld [vmem:[%s4 + $0x10] sm:$0x1]
        %v1484 = vlaneseq
        %v1485 = vshrl.u32 %v1484, 7
        %v1486 = vsub.s32 0, %v1485
        %v1487 = vrot.slane %v1483, %v1486
        %v1488 = vmul.f32 %v1454, %v1487
        %v1489 = vmul.f32 %v1455, %v1487
        %v1490 = vmul.f32 %v1456, %v1487
        %v1491 = vmul.f32 %v1457, %v1487
        %v1492 = vmul.f32 %v1458, %v1487
        %v1493 = vmul.f32 %v1459, %v1487
        %v1494 = vmul.f32 %v1460, %v1487
        %v1495 = vmul.f32 %v1461, %v1487
        %v1496 = vadd.f32 %v1446, %v1488
        %v1497 = vadd.f32 %v1447, %v1489
        %v1498 = vadd.f32 %v1448, %v1490
        %v1499 = vadd.f32 %v1449, %v1491
        %v1500 = vadd.f32 %v1450, %v1492
        %v1501 = vadd.f32 %v1451, %v1493
        %v1502 = vadd.f32 %v1452, %v1494
        %v1503 = vadd.f32 %v1453, %v1495
        %v1504 = vld [vmem:[%s1353 + $0x3] sm:$0xff]
        %v1505 = vld [vmem:[%s1353 + $0x13] sm:$0xff]
        %v1506 = vld [vmem:[%s1353 + $0x23] sm:$0xff]
        %v1507 = vld [vmem:[%s1353 + $0x33] sm:$0xff]
        %v1508 = vld [vmem:[%s1353 + $0x43] sm:$0xff]
        %v1509 = vld [vmem:[%s1353 + $0x53] sm:$0xff]
        %v1510 = vld [vmem:[%s1353 + $0x63] sm:$0xff]
        %v1511 = vld [vmem:[%s1353 + $0x73] sm:$0xff]
        %v1512 = vld [vmem:[%s3 + $0x11] sm:$0x1]
        %v1513 = vlaneseq
        %v1514 = vshrl.u32 %v1513, 7
        %v1515 = vsub.s32 0, %v1514
        %v1516 = vrot.slane %v1512, %v1515
        %v1517 = vmul.f32 %v1504, %v1516
        %v1518 = vmul.f32 %v1505, %v1516
        %v1519 = vmul.f32 %v1506, %v1516
        %v1520 = vmul.f32 %v1507, %v1516
        %v1521 = vmul.f32 %v1508, %v1516
        %v1522 = vmul.f32 %v1509, %v1516
        %v1523 = vmul.f32 %v1510, %v1516
        %v1524 = vmul.f32 %v1511, %v1516
        %v1525 = vadd.f32 %v1475, %v1517
        %v1526 = vadd.f32 %v1476, %v1518
        %v1527 = vadd.f32 %v1477, %v1519
        %v1528 = vadd.f32 %v1478, %v1520
        %v1529 = vadd.f32 %v1479, %v1521
        %v1530 = vadd.f32 %v1480, %v1522
        %v1531 = vadd.f32 %v1481, %v1523
        %v1532 = vadd.f32 %v1482, %v1524
        %v1533 = vld [vmem:[%s4 + $0x11] sm:$0x1]
        %v1534 = vlaneseq
        %v1535 = vshrl.u32 %v1534, 7
        %v1536 = vsub.s32 0, %v1535
        %v1537 = vrot.slane %v1533, %v1536
        %v1538 = vmul.f32 %v1504, %v1537
        %v1539 = vmul.f32 %v1505, %v1537
        %v1540 = vmul.f32 %v1506, %v1537
        %v1541 = vmul.f32 %v1507, %v1537
        %v1542 = vmul.f32 %v1508, %v1537
        %v1543 = vmul.f32 %v1509, %v1537
        %v1544 = vmul.f32 %v1510, %v1537
        %v1545 = vmul.f32 %v1511, %v1537
        %v1546 = vadd.f32 %v1496, %v1538
        %v1547 = vadd.f32 %v1497, %v1539
        %v1548 = vadd.f32 %v1498, %v1540
        %v1549 = vadd.f32 %v1499, %v1541
        %v1550 = vadd.f32 %v1500, %v1542
        %v1551 = vadd.f32 %v1501, %v1543
        %v1552 = vadd.f32 %v1502, %v1544
        %v1553 = vadd.f32 %v1503, %v1545
        %v1554 = vld [vmem:[%s1353 + $0x4] sm:$0xff]
        %v1555 = vld [vmem:[%s1353 + $0x14] sm:$0xff]
        %v1556 = vld [vmem:[%s1353 + $0x24] sm:$0xff]
        %v1557 = vld [vmem:[%s1353 + $0x34] sm:$0xff]
        %v1558 = vld [vmem:[%s1353 + $0x44] sm:$0xff]
        %v1559 = vld [vmem:[%s1353 + $0x54] sm:$0xff]
        %v1560 = vld [vmem:[%s1353 + $0x64] sm:$0xff]
        %v1561 = vld [vmem:[%s1353 + $0x74] sm:$0xff]
        %v1562 = vld [vmem:[%s3 + $0x12] sm:$0x1]
        %v1563 = vlaneseq
        %v1564 = vshrl.u32 %v1563, 7
        %v1565 = vsub.s32 0, %v1564
        %v1566 = vrot.slane %v1562, %v1565
        %v1567 = vmul.f32 %v1554, %v1566
        %v1568 = vmul.f32 %v1555, %v1566
        %v1569 = vmul.f32 %v1556, %v1566
        %v1570 = vmul.f32 %v1557, %v1566
        %v1571 = vmul.f32 %v1558, %v1566
        %v1572 = vmul.f32 %v1559, %v1566
        %v1573 = vmul.f32 %v1560, %v1566
        %v1574 = vmul.f32 %v1561, %v1566
        %v1575 = vadd.f32 %v1525, %v1567
        %v1576 = vadd.f32 %v1526, %v1568
        %v1577 = vadd.f32 %v1527, %v1569
        %v1578 = vadd.f32 %v1528, %v1570
        %v1579 = vadd.f32 %v1529, %v1571
        %v1580 = vadd.f32 %v1530, %v1572
        %v1581 = vadd.f32 %v1531, %v1573
        %v1582 = vadd.f32 %v1532, %v1574
        %v1583 = vld [vmem:[%s4 + $0x12] sm:$0x1]
        %v1584 = vlaneseq
        %v1585 = vshrl.u32 %v1584, 7
        %v1586 = vsub.s32 0, %v1585
        %v1587 = vrot.slane %v1583, %v1586
        %v1588 = vmul.f32 %v1554, %v1587
        %v1589 = vmul.f32 %v1555, %v1587
        %v1590 = vmul.f32 %v1556, %v1587
        %v1591 = vmul.f32 %v1557, %v1587
        %v1592 = vmul.f32 %v1558, %v1587
        %v1593 = vmul.f32 %v1559, %v1587
        %v1594 = vmul.f32 %v1560, %v1587
        %v1595 = vmul.f32 %v1561, %v1587
        %v1596 = vadd.f32 %v1546, %v1588
        %v1597 = vadd.f32 %v1547, %v1589
        %v1598 = vadd.f32 %v1548, %v1590
        %v1599 = vadd.f32 %v1549, %v1591
        %v1600 = vadd.f32 %v1550, %v1592
        %v1601 = vadd.f32 %v1551, %v1593
        %v1602 = vadd.f32 %v1552, %v1594
        %v1603 = vadd.f32 %v1553, %v1595
        %v1604 = vld [vmem:[%s1353 + $0x5] sm:$0xff]
        %v1605 = vld [vmem:[%s1353 + $0x15] sm:$0xff]
        %v1606 = vld [vmem:[%s1353 + $0x25] sm:$0xff]
        %v1607 = vld [vmem:[%s1353 + $0x35] sm:$0xff]
        %v1608 = vld [vmem:[%s1353 + $0x45] sm:$0xff]
        %v1609 = vld [vmem:[%s1353 + $0x55] sm:$0xff]
        %v1610 = vld [vmem:[%s1353 + $0x65] sm:$0xff]
        %v1611 = vld [vmem:[%s1353 + $0x75] sm:$0xff]
        %v1612 = vld [vmem:[%s3 + $0x13] sm:$0x1]
        %v1613 = vlaneseq
        %v1614 = vshrl.u32 %v1613, 7
        %v1615 = vsub.s32 0, %v1614
        %v1616 = vrot.slane %v1612, %v1615
        %v1617 = vmul.f32 %v1604, %v1616
        %v1618 = vmul.f32 %v1605, %v1616
        %v1619 = vmul.f32 %v1606, %v1616
        %v1620 = vmul.f32 %v1607, %v1616
        %v1621 = vmul.f32 %v1608, %v1616
        %v1622 = vmul.f32 %v1609, %v1616
        %v1623 = vmul.f32 %v1610, %v1616
        %v1624 = vmul.f32 %v1611, %v1616
        %v1625 = vadd.f32 %v1575, %v1617
        %v1626 = vadd.f32 %v1576, %v1618
        %v1627 = vadd.f32 %v1577, %v1619
        %v1628 = vadd.f32 %v1578, %v1620
        %v1629 = vadd.f32 %v1579, %v1621
        %v1630 = vadd.f32 %v1580, %v1622
        %v1631 = vadd.f32 %v1581, %v1623
        %v1632 = vadd.f32 %v1582, %v1624
        %v1633 = vld [vmem:[%s4 + $0x13] sm:$0x1]
        %v1634 = vlaneseq
        %v1635 = vshrl.u32 %v1634, 7
        %v1636 = vsub.s32 0, %v1635
        %v1637 = vrot.slane %v1633, %v1636
        %v1638 = vmul.f32 %v1604, %v1637
        %v1639 = vmul.f32 %v1605, %v1637
        %v1640 = vmul.f32 %v1606, %v1637
        %v1641 = vmul.f32 %v1607, %v1637
        %v1642 = vmul.f32 %v1608, %v1637
        %v1643 = vmul.f32 %v1609, %v1637
        %v1644 = vmul.f32 %v1610, %v1637
        %v1645 = vmul.f32 %v1611, %v1637
        %v1646 = vadd.f32 %v1596, %v1638
        %v1647 = vadd.f32 %v1597, %v1639
        %v1648 = vadd.f32 %v1598, %v1640
        %v1649 = vadd.f32 %v1599, %v1641
        %v1650 = vadd.f32 %v1600, %v1642
        %v1651 = vadd.f32 %v1601, %v1643
        %v1652 = vadd.f32 %v1602, %v1644
        %v1653 = vadd.f32 %v1603, %v1645
        %v1654 = vld [vmem:[%s1353 + $0x6] sm:$0xff]
        %v1655 = vld [vmem:[%s1353 + $0x16] sm:$0xff]
        %v1656 = vld [vmem:[%s1353 + $0x26] sm:$0xff]
        %v1657 = vld [vmem:[%s1353 + $0x36] sm:$0xff]
        %v1658 = vld [vmem:[%s1353 + $0x46] sm:$0xff]
        %v1659 = vld [vmem:[%s1353 + $0x56] sm:$0xff]
        %v1660 = vld [vmem:[%s1353 + $0x66] sm:$0xff]
        %v1661 = vld [vmem:[%s1353 + $0x76] sm:$0xff]
        %v1662 = vld [vmem:[%s3 + $0x14] sm:$0x1]
        %v1663 = vlaneseq
        %v1664 = vshrl.u32 %v1663, 7
        %v1665 = vsub.s32 0, %v1664
        %v1666 = vrot.slane %v1662, %v1665
        %v1667 = vmul.f32 %v1654, %v1666
        %v1668 = vmul.f32 %v1655, %v1666
        %v1669 = vmul.f32 %v1656, %v1666
        %v1670 = vmul.f32 %v1657, %v1666
        %v1671 = vmul.f32 %v1658, %v1666
        %v1672 = vmul.f32 %v1659, %v1666
        %v1673 = vmul.f32 %v1660, %v1666
        %v1674 = vmul.f32 %v1661, %v1666
        %v1675 = vadd.f32 %v1625, %v1667
        %v1676 = vadd.f32 %v1626, %v1668
        %v1677 = vadd.f32 %v1627, %v1669
        %v1678 = vadd.f32 %v1628, %v1670
        %v1679 = vadd.f32 %v1629, %v1671
        %v1680 = vadd.f32 %v1630, %v1672
        %v1681 = vadd.f32 %v1631, %v1673
        %v1682 = vadd.f32 %v1632, %v1674
        %v1683 = vld [vmem:[%s4 + $0x14] sm:$0x1]
        %v1684 = vlaneseq
        %v1685 = vshrl.u32 %v1684, 7
        %v1686 = vsub.s32 0, %v1685
        %v1687 = vrot.slane %v1683, %v1686
        %v1688 = vmul.f32 %v1654, %v1687
        %v1689 = vmul.f32 %v1655, %v1687
        %v1690 = vmul.f32 %v1656, %v1687
        %v1691 = vmul.f32 %v1657, %v1687
        %v1692 = vmul.f32 %v1658, %v1687
        %v1693 = vmul.f32 %v1659, %v1687
        %v1694 = vmul.f32 %v1660, %v1687
        %v1695 = vmul.f32 %v1661, %v1687
        %v1696 = vadd.f32 %v1646, %v1688
        %v1697 = vadd.f32 %v1647, %v1689
        %v1698 = vadd.f32 %v1648, %v1690
        %v1699 = vadd.f32 %v1649, %v1691
        %v1700 = vadd.f32 %v1650, %v1692
        %v1701 = vadd.f32 %v1651, %v1693
        %v1702 = vadd.f32 %v1652, %v1694
        %v1703 = vadd.f32 %v1653, %v1695
        %v1704 = vld [vmem:[%s643] sm:$0xff]
        %v1705 = vld [vmem:[%s643 + $0x10] sm:$0xff]
        %v1706 = vld [vmem:[%s643 + $0x20] sm:$0xff]
        %v1707 = vld [vmem:[%s643 + $0x30] sm:$0xff]
        %v1708 = vld [vmem:[%s643 + $0x40] sm:$0xff]
        %v1709 = vld [vmem:[%s643 + $0x50] sm:$0xff]
        %v1710 = vld [vmem:[%s643 + $0x60] sm:$0xff]
        %v1711 = vld [vmem:[%s643 + $0x70] sm:$0xff]
        %v1712 = vld [vmem:[%s3 + $0x15] sm:$0x1]
        %v1713 = vlaneseq
        %v1714 = vshrl.u32 %v1713, 7
        %v1715 = vsub.s32 0, %v1714
        %v1716 = vrot.slane %v1712, %v1715
        %v1717 = vmul.f32 %v1704, %v1716
        %v1718 = vmul.f32 %v1705, %v1716
        %v1719 = vmul.f32 %v1706, %v1716
        %v1720 = vmul.f32 %v1707, %v1716
        %v1721 = vmul.f32 %v1708, %v1716
        %v1722 = vmul.f32 %v1709, %v1716
        %v1723 = vmul.f32 %v1710, %v1716
        %v1724 = vmul.f32 %v1711, %v1716
        %v1725 = vadd.f32 %v1675, %v1717
        %v1726 = vadd.f32 %v1676, %v1718
        %v1727 = vadd.f32 %v1677, %v1719
        %v1728 = vadd.f32 %v1678, %v1720
        %v1729 = vadd.f32 %v1679, %v1721
        %v1730 = vadd.f32 %v1680, %v1722
        %v1731 = vadd.f32 %v1681, %v1723
        %v1732 = vadd.f32 %v1682, %v1724
        %v1733 = vld [vmem:[%s4 + $0x15] sm:$0x1]
        %v1734 = vlaneseq
        %v1735 = vshrl.u32 %v1734, 7
        %v1736 = vsub.s32 0, %v1735
        %v1737 = vrot.slane %v1733, %v1736
        %v1738 = vmul.f32 %v1704, %v1737
        %v1739 = vmul.f32 %v1705, %v1737
        %v1740 = vmul.f32 %v1706, %v1737
        %v1741 = vmul.f32 %v1707, %v1737
        %v1742 = vmul.f32 %v1708, %v1737
        %v1743 = vmul.f32 %v1709, %v1737
        %v1744 = vmul.f32 %v1710, %v1737
        %v1745 = vmul.f32 %v1711, %v1737
        %v1746 = vadd.f32 %v1696, %v1738
        %v1747 = vadd.f32 %v1697, %v1739
        %v1748 = vadd.f32 %v1698, %v1740
        %v1749 = vadd.f32 %v1699, %v1741
        %v1750 = vadd.f32 %v1700, %v1742
        %v1751 = vadd.f32 %v1701, %v1743
        %v1752 = vadd.f32 %v1702, %v1744
        %v1753 = vadd.f32 %v1703, %v1745
        %v1754 = vld [vmem:[%s643 + $0x1] sm:$0xff]
        %v1755 = vld [vmem:[%s643 + $0x11] sm:$0xff]
        %v1756 = vld [vmem:[%s643 + $0x21] sm:$0xff]
        %v1757 = vld [vmem:[%s643 + $0x31] sm:$0xff]
        %v1758 = vld [vmem:[%s643 + $0x41] sm:$0xff]
        %v1759 = vld [vmem:[%s643 + $0x51] sm:$0xff]
        %v1760 = vld [vmem:[%s643 + $0x61] sm:$0xff]
        %v1761 = vld [vmem:[%s643 + $0x71] sm:$0xff]
        %v1762 = vld [vmem:[%s3 + $0x16] sm:$0x1]
        %v1763 = vlaneseq
        %v1764 = vshrl.u32 %v1763, 7
        %v1765 = vsub.s32 0, %v1764
        %v1766 = vrot.slane %v1762, %v1765
        %v1767 = vmul.f32 %v1754, %v1766
        %v1768 = vmul.f32 %v1755, %v1766
        %v1769 = vmul.f32 %v1756, %v1766
        %v1770 = vmul.f32 %v1757, %v1766
        %v1771 = vmul.f32 %v1758, %v1766
        %v1772 = vmul.f32 %v1759, %v1766
        %v1773 = vmul.f32 %v1760, %v1766
        %v1774 = vmul.f32 %v1761, %v1766
        %v1775 = vadd.f32 %v1725, %v1767
        %v1776 = vadd.f32 %v1726, %v1768
        %v1777 = vadd.f32 %v1727, %v1769
        %v1778 = vadd.f32 %v1728, %v1770
        %v1779 = vadd.f32 %v1729, %v1771
        %v1780 = vadd.f32 %v1730, %v1772
        %v1781 = vadd.f32 %v1731, %v1773
        %v1782 = vadd.f32 %v1732, %v1774
        %v1783 = vld [vmem:[%s4 + $0x16] sm:$0x1]
        %v1784 = vlaneseq
        %v1785 = vshrl.u32 %v1784, 7
        %v1786 = vsub.s32 0, %v1785
        %v1787 = vrot.slane %v1783, %v1786
        %v1788 = vmul.f32 %v1754, %v1787
        %v1789 = vmul.f32 %v1755, %v1787
        %v1790 = vmul.f32 %v1756, %v1787
        %v1791 = vmul.f32 %v1757, %v1787
        %v1792 = vmul.f32 %v1758, %v1787
        %v1793 = vmul.f32 %v1759, %v1787
        %v1794 = vmul.f32 %v1760, %v1787
        %v1795 = vmul.f32 %v1761, %v1787
        %v1796 = vadd.f32 %v1746, %v1788
        %v1797 = vadd.f32 %v1747, %v1789
        %v1798 = vadd.f32 %v1748, %v1790
        %v1799 = vadd.f32 %v1749, %v1791
        %v1800 = vadd.f32 %v1750, %v1792
        %v1801 = vadd.f32 %v1751, %v1793
        %v1802 = vadd.f32 %v1752, %v1794
        %v1803 = vadd.f32 %v1753, %v1795
        %v1804 = vld [vmem:[%s643 + $0x2] sm:$0xff]
        %v1805 = vld [vmem:[%s643 + $0x12] sm:$0xff]
        %v1806 = vld [vmem:[%s643 + $0x22] sm:$0xff]
        %v1807 = vld [vmem:[%s643 + $0x32] sm:$0xff]
        %v1808 = vld [vmem:[%s643 + $0x42] sm:$0xff]
        %v1809 = vld [vmem:[%s643 + $0x52] sm:$0xff]
        %v1810 = vld [vmem:[%s643 + $0x62] sm:$0xff]
        %v1811 = vld [vmem:[%s643 + $0x72] sm:$0xff]
        %v1812 = vld [vmem:[%s3 + $0x17] sm:$0x1]
        %v1813 = vlaneseq
        %v1814 = vshrl.u32 %v1813, 7
        %v1815 = vsub.s32 0, %v1814
        %v1816 = vrot.slane %v1812, %v1815
        %v1817 = vmul.f32 %v1804, %v1816
        %v1818 = vmul.f32 %v1805, %v1816
        %v1819 = vmul.f32 %v1806, %v1816
        %v1820 = vmul.f32 %v1807, %v1816
        %v1821 = vmul.f32 %v1808, %v1816
        %v1822 = vmul.f32 %v1809, %v1816
        %v1823 = vmul.f32 %v1810, %v1816
        %v1824 = vmul.f32 %v1811, %v1816
        %v1825 = vadd.f32 %v1775, %v1817
        %v1826 = vadd.f32 %v1776, %v1818
        %v1827 = vadd.f32 %v1777, %v1819
        %v1828 = vadd.f32 %v1778, %v1820
        %v1829 = vadd.f32 %v1779, %v1821
        %v1830 = vadd.f32 %v1780, %v1822
        %v1831 = vadd.f32 %v1781, %v1823
        %v1832 = vadd.f32 %v1782, %v1824
        %v1833 = vld [vmem:[%s4 + $0x17] sm:$0x1]
        %v1834 = vlaneseq
        %v1835 = vshrl.u32 %v1834, 7
        %v1836 = vsub.s32 0, %v1835
        %v1837 = vrot.slane %v1833, %v1836
        %v1838 = vmul.f32 %v1804, %v1837
        %v1839 = vmul.f32 %v1805, %v1837
        %v1840 = vmul.f32 %v1806, %v1837
        %v1841 = vmul.f32 %v1807, %v1837
        %v1842 = vmul.f32 %v1808, %v1837
        %v1843 = vmul.f32 %v1809, %v1837
        %v1844 = vmul.f32 %v1810, %v1837
        %v1845 = vmul.f32 %v1811, %v1837
        %v1846 = vadd.f32 %v1796, %v1838
        %v1847 = vadd.f32 %v1797, %v1839
        %v1848 = vadd.f32 %v1798, %v1840
        %v1849 = vadd.f32 %v1799, %v1841
        %v1850 = vadd.f32 %v1800, %v1842
        %v1851 = vadd.f32 %v1801, %v1843
        %v1852 = vadd.f32 %v1802, %v1844
        %v1853 = vadd.f32 %v1803, %v1845
        %v1854 = vld [vmem:[%s643 + $0x3] sm:$0xff]
        %v1855 = vld [vmem:[%s643 + $0x13] sm:$0xff]
        %v1856 = vld [vmem:[%s643 + $0x23] sm:$0xff]
        %v1857 = vld [vmem:[%s643 + $0x33] sm:$0xff]
        %v1858 = vld [vmem:[%s643 + $0x43] sm:$0xff]
        %v1859 = vld [vmem:[%s643 + $0x53] sm:$0xff]
        %v1860 = vld [vmem:[%s643 + $0x63] sm:$0xff]
        %v1861 = vld [vmem:[%s643 + $0x73] sm:$0xff]
        %v1862 = vld [vmem:[%s3 + $0x18] sm:$0x1]
        %v1863 = vlaneseq
        %v1864 = vshrl.u32 %v1863, 7
        %v1865 = vsub.s32 0, %v1864
        %v1866 = vrot.slane %v1862, %v1865
        %v1867 = vmul.f32 %v1854, %v1866
        %v1868 = vmul.f32 %v1855, %v1866
        %v1869 = vmul.f32 %v1856, %v1866
        %v1870 = vmul.f32 %v1857, %v1866
        %v1871 = vmul.f32 %v1858, %v1866
        %v1872 = vmul.f32 %v1859, %v1866
        %v1873 = vmul.f32 %v1860, %v1866
        %v1874 = vmul.f32 %v1861, %v1866
        %v1875 = vadd.f32 %v1825, %v1867
        %v1876 = vadd.f32 %v1826, %v1868
        %v1877 = vadd.f32 %v1827, %v1869
        %v1878 = vadd.f32 %v1828, %v1870
        %v1879 = vadd.f32 %v1829, %v1871
        %v1880 = vadd.f32 %v1830, %v1872
        %v1881 = vadd.f32 %v1831, %v1873
        %v1882 = vadd.f32 %v1832, %v1874
        %v1883 = vld [vmem:[%s4 + $0x18] sm:$0x1]
        %v1884 = vlaneseq
        %v1885 = vshrl.u32 %v1884, 7
        %v1886 = vsub.s32 0, %v1885
        %v1887 = vrot.slane %v1883, %v1886
        %v1888 = vmul.f32 %v1854, %v1887
        %v1889 = vmul.f32 %v1855, %v1887
        %v1890 = vmul.f32 %v1856, %v1887
        %v1891 = vmul.f32 %v1857, %v1887
        %v1892 = vmul.f32 %v1858, %v1887
        %v1893 = vmul.f32 %v1859, %v1887
        %v1894 = vmul.f32 %v1860, %v1887
        %v1895 = vmul.f32 %v1861, %v1887
        %v1896 = vadd.f32 %v1846, %v1888
        %v1897 = vadd.f32 %v1847, %v1889
        %v1898 = vadd.f32 %v1848, %v1890
        %v1899 = vadd.f32 %v1849, %v1891
        %v1900 = vadd.f32 %v1850, %v1892
        %v1901 = vadd.f32 %v1851, %v1893
        %v1902 = vadd.f32 %v1852, %v1894
        %v1903 = vadd.f32 %v1853, %v1895
        %v1904 = vld [vmem:[%s643 + $0x4] sm:$0xff]
        %v1905 = vld [vmem:[%s643 + $0x14] sm:$0xff]
        %v1906 = vld [vmem:[%s643 + $0x24] sm:$0xff]
        %v1907 = vld [vmem:[%s643 + $0x34] sm:$0xff]
        %v1908 = vld [vmem:[%s643 + $0x44] sm:$0xff]
        %v1909 = vld [vmem:[%s643 + $0x54] sm:$0xff]
        %v1910 = vld [vmem:[%s643 + $0x64] sm:$0xff]
        %v1911 = vld [vmem:[%s643 + $0x74] sm:$0xff]
        %v1912 = vld [vmem:[%s3 + $0x19] sm:$0x1]
        %v1913 = vlaneseq
        %v1914 = vshrl.u32 %v1913, 7
        %v1915 = vsub.s32 0, %v1914
        %v1916 = vrot.slane %v1912, %v1915
        %v1917 = vmul.f32 %v1904, %v1916
        %v1918 = vmul.f32 %v1905, %v1916
        %v1919 = vmul.f32 %v1906, %v1916
        %v1920 = vmul.f32 %v1907, %v1916
        %v1921 = vmul.f32 %v1908, %v1916
        %v1922 = vmul.f32 %v1909, %v1916
        %v1923 = vmul.f32 %v1910, %v1916
        %v1924 = vmul.f32 %v1911, %v1916
        %v1925 = vadd.f32 %v1875, %v1917
        %v1926 = vadd.f32 %v1876, %v1918
        %v1927 = vadd.f32 %v1877, %v1919
        %v1928 = vadd.f32 %v1878, %v1920
        %v1929 = vadd.f32 %v1879, %v1921
        %v1930 = vadd.f32 %v1880, %v1922
        %v1931 = vadd.f32 %v1881, %v1923
        %v1932 = vadd.f32 %v1882, %v1924
        %v1933 = vld [vmem:[%s4 + $0x19] sm:$0x1]
        %v1934 = vlaneseq
        %v1935 = vshrl.u32 %v1934, 7
        %v1936 = vsub.s32 0, %v1935
        %v1937 = vrot.slane %v1933, %v1936
        %v1938 = vmul.f32 %v1904, %v1937
        %v1939 = vmul.f32 %v1905, %v1937
        %v1940 = vmul.f32 %v1906, %v1937
        %v1941 = vmul.f32 %v1907, %v1937
        %v1942 = vmul.f32 %v1908, %v1937
        %v1943 = vmul.f32 %v1909, %v1937
        %v1944 = vmul.f32 %v1910, %v1937
        %v1945 = vmul.f32 %v1911, %v1937
        %v1946 = vadd.f32 %v1896, %v1938
        %v1947 = vadd.f32 %v1897, %v1939
        %v1948 = vadd.f32 %v1898, %v1940
        %v1949 = vadd.f32 %v1899, %v1941
        %v1950 = vadd.f32 %v1900, %v1942
        %v1951 = vadd.f32 %v1901, %v1943
        %v1952 = vadd.f32 %v1902, %v1944
        %v1953 = vadd.f32 %v1903, %v1945
        %v1954 = vld [vmem:[%s643 + $0x5] sm:$0xff]
        %v1955 = vld [vmem:[%s643 + $0x15] sm:$0xff]
        %v1956 = vld [vmem:[%s643 + $0x25] sm:$0xff]
        %v1957 = vld [vmem:[%s643 + $0x35] sm:$0xff]
        %v1958 = vld [vmem:[%s643 + $0x45] sm:$0xff]
        %v1959 = vld [vmem:[%s643 + $0x55] sm:$0xff]
        %v1960 = vld [vmem:[%s643 + $0x65] sm:$0xff]
        %v1961 = vld [vmem:[%s643 + $0x75] sm:$0xff]
        %v1962 = vld [vmem:[%s3 + $0x1a] sm:$0x1]
        %v1963 = vlaneseq
        %v1964 = vshrl.u32 %v1963, 7
        %v1965 = vsub.s32 0, %v1964
        %v1966 = vrot.slane %v1962, %v1965
        %v1967 = vmul.f32 %v1954, %v1966
        %v1968 = vmul.f32 %v1955, %v1966
        %v1969 = vmul.f32 %v1956, %v1966
        %v1970 = vmul.f32 %v1957, %v1966
        %v1971 = vmul.f32 %v1958, %v1966
        %v1972 = vmul.f32 %v1959, %v1966
        %v1973 = vmul.f32 %v1960, %v1966
        %v1974 = vmul.f32 %v1961, %v1966
        %v1975 = vadd.f32 %v1925, %v1967
        %v1976 = vadd.f32 %v1926, %v1968
        %v1977 = vadd.f32 %v1927, %v1969
        %v1978 = vadd.f32 %v1928, %v1970
        %v1979 = vadd.f32 %v1929, %v1971
        %v1980 = vadd.f32 %v1930, %v1972
        %v1981 = vadd.f32 %v1931, %v1973
        %v1982 = vadd.f32 %v1932, %v1974
        %v1983 = vld [vmem:[%s4 + $0x1a] sm:$0x1]
        %v1984 = vlaneseq
        %v1985 = vshrl.u32 %v1984, 7
        %v1986 = vsub.s32 0, %v1985
        %v1987 = vrot.slane %v1983, %v1986
        %v1988 = vmul.f32 %v1954, %v1987
        %v1989 = vmul.f32 %v1955, %v1987
        %v1990 = vmul.f32 %v1956, %v1987
        %v1991 = vmul.f32 %v1957, %v1987
        %v1992 = vmul.f32 %v1958, %v1987
        %v1993 = vmul.f32 %v1959, %v1987
        %v1994 = vmul.f32 %v1960, %v1987
        %v1995 = vmul.f32 %v1961, %v1987
        %v1996 = vadd.f32 %v1946, %v1988
        %v1997 = vadd.f32 %v1947, %v1989
        %v1998 = vadd.f32 %v1948, %v1990
        %v1999 = vadd.f32 %v1949, %v1991
        %v2000 = vadd.f32 %v1950, %v1992
        %v2001 = vadd.f32 %v1951, %v1993
        %v2002 = vadd.f32 %v1952, %v1994
        %v2003 = vadd.f32 %v1953, %v1995
        %v2004 = vld [vmem:[%s643 + $0x6] sm:$0xff]
        %v2005 = vld [vmem:[%s643 + $0x16] sm:$0xff]
        %v2006 = vld [vmem:[%s643 + $0x26] sm:$0xff]
        %v2007 = vld [vmem:[%s643 + $0x36] sm:$0xff]
        %v2008 = vld [vmem:[%s643 + $0x46] sm:$0xff]
        %v2009 = vld [vmem:[%s643 + $0x56] sm:$0xff]
        %v2010 = vld [vmem:[%s643 + $0x66] sm:$0xff]
        %v2011 = vld [vmem:[%s643 + $0x76] sm:$0xff]
        %v2012 = vld [vmem:[%s3 + $0x1b] sm:$0x1]
        %v2013 = vlaneseq
        %v2014 = vshrl.u32 %v2013, 7
        %v2015 = vsub.s32 0, %v2014
        %v2016 = vrot.slane %v2012, %v2015
        %v2017 = vmul.f32 %v2004, %v2016
        %v2018 = vmul.f32 %v2005, %v2016
        %v2019 = vmul.f32 %v2006, %v2016
        %v2020 = vmul.f32 %v2007, %v2016
        %v2021 = vmul.f32 %v2008, %v2016
        %v2022 = vmul.f32 %v2009, %v2016
        %v2023 = vmul.f32 %v2010, %v2016
        %v2024 = vmul.f32 %v2011, %v2016
        %v2025 = vadd.f32 %v1975, %v2017
        %v2026 = vadd.f32 %v1976, %v2018
        %v2027 = vadd.f32 %v1977, %v2019
        %v2028 = vadd.f32 %v1978, %v2020
        %v2029 = vadd.f32 %v1979, %v2021
        %v2030 = vadd.f32 %v1980, %v2022
        %v2031 = vadd.f32 %v1981, %v2023
        %v2032 = vadd.f32 %v1982, %v2024
        %v2033 = vld [vmem:[%s4 + $0x1b] sm:$0x1]
        %v2034 = vlaneseq
        %v2035 = vshrl.u32 %v2034, 7
        %v2036 = vsub.s32 0, %v2035
        %v2037 = vrot.slane %v2033, %v2036
        %v2038 = vmul.f32 %v2004, %v2037
        %v2039 = vmul.f32 %v2005, %v2037
        %v2040 = vmul.f32 %v2006, %v2037
        %v2041 = vmul.f32 %v2007, %v2037
        %v2042 = vmul.f32 %v2008, %v2037
        %v2043 = vmul.f32 %v2009, %v2037
        %v2044 = vmul.f32 %v2010, %v2037
        %v2045 = vmul.f32 %v2011, %v2037
        %v2046 = vadd.f32 %v1996, %v2038
        %v2047 = vadd.f32 %v1997, %v2039
        %v2048 = vadd.f32 %v1998, %v2040
        %v2049 = vadd.f32 %v1999, %v2041
        %v2050 = vadd.f32 %v2000, %v2042
        %v2051 = vadd.f32 %v2001, %v2043
        %v2052 = vadd.f32 %v2002, %v2044
        %v2053 = vadd.f32 %v2003, %v2045
        %s2054 = scalar_lea.vmem [#allocation2], 64
        %v2055 = vld [vmem:[%s2054] sm:$0xff]
        %v2056 = vld [vmem:[%s2054 + $0x10] sm:$0xff]
        %v2057 = vld [vmem:[%s2054 + $0x20] sm:$0xff]
        %v2058 = vld [vmem:[%s2054 + $0x30] sm:$0xff]
        %v2059 = vld [vmem:[%s2054 + $0x40] sm:$0xff]
        %v2060 = vld [vmem:[%s2054 + $0x50] sm:$0xff]
        %v2061 = vld [vmem:[%s2054 + $0x60] sm:$0xff]
        %v2062 = vld [vmem:[%s2054 + $0x70] sm:$0xff]
        %v2063 = vld [vmem:[%s3 + $0x1c] sm:$0x1]
        %v2064 = vlaneseq
        %v2065 = vshrl.u32 %v2064, 7
        %v2066 = vsub.s32 0, %v2065
        %v2067 = vrot.slane %v2063, %v2066
        %v2068 = vmul.f32 %v2055, %v2067
        %v2069 = vmul.f32 %v2056, %v2067
        %v2070 = vmul.f32 %v2057, %v2067
        %v2071 = vmul.f32 %v2058, %v2067
        %v2072 = vmul.f32 %v2059, %v2067
        %v2073 = vmul.f32 %v2060, %v2067
        %v2074 = vmul.f32 %v2061, %v2067
        %v2075 = vmul.f32 %v2062, %v2067
        %v2076 = vadd.f32 %v2025, %v2068
        %v2077 = vadd.f32 %v2026, %v2069
        %v2078 = vadd.f32 %v2027, %v2070
        %v2079 = vadd.f32 %v2028, %v2071
        %v2080 = vadd.f32 %v2029, %v2072
        %v2081 = vadd.f32 %v2030, %v2073
        %v2082 = vadd.f32 %v2031, %v2074
        %v2083 = vadd.f32 %v2032, %v2075
        %v2084 = vld [vmem:[%s4 + $0x1c] sm:$0x1]
        %v2085 = vlaneseq
        %v2086 = vshrl.u32 %v2085, 7
        %v2087 = vsub.s32 0, %v2086
        %v2088 = vrot.slane %v2084, %v2087
        %v2089 = vmul.f32 %v2055, %v2088
        %v2090 = vmul.f32 %v2056, %v2088
        %v2091 = vmul.f32 %v2057, %v2088
        %v2092 = vmul.f32 %v2058, %v2088
        %v2093 = vmul.f32 %v2059, %v2088
        %v2094 = vmul.f32 %v2060, %v2088
        %v2095 = vmul.f32 %v2061, %v2088
        %v2096 = vmul.f32 %v2062, %v2088
        %v2097 = vadd.f32 %v2046, %v2089
        %v2098 = vadd.f32 %v2047, %v2090
        %v2099 = vadd.f32 %v2048, %v2091
        %v2100 = vadd.f32 %v2049, %v2092
        %v2101 = vadd.f32 %v2050, %v2093
        %v2102 = vadd.f32 %v2051, %v2094
        %v2103 = vadd.f32 %v2052, %v2095
        %v2104 = vadd.f32 %v2053, %v2096
        %v2105 = vld [vmem:[%s2054 + $0x1] sm:$0xff]
        %v2106 = vld [vmem:[%s2054 + $0x11] sm:$0xff]
        %v2107 = vld [vmem:[%s2054 + $0x21] sm:$0xff]
        %v2108 = vld [vmem:[%s2054 + $0x31] sm:$0xff]
        %v2109 = vld [vmem:[%s2054 + $0x41] sm:$0xff]
        %v2110 = vld [vmem:[%s2054 + $0x51] sm:$0xff]
        %v2111 = vld [vmem:[%s2054 + $0x61] sm:$0xff]
        %v2112 = vld [vmem:[%s2054 + $0x71] sm:$0xff]
        %v2113 = vld [vmem:[%s3 + $0x1d] sm:$0x1]
        %v2114 = vlaneseq
        %v2115 = vshrl.u32 %v2114, 7
        %v2116 = vsub.s32 0, %v2115
        %v2117 = vrot.slane %v2113, %v2116
        %v2118 = vmul.f32 %v2105, %v2117
        %v2119 = vmul.f32 %v2106, %v2117
        %v2120 = vmul.f32 %v2107, %v2117
        %v2121 = vmul.f32 %v2108, %v2117
        %v2122 = vmul.f32 %v2109, %v2117
        %v2123 = vmul.f32 %v2110, %v2117
        %v2124 = vmul.f32 %v2111, %v2117
        %v2125 = vmul.f32 %v2112, %v2117
        %v2126 = vadd.f32 %v2076, %v2118
        %v2127 = vadd.f32 %v2077, %v2119
        %v2128 = vadd.f32 %v2078, %v2120
        %v2129 = vadd.f32 %v2079, %v2121
        %v2130 = vadd.f32 %v2080, %v2122
        %v2131 = vadd.f32 %v2081, %v2123
        %v2132 = vadd.f32 %v2082, %v2124
        %v2133 = vadd.f32 %v2083, %v2125
        %v2134 = vld [vmem:[%s4 + $0x1d] sm:$0x1]
        %v2135 = vlaneseq
        %v2136 = vshrl.u32 %v2135, 7
        %v2137 = vsub.s32 0, %v2136
        %v2138 = vrot.slane %v2134, %v2137
        %v2139 = vmul.f32 %v2105, %v2138
        %v2140 = vmul.f32 %v2106, %v2138
        %v2141 = vmul.f32 %v2107, %v2138
        %v2142 = vmul.f32 %v2108, %v2138
        %v2143 = vmul.f32 %v2109, %v2138
        %v2144 = vmul.f32 %v2110, %v2138
        %v2145 = vmul.f32 %v2111, %v2138
        %v2146 = vmul.f32 %v2112, %v2138
        %v2147 = vadd.f32 %v2097, %v2139
        %v2148 = vadd.f32 %v2098, %v2140
        %v2149 = vadd.f32 %v2099, %v2141
        %v2150 = vadd.f32 %v2100, %v2142
        %v2151 = vadd.f32 %v2101, %v2143
        %v2152 = vadd.f32 %v2102, %v2144
        %v2153 = vadd.f32 %v2103, %v2145
        %v2154 = vadd.f32 %v2104, %v2146
        %v2155 = vld [vmem:[%s2054 + $0x2] sm:$0xff]
        %v2156 = vld [vmem:[%s2054 + $0x12] sm:$0xff]
        %v2157 = vld [vmem:[%s2054 + $0x22] sm:$0xff]
        %v2158 = vld [vmem:[%s2054 + $0x32] sm:$0xff]
        %v2159 = vld [vmem:[%s2054 + $0x42] sm:$0xff]
        %v2160 = vld [vmem:[%s2054 + $0x52] sm:$0xff]
        %v2161 = vld [vmem:[%s2054 + $0x62] sm:$0xff]
        %v2162 = vld [vmem:[%s2054 + $0x72] sm:$0xff]
        %v2163 = vld [vmem:[%s3 + $0x1e] sm:$0x1]
        %v2164 = vlaneseq
        %v2165 = vshrl.u32 %v2164, 7
        %v2166 = vsub.s32 0, %v2165
        %v2167 = vrot.slane %v2163, %v2166
        %v2168 = vmul.f32 %v2155, %v2167
        %v2169 = vmul.f32 %v2156, %v2167
        %v2170 = vmul.f32 %v2157, %v2167
        %v2171 = vmul.f32 %v2158, %v2167
        %v2172 = vmul.f32 %v2159, %v2167
        %v2173 = vmul.f32 %v2160, %v2167
        %v2174 = vmul.f32 %v2161, %v2167
        %v2175 = vmul.f32 %v2162, %v2167
        %v2176 = vadd.f32 %v2126, %v2168
        %v2177 = vadd.f32 %v2127, %v2169
        %v2178 = vadd.f32 %v2128, %v2170
        %v2179 = vadd.f32 %v2129, %v2171
        %v2180 = vadd.f32 %v2130, %v2172
        %v2181 = vadd.f32 %v2131, %v2173
        %v2182 = vadd.f32 %v2132, %v2174
        %v2183 = vadd.f32 %v2133, %v2175
        %v2184 = vld [vmem:[%s4 + $0x1e] sm:$0x1]
        %v2185 = vlaneseq
        %v2186 = vshrl.u32 %v2185, 7
        %v2187 = vsub.s32 0, %v2186
        %v2188 = vrot.slane %v2184, %v2187
        %v2189 = vmul.f32 %v2155, %v2188
        %v2190 = vmul.f32 %v2156, %v2188
        %v2191 = vmul.f32 %v2157, %v2188
        %v2192 = vmul.f32 %v2158, %v2188
        %v2193 = vmul.f32 %v2159, %v2188
        %v2194 = vmul.f32 %v2160, %v2188
        %v2195 = vmul.f32 %v2161, %v2188
        %v2196 = vmul.f32 %v2162, %v2188
        %v2197 = vadd.f32 %v2147, %v2189
        %v2198 = vadd.f32 %v2148, %v2190
        %v2199 = vadd.f32 %v2149, %v2191
        %v2200 = vadd.f32 %v2150, %v2192
        %v2201 = vadd.f32 %v2151, %v2193
        %v2202 = vadd.f32 %v2152, %v2194
        %v2203 = vadd.f32 %v2153, %v2195
        %v2204 = vadd.f32 %v2154, %v2196
        %v2205 = vld [vmem:[%s2054 + $0x3] sm:$0xff]
        %v2206 = vld [vmem:[%s2054 + $0x13] sm:$0xff]
        %v2207 = vld [vmem:[%s2054 + $0x23] sm:$0xff]
        %v2208 = vld [vmem:[%s2054 + $0x33] sm:$0xff]
        %v2209 = vld [vmem:[%s2054 + $0x43] sm:$0xff]
        %v2210 = vld [vmem:[%s2054 + $0x53] sm:$0xff]
        %v2211 = vld [vmem:[%s2054 + $0x63] sm:$0xff]
        %v2212 = vld [vmem:[%s2054 + $0x73] sm:$0xff]
        %v2213 = vld [vmem:[%s3 + $0x1f] sm:$0x1]
        %v2214 = vlaneseq
        %v2215 = vshrl.u32 %v2214, 7
        %v2216 = vsub.s32 0, %v2215
        %v2217 = vrot.slane %v2213, %v2216
        %v2218 = vmul.f32 %v2205, %v2217
        %v2219 = vmul.f32 %v2206, %v2217
        %v2220 = vmul.f32 %v2207, %v2217
        %v2221 = vmul.f32 %v2208, %v2217
        %v2222 = vmul.f32 %v2209, %v2217
        %v2223 = vmul.f32 %v2210, %v2217
        %v2224 = vmul.f32 %v2211, %v2217
        %v2225 = vmul.f32 %v2212, %v2217
        %v2226 = vadd.f32 %v2176, %v2218
        %v2227 = vadd.f32 %v2177, %v2219
        %v2228 = vadd.f32 %v2178, %v2220
        %v2229 = vadd.f32 %v2179, %v2221
        %v2230 = vadd.f32 %v2180, %v2222
        %v2231 = vadd.f32 %v2181, %v2223
        %v2232 = vadd.f32 %v2182, %v2224
        %v2233 = vadd.f32 %v2183, %v2225
        %v2234 = vld [vmem:[%s4 + $0x1f] sm:$0x1]
        %v2235 = vlaneseq
        %v2236 = vshrl.u32 %v2235, 7
        %v2237 = vsub.s32 0, %v2236
        %v2238 = vrot.slane %v2234, %v2237
        %v2239 = vmul.f32 %v2205, %v2238
        %v2240 = vmul.f32 %v2206, %v2238
        %v2241 = vmul.f32 %v2207, %v2238
        %v2242 = vmul.f32 %v2208, %v2238
        %v2243 = vmul.f32 %v2209, %v2238
        %v2244 = vmul.f32 %v2210, %v2238
        %v2245 = vmul.f32 %v2211, %v2238
        %v2246 = vmul.f32 %v2212, %v2238
        %v2247 = vadd.f32 %v2197, %v2239
        %v2248 = vadd.f32 %v2198, %v2240
        %v2249 = vadd.f32 %v2199, %v2241
        %v2250 = vadd.f32 %v2200, %v2242
        %v2251 = vadd.f32 %v2201, %v2243
        %v2252 = vadd.f32 %v2202, %v2244
        %v2253 = vadd.f32 %v2203, %v2245
        %v2254 = vadd.f32 %v2204, %v2246
        %v2255 = vld [vmem:[%s2054 + $0x4] sm:$0xff]
        %v2256 = vld [vmem:[%s2054 + $0x14] sm:$0xff]
        %v2257 = vld [vmem:[%s2054 + $0x24] sm:$0xff]
        %v2258 = vld [vmem:[%s2054 + $0x34] sm:$0xff]
        %v2259 = vld [vmem:[%s2054 + $0x44] sm:$0xff]
        %v2260 = vld [vmem:[%s2054 + $0x54] sm:$0xff]
        %v2261 = vld [vmem:[%s2054 + $0x64] sm:$0xff]
        %v2262 = vld [vmem:[%s2054 + $0x74] sm:$0xff]
        %v2263 = vld [vmem:[%s3 + $0x20] sm:$0x1]
        %v2264 = vlaneseq
        %v2265 = vshrl.u32 %v2264, 7
        %v2266 = vsub.s32 0, %v2265
        %v2267 = vrot.slane %v2263, %v2266
        %v2268 = vmul.f32 %v2255, %v2267
        %v2269 = vmul.f32 %v2256, %v2267
        %v2270 = vmul.f32 %v2257, %v2267
        %v2271 = vmul.f32 %v2258, %v2267
        %v2272 = vmul.f32 %v2259, %v2267
        %v2273 = vmul.f32 %v2260, %v2267
        %v2274 = vmul.f32 %v2261, %v2267
        %v2275 = vmul.f32 %v2262, %v2267
        %v2276 = vadd.f32 %v2226, %v2268
        %v2277 = vadd.f32 %v2227, %v2269
        %v2278 = vadd.f32 %v2228, %v2270
        %v2279 = vadd.f32 %v2229, %v2271
        %v2280 = vadd.f32 %v2230, %v2272
        %v2281 = vadd.f32 %v2231, %v2273
        %v2282 = vadd.f32 %v2232, %v2274
        %v2283 = vadd.f32 %v2233, %v2275
        %v2284 = vld [vmem:[%s4 + $0x20] sm:$0x1]
        %v2285 = vlaneseq
        %v2286 = vshrl.u32 %v2285, 7
        %v2287 = vsub.s32 0, %v2286
        %v2288 = vrot.slane %v2284, %v2287
        %v2289 = vmul.f32 %v2255, %v2288
        %v2290 = vmul.f32 %v2256, %v2288
        %v2291 = vmul.f32 %v2257, %v2288
        %v2292 = vmul.f32 %v2258, %v2288
        %v2293 = vmul.f32 %v2259, %v2288
        %v2294 = vmul.f32 %v2260, %v2288
        %v2295 = vmul.f32 %v2261, %v2288
        %v2296 = vmul.f32 %v2262, %v2288
        %v2297 = vadd.f32 %v2247, %v2289
        %v2298 = vadd.f32 %v2248, %v2290
        %v2299 = vadd.f32 %v2249, %v2291
        %v2300 = vadd.f32 %v2250, %v2292
        %v2301 = vadd.f32 %v2251, %v2293
        %v2302 = vadd.f32 %v2252, %v2294
        %v2303 = vadd.f32 %v2253, %v2295
        %v2304 = vadd.f32 %v2254, %v2296
        %v2305 = vld [vmem:[%s2054 + $0x5] sm:$0xff]
        %v2306 = vld [vmem:[%s2054 + $0x15] sm:$0xff]
        %v2307 = vld [vmem:[%s2054 + $0x25] sm:$0xff]
        %v2308 = vld [vmem:[%s2054 + $0x35] sm:$0xff]
        %v2309 = vld [vmem:[%s2054 + $0x45] sm:$0xff]
        %v2310 = vld [vmem:[%s2054 + $0x55] sm:$0xff]
        %v2311 = vld [vmem:[%s2054 + $0x65] sm:$0xff]
        %v2312 = vld [vmem:[%s2054 + $0x75] sm:$0xff]
        %v2313 = vld [vmem:[%s3 + $0x21] sm:$0x1]
        %v2314 = vlaneseq
        %v2315 = vshrl.u32 %v2314, 7
        %v2316 = vsub.s32 0, %v2315
        %v2317 = vrot.slane %v2313, %v2316
        %v2318 = vmul.f32 %v2305, %v2317
        %v2319 = vmul.f32 %v2306, %v2317
        %v2320 = vmul.f32 %v2307, %v2317
        %v2321 = vmul.f32 %v2308, %v2317
        %v2322 = vmul.f32 %v2309, %v2317
        %v2323 = vmul.f32 %v2310, %v2317
        %v2324 = vmul.f32 %v2311, %v2317
        %v2325 = vmul.f32 %v2312, %v2317
        %v2326 = vadd.f32 %v2276, %v2318
        %v2327 = vadd.f32 %v2277, %v2319
        %v2328 = vadd.f32 %v2278, %v2320
        %v2329 = vadd.f32 %v2279, %v2321
        %v2330 = vadd.f32 %v2280, %v2322
        %v2331 = vadd.f32 %v2281, %v2323
        %v2332 = vadd.f32 %v2282, %v2324
        %v2333 = vadd.f32 %v2283, %v2325
        %v2334 = vld [vmem:[%s4 + $0x21] sm:$0x1]
        %v2335 = vlaneseq
        %v2336 = vshrl.u32 %v2335, 7
        %v2337 = vsub.s32 0, %v2336
        %v2338 = vrot.slane %v2334, %v2337
        %v2339 = vmul.f32 %v2305, %v2338
        %v2340 = vmul.f32 %v2306, %v2338
        %v2341 = vmul.f32 %v2307, %v2338
        %v2342 = vmul.f32 %v2308, %v2338
        %v2343 = vmul.f32 %v2309, %v2338
        %v2344 = vmul.f32 %v2310, %v2338
        %v2345 = vmul.f32 %v2311, %v2338
        %v2346 = vmul.f32 %v2312, %v2338
        %v2347 = vadd.f32 %v2297, %v2339
        %v2348 = vadd.f32 %v2298, %v2340
        %v2349 = vadd.f32 %v2299, %v2341
        %v2350 = vadd.f32 %v2300, %v2342
        %v2351 = vadd.f32 %v2301, %v2343
        %v2352 = vadd.f32 %v2302, %v2344
        %v2353 = vadd.f32 %v2303, %v2345
        %v2354 = vadd.f32 %v2304, %v2346
        %v2355 = vld [vmem:[%s2054 + $0x6] sm:$0xff]
        %v2356 = vld [vmem:[%s2054 + $0x16] sm:$0xff]
        %v2357 = vld [vmem:[%s2054 + $0x26] sm:$0xff]
        %v2358 = vld [vmem:[%s2054 + $0x36] sm:$0xff]
        %v2359 = vld [vmem:[%s2054 + $0x46] sm:$0xff]
        %v2360 = vld [vmem:[%s2054 + $0x56] sm:$0xff]
        %v2361 = vld [vmem:[%s2054 + $0x66] sm:$0xff]
        %v2362 = vld [vmem:[%s2054 + $0x76] sm:$0xff]
        %v2363 = vld [vmem:[%s3 + $0x22] sm:$0x1]
        %v2364 = vlaneseq
        %v2365 = vshrl.u32 %v2364, 7
        %v2366 = vsub.s32 0, %v2365
        %v2367 = vrot.slane %v2363, %v2366
        %v2368 = vmul.f32 %v2355, %v2367
        %v2369 = vmul.f32 %v2356, %v2367
        %v2370 = vmul.f32 %v2357, %v2367
        %v2371 = vmul.f32 %v2358, %v2367
        %v2372 = vmul.f32 %v2359, %v2367
        %v2373 = vmul.f32 %v2360, %v2367
        %v2374 = vmul.f32 %v2361, %v2367
        %v2375 = vmul.f32 %v2362, %v2367
        %v2376 = vadd.f32 %v2326, %v2368
        %v2377 = vadd.f32 %v2327, %v2369
        %v2378 = vadd.f32 %v2328, %v2370
        %v2379 = vadd.f32 %v2329, %v2371
        %v2380 = vadd.f32 %v2330, %v2372
        %v2381 = vadd.f32 %v2331, %v2373
        %v2382 = vadd.f32 %v2332, %v2374
        %v2383 = vadd.f32 %v2333, %v2375
        %v2384 = vld [vmem:[%s4 + $0x22] sm:$0x1]
        %v2385 = vlaneseq
        %v2386 = vshrl.u32 %v2385, 7
        %v2387 = vsub.s32 0, %v2386
        %v2388 = vrot.slane %v2384, %v2387
        %v2389 = vmul.f32 %v2355, %v2388
        %v2390 = vmul.f32 %v2356, %v2388
        %v2391 = vmul.f32 %v2357, %v2388
        %v2392 = vmul.f32 %v2358, %v2388
        %v2393 = vmul.f32 %v2359, %v2388
        %v2394 = vmul.f32 %v2360, %v2388
        %v2395 = vmul.f32 %v2361, %v2388
        %v2396 = vmul.f32 %v2362, %v2388
        %v2397 = vadd.f32 %v2347, %v2389
        %v2398 = vadd.f32 %v2348, %v2390
        %v2399 = vadd.f32 %v2349, %v2391
        %v2400 = vadd.f32 %v2350, %v2392
        %v2401 = vadd.f32 %v2351, %v2393
        %v2402 = vadd.f32 %v2352, %v2394
        %v2403 = vadd.f32 %v2353, %v2395
        %v2404 = vadd.f32 %v2354, %v2396
        %s2405 = scalar_lea.vmem [#allocation2], 80
        %v2406 = vld [vmem:[%s2405] sm:$0xff]
        %v2407 = vld [vmem:[%s2405 + $0x10] sm:$0xff]
        %v2408 = vld [vmem:[%s2405 + $0x20] sm:$0xff]
        %v2409 = vld [vmem:[%s2405 + $0x30] sm:$0xff]
        %v2410 = vld [vmem:[%s2405 + $0x40] sm:$0xff]
        %v2411 = vld [vmem:[%s2405 + $0x50] sm:$0xff]
        %v2412 = vld [vmem:[%s2405 + $0x60] sm:$0xff]
        %v2413 = vld [vmem:[%s2405 + $0x70] sm:$0xff]
        %v2414 = vld [vmem:[%s3 + $0x23] sm:$0x1]
        %v2415 = vlaneseq
        %v2416 = vshrl.u32 %v2415, 7
        %v2417 = vsub.s32 0, %v2416
        %v2418 = vrot.slane %v2414, %v2417
        %v2419 = vmul.f32 %v2406, %v2418
        %v2420 = vmul.f32 %v2407, %v2418
        %v2421 = vmul.f32 %v2408, %v2418
        %v2422 = vmul.f32 %v2409, %v2418
        %v2423 = vmul.f32 %v2410, %v2418
        %v2424 = vmul.f32 %v2411, %v2418
        %v2425 = vmul.f32 %v2412, %v2418
        %v2426 = vmul.f32 %v2413, %v2418
        %v2427 = vadd.f32 %v2376, %v2419
        %v2428 = vadd.f32 %v2377, %v2420
        %v2429 = vadd.f32 %v2378, %v2421
        %v2430 = vadd.f32 %v2379, %v2422
        %v2431 = vadd.f32 %v2380, %v2423
        %v2432 = vadd.f32 %v2381, %v2424
        %v2433 = vadd.f32 %v2382, %v2425
        %v2434 = vadd.f32 %v2383, %v2426
        %v2435 = vld [vmem:[%s4 + $0x23] sm:$0x1]
        %v2436 = vlaneseq
        %v2437 = vshrl.u32 %v2436, 7
        %v2438 = vsub.s32 0, %v2437
        %v2439 = vrot.slane %v2435, %v2438
        %v2440 = vmul.f32 %v2406, %v2439
        %v2441 = vmul.f32 %v2407, %v2439
        %v2442 = vmul.f32 %v2408, %v2439
        %v2443 = vmul.f32 %v2409, %v2439
        %v2444 = vmul.f32 %v2410, %v2439
        %v2445 = vmul.f32 %v2411, %v2439
        %v2446 = vmul.f32 %v2412, %v2439
        %v2447 = vmul.f32 %v2413, %v2439
        %v2448 = vadd.f32 %v2397, %v2440
        %v2449 = vadd.f32 %v2398, %v2441
        %v2450 = vadd.f32 %v2399, %v2442
        %v2451 = vadd.f32 %v2400, %v2443
        %v2452 = vadd.f32 %v2401, %v2444
        %v2453 = vadd.f32 %v2402, %v2445
        %v2454 = vadd.f32 %v2403, %v2446
        %v2455 = vadd.f32 %v2404, %v2447
        %v2456 = vld [vmem:[%s2405 + $0x1] sm:$0xff]
        %v2457 = vld [vmem:[%s2405 + $0x11] sm:$0xff]
        %v2458 = vld [vmem:[%s2405 + $0x21] sm:$0xff]
        %v2459 = vld [vmem:[%s2405 + $0x31] sm:$0xff]
        %v2460 = vld [vmem:[%s2405 + $0x41] sm:$0xff]
        %v2461 = vld [vmem:[%s2405 + $0x51] sm:$0xff]
        %v2462 = vld [vmem:[%s2405 + $0x61] sm:$0xff]
        %v2463 = vld [vmem:[%s2405 + $0x71] sm:$0xff]
        %v2464 = vld [vmem:[%s3 + $0x24] sm:$0x1]
        %v2465 = vlaneseq
        %v2466 = vshrl.u32 %v2465, 7
        %v2467 = vsub.s32 0, %v2466
        %v2468 = vrot.slane %v2464, %v2467
        %v2469 = vmul.f32 %v2456, %v2468
        %v2470 = vmul.f32 %v2457, %v2468
        %v2471 = vmul.f32 %v2458, %v2468
        %v2472 = vmul.f32 %v2459, %v2468
        %v2473 = vmul.f32 %v2460, %v2468
        %v2474 = vmul.f32 %v2461, %v2468
        %v2475 = vmul.f32 %v2462, %v2468
        %v2476 = vmul.f32 %v2463, %v2468
        %v2477 = vadd.f32 %v2427, %v2469
        %v2478 = vadd.f32 %v2428, %v2470
        %v2479 = vadd.f32 %v2429, %v2471
        %v2480 = vadd.f32 %v2430, %v2472
        %v2481 = vadd.f32 %v2431, %v2473
        %v2482 = vadd.f32 %v2432, %v2474
        %v2483 = vadd.f32 %v2433, %v2475
        %v2484 = vadd.f32 %v2434, %v2476
        %v2485 = vld [vmem:[%s4 + $0x24] sm:$0x1]
        %v2486 = vlaneseq
        %v2487 = vshrl.u32 %v2486, 7
        %v2488 = vsub.s32 0, %v2487
        %v2489 = vrot.slane %v2485, %v2488
        %v2490 = vmul.f32 %v2456, %v2489
        %v2491 = vmul.f32 %v2457, %v2489
        %v2492 = vmul.f32 %v2458, %v2489
        %v2493 = vmul.f32 %v2459, %v2489
        %v2494 = vmul.f32 %v2460, %v2489
        %v2495 = vmul.f32 %v2461, %v2489
        %v2496 = vmul.f32 %v2462, %v2489
        %v2497 = vmul.f32 %v2463, %v2489
        %v2498 = vadd.f32 %v2448, %v2490
        %v2499 = vadd.f32 %v2449, %v2491
        %v2500 = vadd.f32 %v2450, %v2492
        %v2501 = vadd.f32 %v2451, %v2493
        %v2502 = vadd.f32 %v2452, %v2494
        %v2503 = vadd.f32 %v2453, %v2495
        %v2504 = vadd.f32 %v2454, %v2496
        %v2505 = vadd.f32 %v2455, %v2497
        %v2506 = vld [vmem:[%s2405 + $0x2] sm:$0xff]
        %v2507 = vld [vmem:[%s2405 + $0x12] sm:$0xff]
        %v2508 = vld [vmem:[%s2405 + $0x22] sm:$0xff]
        %v2509 = vld [vmem:[%s2405 + $0x32] sm:$0xff]
        %v2510 = vld [vmem:[%s2405 + $0x42] sm:$0xff]
        %v2511 = vld [vmem:[%s2405 + $0x52] sm:$0xff]
        %v2512 = vld [vmem:[%s2405 + $0x62] sm:$0xff]
        %v2513 = vld [vmem:[%s2405 + $0x72] sm:$0xff]
        %v2514 = vld [vmem:[%s3 + $0x25] sm:$0x1]
        %v2515 = vlaneseq
        %v2516 = vshrl.u32 %v2515, 7
        %v2517 = vsub.s32 0, %v2516
        %v2518 = vrot.slane %v2514, %v2517
        %v2519 = vmul.f32 %v2506, %v2518
        %v2520 = vmul.f32 %v2507, %v2518
        %v2521 = vmul.f32 %v2508, %v2518
        %v2522 = vmul.f32 %v2509, %v2518
        %v2523 = vmul.f32 %v2510, %v2518
        %v2524 = vmul.f32 %v2511, %v2518
        %v2525 = vmul.f32 %v2512, %v2518
        %v2526 = vmul.f32 %v2513, %v2518
        %v2527 = vadd.f32 %v2477, %v2519
        %v2528 = vadd.f32 %v2478, %v2520
        %v2529 = vadd.f32 %v2479, %v2521
        %v2530 = vadd.f32 %v2480, %v2522
        %v2531 = vadd.f32 %v2481, %v2523
        %v2532 = vadd.f32 %v2482, %v2524
        %v2533 = vadd.f32 %v2483, %v2525
        %v2534 = vadd.f32 %v2484, %v2526
        %v2535 = vld [vmem:[%s4 + $0x25] sm:$0x1]
        %v2536 = vlaneseq
        %v2537 = vshrl.u32 %v2536, 7
        %v2538 = vsub.s32 0, %v2537
        %v2539 = vrot.slane %v2535, %v2538
        %v2540 = vmul.f32 %v2506, %v2539
        %v2541 = vmul.f32 %v2507, %v2539
        %v2542 = vmul.f32 %v2508, %v2539
        %v2543 = vmul.f32 %v2509, %v2539
        %v2544 = vmul.f32 %v2510, %v2539
        %v2545 = vmul.f32 %v2511, %v2539
        %v2546 = vmul.f32 %v2512, %v2539
        %v2547 = vmul.f32 %v2513, %v2539
        %v2548 = vadd.f32 %v2498, %v2540
        %v2549 = vadd.f32 %v2499, %v2541
        %v2550 = vadd.f32 %v2500, %v2542
        %v2551 = vadd.f32 %v2501, %v2543
        %v2552 = vadd.f32 %v2502, %v2544
        %v2553 = vadd.f32 %v2503, %v2545
        %v2554 = vadd.f32 %v2504, %v2546
        %v2555 = vadd.f32 %v2505, %v2547
        %v2556 = vld [vmem:[%s2405 + $0x3] sm:$0xff]
        %v2557 = vld [vmem:[%s2405 + $0x13] sm:$0xff]
        %v2558 = vld [vmem:[%s2405 + $0x23] sm:$0xff]
        %v2559 = vld [vmem:[%s2405 + $0x33] sm:$0xff]
        %v2560 = vld [vmem:[%s2405 + $0x43] sm:$0xff]
        %v2561 = vld [vmem:[%s2405 + $0x53] sm:$0xff]
        %v2562 = vld [vmem:[%s2405 + $0x63] sm:$0xff]
        %v2563 = vld [vmem:[%s2405 + $0x73] sm:$0xff]
        %v2564 = vld [vmem:[%s3 + $0x26] sm:$0x1]
        %v2565 = vlaneseq
        %v2566 = vshrl.u32 %v2565, 7
        %v2567 = vsub.s32 0, %v2566
        %v2568 = vrot.slane %v2564, %v2567
        %v2569 = vmul.f32 %v2556, %v2568
        %v2570 = vmul.f32 %v2557, %v2568
        %v2571 = vmul.f32 %v2558, %v2568
        %v2572 = vmul.f32 %v2559, %v2568
        %v2573 = vmul.f32 %v2560, %v2568
        %v2574 = vmul.f32 %v2561, %v2568
        %v2575 = vmul.f32 %v2562, %v2568
        %v2576 = vmul.f32 %v2563, %v2568
        %v2577 = vadd.f32 %v2527, %v2569
        %v2578 = vadd.f32 %v2528, %v2570
        %v2579 = vadd.f32 %v2529, %v2571
        %v2580 = vadd.f32 %v2530, %v2572
        %v2581 = vadd.f32 %v2531, %v2573
        %v2582 = vadd.f32 %v2532, %v2574
        %v2583 = vadd.f32 %v2533, %v2575
        %v2584 = vadd.f32 %v2534, %v2576
        %v2585 = vld [vmem:[%s4 + $0x26] sm:$0x1]
        %v2586 = vlaneseq
        %v2587 = vshrl.u32 %v2586, 7
        %v2588 = vsub.s32 0, %v2587
        %v2589 = vrot.slane %v2585, %v2588
        %v2590 = vmul.f32 %v2556, %v2589
        %v2591 = vmul.f32 %v2557, %v2589
        %v2592 = vmul.f32 %v2558, %v2589
        %v2593 = vmul.f32 %v2559, %v2589
        %v2594 = vmul.f32 %v2560, %v2589
        %v2595 = vmul.f32 %v2561, %v2589
        %v2596 = vmul.f32 %v2562, %v2589
        %v2597 = vmul.f32 %v2563, %v2589
        %v2598 = vadd.f32 %v2548, %v2590
        %v2599 = vadd.f32 %v2549, %v2591
        %v2600 = vadd.f32 %v2550, %v2592
        %v2601 = vadd.f32 %v2551, %v2593
        %v2602 = vadd.f32 %v2552, %v2594
        %v2603 = vadd.f32 %v2553, %v2595
        %v2604 = vadd.f32 %v2554, %v2596
        %v2605 = vadd.f32 %v2555, %v2597
        %v2606 = vld [vmem:[%s2405 + $0x4] sm:$0xff]
        %v2607 = vld [vmem:[%s2405 + $0x14] sm:$0xff]
        %v2608 = vld [vmem:[%s2405 + $0x24] sm:$0xff]
        %v2609 = vld [vmem:[%s2405 + $0x34] sm:$0xff]
        %v2610 = vld [vmem:[%s2405 + $0x44] sm:$0xff]
        %v2611 = vld [vmem:[%s2405 + $0x54] sm:$0xff]
        %v2612 = vld [vmem:[%s2405 + $0x64] sm:$0xff]
        %v2613 = vld [vmem:[%s2405 + $0x74] sm:$0xff]
        %v2614 = vld [vmem:[%s3 + $0x27] sm:$0x1]
        %v2615 = vlaneseq
        %v2616 = vshrl.u32 %v2615, 7
        %v2617 = vsub.s32 0, %v2616
        %v2618 = vrot.slane %v2614, %v2617
        %v2619 = vmul.f32 %v2606, %v2618
        %v2620 = vmul.f32 %v2607, %v2618
        %v2621 = vmul.f32 %v2608, %v2618
        %v2622 = vmul.f32 %v2609, %v2618
        %v2623 = vmul.f32 %v2610, %v2618
        %v2624 = vmul.f32 %v2611, %v2618
        %v2625 = vmul.f32 %v2612, %v2618
        %v2626 = vmul.f32 %v2613, %v2618
        %v2627 = vadd.f32 %v2577, %v2619
        %v2628 = vadd.f32 %v2578, %v2620
        %v2629 = vadd.f32 %v2579, %v2621
        %v2630 = vadd.f32 %v2580, %v2622
        %v2631 = vadd.f32 %v2581, %v2623
        %v2632 = vadd.f32 %v2582, %v2624
        %v2633 = vadd.f32 %v2583, %v2625
        %v2634 = vadd.f32 %v2584, %v2626
        %v2635 = vld [vmem:[%s4 + $0x27] sm:$0x1]
        %v2636 = vlaneseq
        %v2637 = vshrl.u32 %v2636, 7
        %v2638 = vsub.s32 0, %v2637
        %v2639 = vrot.slane %v2635, %v2638
        %v2640 = vmul.f32 %v2606, %v2639
        %v2641 = vmul.f32 %v2607, %v2639
        %v2642 = vmul.f32 %v2608, %v2639
        %v2643 = vmul.f32 %v2609, %v2639
        %v2644 = vmul.f32 %v2610, %v2639
        %v2645 = vmul.f32 %v2611, %v2639
        %v2646 = vmul.f32 %v2612, %v2639
        %v2647 = vmul.f32 %v2613, %v2639
        %v2648 = vadd.f32 %v2598, %v2640
        %v2649 = vadd.f32 %v2599, %v2641
        %v2650 = vadd.f32 %v2600, %v2642
        %v2651 = vadd.f32 %v2601, %v2643
        %v2652 = vadd.f32 %v2602, %v2644
        %v2653 = vadd.f32 %v2603, %v2645
        %v2654 = vadd.f32 %v2604, %v2646
        %v2655 = vadd.f32 %v2605, %v2647
        %v2656 = vld [vmem:[%s2405 + $0x5] sm:$0xff]
        %v2657 = vld [vmem:[%s2405 + $0x15] sm:$0xff]
        %v2658 = vld [vmem:[%s2405 + $0x25] sm:$0xff]
        %v2659 = vld [vmem:[%s2405 + $0x35] sm:$0xff]
        %v2660 = vld [vmem:[%s2405 + $0x45] sm:$0xff]
        %v2661 = vld [vmem:[%s2405 + $0x55] sm:$0xff]
        %v2662 = vld [vmem:[%s2405 + $0x65] sm:$0xff]
        %v2663 = vld [vmem:[%s2405 + $0x75] sm:$0xff]
        %v2664 = vld [vmem:[%s3 + $0x28] sm:$0x1]
        %v2665 = vlaneseq
        %v2666 = vshrl.u32 %v2665, 7
        %v2667 = vsub.s32 0, %v2666
        %v2668 = vrot.slane %v2664, %v2667
        %v2669 = vmul.f32 %v2656, %v2668
        %v2670 = vmul.f32 %v2657, %v2668
        %v2671 = vmul.f32 %v2658, %v2668
        %v2672 = vmul.f32 %v2659, %v2668
        %v2673 = vmul.f32 %v2660, %v2668
        %v2674 = vmul.f32 %v2661, %v2668
        %v2675 = vmul.f32 %v2662, %v2668
        %v2676 = vmul.f32 %v2663, %v2668
        %v2677 = vadd.f32 %v2627, %v2669
        %v2678 = vadd.f32 %v2628, %v2670
        %v2679 = vadd.f32 %v2629, %v2671
        %v2680 = vadd.f32 %v2630, %v2672
        %v2681 = vadd.f32 %v2631, %v2673
        %v2682 = vadd.f32 %v2632, %v2674
        %v2683 = vadd.f32 %v2633, %v2675
        %v2684 = vadd.f32 %v2634, %v2676
        %v2685 = vld [vmem:[%s4 + $0x28] sm:$0x1]
        %v2686 = vlaneseq
        %v2687 = vshrl.u32 %v2686, 7
        %v2688 = vsub.s32 0, %v2687
        %v2689 = vrot.slane %v2685, %v2688
        %v2690 = vmul.f32 %v2656, %v2689
        %v2691 = vmul.f32 %v2657, %v2689
        %v2692 = vmul.f32 %v2658, %v2689
        %v2693 = vmul.f32 %v2659, %v2689
        %v2694 = vmul.f32 %v2660, %v2689
        %v2695 = vmul.f32 %v2661, %v2689
        %v2696 = vmul.f32 %v2662, %v2689
        %v2697 = vmul.f32 %v2663, %v2689
        %v2698 = vadd.f32 %v2648, %v2690
        %v2699 = vadd.f32 %v2649, %v2691
        %v2700 = vadd.f32 %v2650, %v2692
        %v2701 = vadd.f32 %v2651, %v2693
        %v2702 = vadd.f32 %v2652, %v2694
        %v2703 = vadd.f32 %v2653, %v2695
        %v2704 = vadd.f32 %v2654, %v2696
        %v2705 = vadd.f32 %v2655, %v2697
        %v2706 = vld [vmem:[%s2405 + $0x6] sm:$0xff]
        %v2707 = vld [vmem:[%s2405 + $0x16] sm:$0xff]
        %v2708 = vld [vmem:[%s2405 + $0x26] sm:$0xff]
        %v2709 = vld [vmem:[%s2405 + $0x36] sm:$0xff]
        %v2710 = vld [vmem:[%s2405 + $0x46] sm:$0xff]
        %v2711 = vld [vmem:[%s2405 + $0x56] sm:$0xff]
        %v2712 = vld [vmem:[%s2405 + $0x66] sm:$0xff]
        %v2713 = vld [vmem:[%s2405 + $0x76] sm:$0xff]
        %v2714 = vld [vmem:[%s3 + $0x29] sm:$0x1]
        %v2715 = vlaneseq
        %v2716 = vshrl.u32 %v2715, 7
        %v2717 = vsub.s32 0, %v2716
        %v2718 = vrot.slane %v2714, %v2717
        %v2719 = vmul.f32 %v2706, %v2718
        %v2720 = vmul.f32 %v2707, %v2718
        %v2721 = vmul.f32 %v2708, %v2718
        %v2722 = vmul.f32 %v2709, %v2718
        %v2723 = vmul.f32 %v2710, %v2718
        %v2724 = vmul.f32 %v2711, %v2718
        %v2725 = vmul.f32 %v2712, %v2718
        %v2726 = vmul.f32 %v2713, %v2718
        %v2727 = vadd.f32 %v2677, %v2719
        %v2728 = vadd.f32 %v2678, %v2720
        %v2729 = vadd.f32 %v2679, %v2721
        %v2730 = vadd.f32 %v2680, %v2722
        %v2731 = vadd.f32 %v2681, %v2723
        %v2732 = vadd.f32 %v2682, %v2724
        %v2733 = vadd.f32 %v2683, %v2725
        %v2734 = vadd.f32 %v2684, %v2726
        %v2735 = vld [vmem:[%s4 + $0x29] sm:$0x1]
        %v2736 = vlaneseq
        %v2737 = vshrl.u32 %v2736, 7
        %v2738 = vsub.s32 0, %v2737
        %v2739 = vrot.slane %v2735, %v2738
        %v2740 = vmul.f32 %v2706, %v2739
        %v2741 = vmul.f32 %v2707, %v2739
        %v2742 = vmul.f32 %v2708, %v2739
        %v2743 = vmul.f32 %v2709, %v2739
        %v2744 = vmul.f32 %v2710, %v2739
        %v2745 = vmul.f32 %v2711, %v2739
        %v2746 = vmul.f32 %v2712, %v2739
        %v2747 = vmul.f32 %v2713, %v2739
        %v2748 = vadd.f32 %v2698, %v2740
        %v2749 = vadd.f32 %v2699, %v2741
        %v2750 = vadd.f32 %v2700, %v2742
        %v2751 = vadd.f32 %v2701, %v2743
        %v2752 = vadd.f32 %v2702, %v2744
        %v2753 = vadd.f32 %v2703, %v2745
        %v2754 = vadd.f32 %v2704, %v2746
        %v2755 = vadd.f32 %v2705, %v2747
        %s2756 = scalar_lea.vmem [#allocation2], 96
        %v2757 = vld [vmem:[%s2756] sm:$0xff]
        %v2758 = vld [vmem:[%s2756 + $0x10] sm:$0xff]
        %v2759 = vld [vmem:[%s2756 + $0x20] sm:$0xff]
        %v2760 = vld [vmem:[%s2756 + $0x30] sm:$0xff]
        %v2761 = vld [vmem:[%s2756 + $0x40] sm:$0xff]
        %v2762 = vld [vmem:[%s2756 + $0x50] sm:$0xff]
        %v2763 = vld [vmem:[%s2756 + $0x60] sm:$0xff]
        %v2764 = vld [vmem:[%s2756 + $0x70] sm:$0xff]
        %v2765 = vld [vmem:[%s3 + $0x2a] sm:$0x1]
        %v2766 = vlaneseq
        %v2767 = vshrl.u32 %v2766, 7
        %v2768 = vsub.s32 0, %v2767
        %v2769 = vrot.slane %v2765, %v2768
        %v2770 = vmul.f32 %v2757, %v2769
        %v2771 = vmul.f32 %v2758, %v2769
        %v2772 = vmul.f32 %v2759, %v2769
        %v2773 = vmul.f32 %v2760, %v2769
        %v2774 = vmul.f32 %v2761, %v2769
        %v2775 = vmul.f32 %v2762, %v2769
        %v2776 = vmul.f32 %v2763, %v2769
        %v2777 = vmul.f32 %v2764, %v2769
        %v2778 = vadd.f32 %v2727, %v2770
        %v2779 = vadd.f32 %v2728, %v2771
        %v2780 = vadd.f32 %v2729, %v2772
        %v2781 = vadd.f32 %v2730, %v2773
        %v2782 = vadd.f32 %v2731, %v2774
        %v2783 = vadd.f32 %v2732, %v2775
        %v2784 = vadd.f32 %v2733, %v2776
        %v2785 = vadd.f32 %v2734, %v2777
        %v2786 = vld [vmem:[%s4 + $0x2a] sm:$0x1]
        %v2787 = vlaneseq
        %v2788 = vshrl.u32 %v2787, 7
        %v2789 = vsub.s32 0, %v2788
        %v2790 = vrot.slane %v2786, %v2789
        %v2791 = vmul.f32 %v2757, %v2790
        %v2792 = vmul.f32 %v2758, %v2790
        %v2793 = vmul.f32 %v2759, %v2790
        %v2794 = vmul.f32 %v2760, %v2790
        %v2795 = vmul.f32 %v2761, %v2790
        %v2796 = vmul.f32 %v2762, %v2790
        %v2797 = vmul.f32 %v2763, %v2790
        %v2798 = vmul.f32 %v2764, %v2790
        %v2799 = vadd.f32 %v2748, %v2791
        %v2800 = vadd.f32 %v2749, %v2792
        %v2801 = vadd.f32 %v2750, %v2793
        %v2802 = vadd.f32 %v2751, %v2794
        %v2803 = vadd.f32 %v2752, %v2795
        %v2804 = vadd.f32 %v2753, %v2796
        %v2805 = vadd.f32 %v2754, %v2797
        %v2806 = vadd.f32 %v2755, %v2798
        %v2807 = vld [vmem:[%s2756 + $0x1] sm:$0xff]
        %v2808 = vld [vmem:[%s2756 + $0x11] sm:$0xff]
        %v2809 = vld [vmem:[%s2756 + $0x21] sm:$0xff]
        %v2810 = vld [vmem:[%s2756 + $0x31] sm:$0xff]
        %v2811 = vld [vmem:[%s2756 + $0x41] sm:$0xff]
        %v2812 = vld [vmem:[%s2756 + $0x51] sm:$0xff]
        %v2813 = vld [vmem:[%s2756 + $0x61] sm:$0xff]
        %v2814 = vld [vmem:[%s2756 + $0x71] sm:$0xff]
        %v2815 = vld [vmem:[%s3 + $0x2b] sm:$0x1]
        %v2816 = vlaneseq
        %v2817 = vshrl.u32 %v2816, 7
        %v2818 = vsub.s32 0, %v2817
        %v2819 = vrot.slane %v2815, %v2818
        %v2820 = vmul.f32 %v2807, %v2819
        %v2821 = vmul.f32 %v2808, %v2819
        %v2822 = vmul.f32 %v2809, %v2819
        %v2823 = vmul.f32 %v2810, %v2819
        %v2824 = vmul.f32 %v2811, %v2819
        %v2825 = vmul.f32 %v2812, %v2819
        %v2826 = vmul.f32 %v2813, %v2819
        %v2827 = vmul.f32 %v2814, %v2819
        %v2828 = vadd.f32 %v2778, %v2820
        %v2829 = vadd.f32 %v2779, %v2821
        %v2830 = vadd.f32 %v2780, %v2822
        %v2831 = vadd.f32 %v2781, %v2823
        %v2832 = vadd.f32 %v2782, %v2824
        %v2833 = vadd.f32 %v2783, %v2825
        %v2834 = vadd.f32 %v2784, %v2826
        %v2835 = vadd.f32 %v2785, %v2827
        %v2836 = vld [vmem:[%s4 + $0x2b] sm:$0x1]
        %v2837 = vlaneseq
        %v2838 = vshrl.u32 %v2837, 7
        %v2839 = vsub.s32 0, %v2838
        %v2840 = vrot.slane %v2836, %v2839
        %v2841 = vmul.f32 %v2807, %v2840
        %v2842 = vmul.f32 %v2808, %v2840
        %v2843 = vmul.f32 %v2809, %v2840
        %v2844 = vmul.f32 %v2810, %v2840
        %v2845 = vmul.f32 %v2811, %v2840
        %v2846 = vmul.f32 %v2812, %v2840
        %v2847 = vmul.f32 %v2813, %v2840
        %v2848 = vmul.f32 %v2814, %v2840
        %v2849 = vadd.f32 %v2799, %v2841
        %v2850 = vadd.f32 %v2800, %v2842
        %v2851 = vadd.f32 %v2801, %v2843
        %v2852 = vadd.f32 %v2802, %v2844
        %v2853 = vadd.f32 %v2803, %v2845
        %v2854 = vadd.f32 %v2804, %v2846
        %v2855 = vadd.f32 %v2805, %v2847
        %v2856 = vadd.f32 %v2806, %v2848
        %v2857 = vld [vmem:[%s2756 + $0x2] sm:$0xff]
        %v2858 = vld [vmem:[%s2756 + $0x12] sm:$0xff]
        %v2859 = vld [vmem:[%s2756 + $0x22] sm:$0xff]
        %v2860 = vld [vmem:[%s2756 + $0x32] sm:$0xff]
        %v2861 = vld [vmem:[%s2756 + $0x42] sm:$0xff]
        %v2862 = vld [vmem:[%s2756 + $0x52] sm:$0xff]
        %v2863 = vld [vmem:[%s2756 + $0x62] sm:$0xff]
        %v2864 = vld [vmem:[%s2756 + $0x72] sm:$0xff]
        %v2865 = vld [vmem:[%s3 + $0x2c] sm:$0x1]
        %v2866 = vlaneseq
        %v2867 = vshrl.u32 %v2866, 7
        %v2868 = vsub.s32 0, %v2867
        %v2869 = vrot.slane %v2865, %v2868
        %v2870 = vmul.f32 %v2857, %v2869
        %v2871 = vmul.f32 %v2858, %v2869
        %v2872 = vmul.f32 %v2859, %v2869
        %v2873 = vmul.f32 %v2860, %v2869
        %v2874 = vmul.f32 %v2861, %v2869
        %v2875 = vmul.f32 %v2862, %v2869
        %v2876 = vmul.f32 %v2863, %v2869
        %v2877 = vmul.f32 %v2864, %v2869
        %v2878 = vadd.f32 %v2828, %v2870
        %v2879 = vadd.f32 %v2829, %v2871
        %v2880 = vadd.f32 %v2830, %v2872
        %v2881 = vadd.f32 %v2831, %v2873
        %v2882 = vadd.f32 %v2832, %v2874
        %v2883 = vadd.f32 %v2833, %v2875
        %v2884 = vadd.f32 %v2834, %v2876
        %v2885 = vadd.f32 %v2835, %v2877
        %v2886 = vld [vmem:[%s4 + $0x2c] sm:$0x1]
        %v2887 = vlaneseq
        %v2888 = vshrl.u32 %v2887, 7
        %v2889 = vsub.s32 0, %v2888
        %v2890 = vrot.slane %v2886, %v2889
        %v2891 = vmul.f32 %v2857, %v2890
        %v2892 = vmul.f32 %v2858, %v2890
        %v2893 = vmul.f32 %v2859, %v2890
        %v2894 = vmul.f32 %v2860, %v2890
        %v2895 = vmul.f32 %v2861, %v2890
        %v2896 = vmul.f32 %v2862, %v2890
        %v2897 = vmul.f32 %v2863, %v2890
        %v2898 = vmul.f32 %v2864, %v2890
        %v2899 = vadd.f32 %v2849, %v2891
        %v2900 = vadd.f32 %v2850, %v2892
        %v2901 = vadd.f32 %v2851, %v2893
        %v2902 = vadd.f32 %v2852, %v2894
        %v2903 = vadd.f32 %v2853, %v2895
        %v2904 = vadd.f32 %v2854, %v2896
        %v2905 = vadd.f32 %v2855, %v2897
        %v2906 = vadd.f32 %v2856, %v2898
        %v2907 = vld [vmem:[%s2756 + $0x3] sm:$0xff]
        %v2908 = vld [vmem:[%s2756 + $0x13] sm:$0xff]
        %v2909 = vld [vmem:[%s2756 + $0x23] sm:$0xff]
        %v2910 = vld [vmem:[%s2756 + $0x33] sm:$0xff]
        %v2911 = vld [vmem:[%s2756 + $0x43] sm:$0xff]
        %v2912 = vld [vmem:[%s2756 + $0x53] sm:$0xff]
        %v2913 = vld [vmem:[%s2756 + $0x63] sm:$0xff]
        %v2914 = vld [vmem:[%s2756 + $0x73] sm:$0xff]
        %v2915 = vld [vmem:[%s3 + $0x2d] sm:$0x1]
        %v2916 = vlaneseq
        %v2917 = vshrl.u32 %v2916, 7
        %v2918 = vsub.s32 0, %v2917
        %v2919 = vrot.slane %v2915, %v2918
        %v2920 = vmul.f32 %v2907, %v2919
        %v2921 = vmul.f32 %v2908, %v2919
        %v2922 = vmul.f32 %v2909, %v2919
        %v2923 = vmul.f32 %v2910, %v2919
        %v2924 = vmul.f32 %v2911, %v2919
        %v2925 = vmul.f32 %v2912, %v2919
        %v2926 = vmul.f32 %v2913, %v2919
        %v2927 = vmul.f32 %v2914, %v2919
        %v2928 = vadd.f32 %v2878, %v2920
        %v2929 = vadd.f32 %v2879, %v2921
        %v2930 = vadd.f32 %v2880, %v2922
        %v2931 = vadd.f32 %v2881, %v2923
        %v2932 = vadd.f32 %v2882, %v2924
        %v2933 = vadd.f32 %v2883, %v2925
        %v2934 = vadd.f32 %v2884, %v2926
        %v2935 = vadd.f32 %v2885, %v2927
        %v2936 = vld [vmem:[%s4 + $0x2d] sm:$0x1]
        %v2937 = vlaneseq
        %v2938 = vshrl.u32 %v2937, 7
        %v2939 = vsub.s32 0, %v2938
        %v2940 = vrot.slane %v2936, %v2939
        %v2941 = vmul.f32 %v2907, %v2940
        %v2942 = vmul.f32 %v2908, %v2940
        %v2943 = vmul.f32 %v2909, %v2940
        %v2944 = vmul.f32 %v2910, %v2940
        %v2945 = vmul.f32 %v2911, %v2940
        %v2946 = vmul.f32 %v2912, %v2940
        %v2947 = vmul.f32 %v2913, %v2940
        %v2948 = vmul.f32 %v2914, %v2940
        %v2949 = vadd.f32 %v2899, %v2941
        %v2950 = vadd.f32 %v2900, %v2942
        %v2951 = vadd.f32 %v2901, %v2943
        %v2952 = vadd.f32 %v2902, %v2944
        %v2953 = vadd.f32 %v2903, %v2945
        %v2954 = vadd.f32 %v2904, %v2946
        %v2955 = vadd.f32 %v2905, %v2947
        %v2956 = vadd.f32 %v2906, %v2948
        %v2957 = vld [vmem:[%s2756 + $0x4] sm:$0xff]
        %v2958 = vld [vmem:[%s2756 + $0x14] sm:$0xff]
        %v2959 = vld [vmem:[%s2756 + $0x24] sm:$0xff]
        %v2960 = vld [vmem:[%s2756 + $0x34] sm:$0xff]
        %v2961 = vld [vmem:[%s2756 + $0x44] sm:$0xff]
        %v2962 = vld [vmem:[%s2756 + $0x54] sm:$0xff]
        %v2963 = vld [vmem:[%s2756 + $0x64] sm:$0xff]
        %v2964 = vld [vmem:[%s2756 + $0x74] sm:$0xff]
        %v2965 = vld [vmem:[%s3 + $0x2e] sm:$0x1]
        %v2966 = vlaneseq
        %v2967 = vshrl.u32 %v2966, 7
        %v2968 = vsub.s32 0, %v2967
        %v2969 = vrot.slane %v2965, %v2968
        %v2970 = vmul.f32 %v2957, %v2969
        %v2971 = vmul.f32 %v2958, %v2969
        %v2972 = vmul.f32 %v2959, %v2969
        %v2973 = vmul.f32 %v2960, %v2969
        %v2974 = vmul.f32 %v2961, %v2969
        %v2975 = vmul.f32 %v2962, %v2969
        %v2976 = vmul.f32 %v2963, %v2969
        %v2977 = vmul.f32 %v2964, %v2969
        %v2978 = vadd.f32 %v2928, %v2970
        %v2979 = vadd.f32 %v2929, %v2971
        %v2980 = vadd.f32 %v2930, %v2972
        %v2981 = vadd.f32 %v2931, %v2973
        %v2982 = vadd.f32 %v2932, %v2974
        %v2983 = vadd.f32 %v2933, %v2975
        %v2984 = vadd.f32 %v2934, %v2976
        %v2985 = vadd.f32 %v2935, %v2977
        %v2986 = vld [vmem:[%s4 + $0x2e] sm:$0x1]
        %v2987 = vlaneseq
        %v2988 = vshrl.u32 %v2987, 7
        %v2989 = vsub.s32 0, %v2988
        %v2990 = vrot.slane %v2986, %v2989
        %v2991 = vmul.f32 %v2957, %v2990
        %v2992 = vmul.f32 %v2958, %v2990
        %v2993 = vmul.f32 %v2959, %v2990
        %v2994 = vmul.f32 %v2960, %v2990
        %v2995 = vmul.f32 %v2961, %v2990
        %v2996 = vmul.f32 %v2962, %v2990
        %v2997 = vmul.f32 %v2963, %v2990
        %v2998 = vmul.f32 %v2964, %v2990
        %v2999 = vadd.f32 %v2949, %v2991
        %v3000 = vadd.f32 %v2950, %v2992
        %v3001 = vadd.f32 %v2951, %v2993
        %v3002 = vadd.f32 %v2952, %v2994
        %v3003 = vadd.f32 %v2953, %v2995
        %v3004 = vadd.f32 %v2954, %v2996
        %v3005 = vadd.f32 %v2955, %v2997
        %v3006 = vadd.f32 %v2956, %v2998
        %v3007 = vld [vmem:[%s2756 + $0x5] sm:$0xff]
        %v3008 = vld [vmem:[%s2756 + $0x15] sm:$0xff]
        %v3009 = vld [vmem:[%s2756 + $0x25] sm:$0xff]
        %v3010 = vld [vmem:[%s2756 + $0x35] sm:$0xff]
        %v3011 = vld [vmem:[%s2756 + $0x45] sm:$0xff]
        %v3012 = vld [vmem:[%s2756 + $0x55] sm:$0xff]
        %v3013 = vld [vmem:[%s2756 + $0x65] sm:$0xff]
        %v3014 = vld [vmem:[%s2756 + $0x75] sm:$0xff]
        %v3015 = vld [vmem:[%s3 + $0x2f] sm:$0x1]
        %v3016 = vlaneseq
        %v3017 = vshrl.u32 %v3016, 7
        %v3018 = vsub.s32 0, %v3017
        %v3019 = vrot.slane %v3015, %v3018
        %v3020 = vmul.f32 %v3007, %v3019
        %v3021 = vmul.f32 %v3008, %v3019
        %v3022 = vmul.f32 %v3009, %v3019
        %v3023 = vmul.f32 %v3010, %v3019
        %v3024 = vmul.f32 %v3011, %v3019
        %v3025 = vmul.f32 %v3012, %v3019
        %v3026 = vmul.f32 %v3013, %v3019
        %v3027 = vmul.f32 %v3014, %v3019
        %v3028 = vadd.f32 %v2978, %v3020
        %v3029 = vadd.f32 %v2979, %v3021
        %v3030 = vadd.f32 %v2980, %v3022
        %v3031 = vadd.f32 %v2981, %v3023
        %v3032 = vadd.f32 %v2982, %v3024
        %v3033 = vadd.f32 %v2983, %v3025
        %v3034 = vadd.f32 %v2984, %v3026
        %v3035 = vadd.f32 %v2985, %v3027
        %v3036 = vld [vmem:[%s4 + $0x2f] sm:$0x1]
        %v3037 = vlaneseq
        %v3038 = vshrl.u32 %v3037, 7
        %v3039 = vsub.s32 0, %v3038
        %v3040 = vrot.slane %v3036, %v3039
        %v3041 = vmul.f32 %v3007, %v3040
        %v3042 = vmul.f32 %v3008, %v3040
        %v3043 = vmul.f32 %v3009, %v3040
        %v3044 = vmul.f32 %v3010, %v3040
        %v3045 = vmul.f32 %v3011, %v3040
        %v3046 = vmul.f32 %v3012, %v3040
        %v3047 = vmul.f32 %v3013, %v3040
        %v3048 = vmul.f32 %v3014, %v3040
        %v3049 = vadd.f32 %v2999, %v3041
        %v3050 = vadd.f32 %v3000, %v3042
        %v3051 = vadd.f32 %v3001, %v3043
        %v3052 = vadd.f32 %v3002, %v3044
        %v3053 = vadd.f32 %v3003, %v3045
        %v3054 = vadd.f32 %v3004, %v3046
        %v3055 = vadd.f32 %v3005, %v3047
        %v3056 = vadd.f32 %v3006, %v3048
        %v3057 = vld [vmem:[%s2756 + $0x6] sm:$0xff]
        %v3058 = vld [vmem:[%s2756 + $0x16] sm:$0xff]
        %v3059 = vld [vmem:[%s2756 + $0x26] sm:$0xff]
        %v3060 = vld [vmem:[%s2756 + $0x36] sm:$0xff]
        %v3061 = vld [vmem:[%s2756 + $0x46] sm:$0xff]
        %v3062 = vld [vmem:[%s2756 + $0x56] sm:$0xff]
        %v3063 = vld [vmem:[%s2756 + $0x66] sm:$0xff]
        %v3064 = vld [vmem:[%s2756 + $0x76] sm:$0xff]
        %v3065 = vld [vmem:[%s3 + $0x30] sm:$0x1]
        %v3066 = vlaneseq
        %v3067 = vshrl.u32 %v3066, 7
        %v3068 = vsub.s32 0, %v3067
        %v3069 = vrot.slane %v3065, %v3068
        %v3070 = vmul.f32 %v3057, %v3069
        %v3071 = vmul.f32 %v3058, %v3069
        %v3072 = vmul.f32 %v3059, %v3069
        %v3073 = vmul.f32 %v3060, %v3069
        %v3074 = vmul.f32 %v3061, %v3069
        %v3075 = vmul.f32 %v3062, %v3069
        %v3076 = vmul.f32 %v3063, %v3069
        %v3077 = vmul.f32 %v3064, %v3069
        %v3078 = vadd.f32 %v3028, %v3070
        %v3079 = vadd.f32 %v3029, %v3071
        %v3080 = vadd.f32 %v3030, %v3072
        %v3081 = vadd.f32 %v3031, %v3073
        %v3082 = vadd.f32 %v3032, %v3074
        %v3083 = vadd.f32 %v3033, %v3075
        %v3084 = vadd.f32 %v3034, %v3076
        %v3085 = vadd.f32 %v3035, %v3077
        %v3086 = vld [vmem:[%s4 + $0x30] sm:$0x1]
        %v3087 = vlaneseq
        %v3088 = vshrl.u32 %v3087, 7
        %v3089 = vsub.s32 0, %v3088
        %v3090 = vrot.slane %v3086, %v3089
        %v3091 = vmul.f32 %v3057, %v3090
        %v3092 = vmul.f32 %v3058, %v3090
        %v3093 = vmul.f32 %v3059, %v3090
        %v3094 = vmul.f32 %v3060, %v3090
        %v3095 = vmul.f32 %v3061, %v3090
        %v3096 = vmul.f32 %v3062, %v3090
        %v3097 = vmul.f32 %v3063, %v3090
        %v3098 = vmul.f32 %v3064, %v3090
        %v3099 = vadd.f32 %v3049, %v3091
        %v3100 = vadd.f32 %v3050, %v3092
        %v3101 = vadd.f32 %v3051, %v3093
        %v3102 = vadd.f32 %v3052, %v3094
        %v3103 = vadd.f32 %v3053, %v3095
        %v3104 = vadd.f32 %v3054, %v3096
        %v3105 = vadd.f32 %v3055, %v3097
        %v3106 = vadd.f32 %v3056, %v3098
        %v3107 = vld [vmem:[%s5] sm:$0xff]
        %v3109 = vsel %vm613, %v3099, 0
        %v3112 = vsel %vm613, %v3100, 0
        %v3115 = vsel %vm613, %v3101, 0
        %v3118 = vsel %vm613, %v3102, 0
        %v3121 = vsel %vm613, %v3103, 0
        %v3124 = vsel %vm613, %v3104, 0
        %v3127 = vsel %vm613, %v3105, 0
        %v3130 = vsel %vm613, %v3106, 0
        %3132 = vmatprep.subr.mxu0 0.0
        %3133 = vmatpush1.msra.mxu0 0.0
        %3134 = vmatprep.subr.mxu0 0.0
        %3135 = vmatpush1.msra.mxu0 0.0
        %3136 = vmatprep.subr.mxu0 0.0
        %3137 = vmatpush1.msra.mxu0 0.0
        %3138 = vmatprep.subr.mxu0 0.0
        %3139 = vmatpush1.msra.mxu0 0.0
        %3140 = vmatprep.subr.mxu0 0.0
        %3141 = vmatpush1.msra.mxu0 0.0
        %3142 = vmatprep.subr.mxu0 0.0
        %3143 = vmatpush1.msra.mxu0 0.0
        %3144 = vmatprep.subr.mxu0 0.0
        %3145 = vmatpush1.msra.mxu0 0.0
        %3146 = vmatprep.subr.mxu0 0.0
        %3147 = vmatpush1.msra.mxu0 0.0
        %3148 = vmatprep.subr.mxu0 0.0
        %3149 = vmatpush1.msra.mxu0 0.0
        %3150 = vmatprep.subr.mxu0 0.0
        %3151 = vmatpush1.msra.mxu0 0.0
        %3152 = vmatprep.subr.mxu0 0.0
        %3153 = vmatpush1.msra.mxu0 0.0
        %3154 = vmatprep.subr.mxu0 0.0
        %3155 = vmatpush1.msra.mxu0 0.0
        %3156 = vmatprep.subr.mxu0 0.0
        %3157 = vmatpush1.msra.mxu0 0.0
        %3158 = vmatprep.subr.mxu0 0.0
        %3159 = vmatpush1.msra.mxu0 0.0
        %3160 = vmatprep.subr.mxu0 0.0
        %3161 = vmatpush1.msra.mxu0 0.0
        %3162 = vmatprep.subr.mxu0 0.0
        %3163 = vmatpush1.msra.mxu0 %v3107
        %3164 = vmatprep.subr.mxu0 0.0
        %3165 = vmatpush2.msra.mxu0 0.0
        %3166 = vmatprep.subr.mxu0 0.0
        %3167 = vmatpush2.msra.mxu0 0.0
        %3168 = vmatprep.subr.mxu0 0.0
        %3169 = vmatpush2.msra.mxu0 0.0
        %3170 = vmatprep.subr.mxu0 0.0
        %3171 = vmatpush2.msra.mxu0 0.0
        %3172 = vmatprep.subr.mxu0 0.0
        %3173 = vmatpush2.msra.mxu0 0.0
        %3174 = vmatprep.subr.mxu0 0.0
        %3175 = vmatpush2.msra.mxu0 0.0
        %3176 = vmatprep.subr.mxu0 0.0
        %3177 = vmatpush2.msra.mxu0 0.0
        %3178 = vmatprep.subr.mxu0 0.0
        %3179 = vmatpush2.msra.mxu0 0.0
        %3180 = vmatprep.subr.mxu0 0.0
        %3181 = vmatpush2.msra.mxu0 0.0
        %3182 = vmatprep.subr.mxu0 0.0
        %3183 = vmatpush2.msra.mxu0 0.0
        %3184 = vmatprep.subr.mxu0 0.0
        %3185 = vmatpush2.msra.mxu0 0.0
        %3186 = vmatprep.subr.mxu0 0.0
        %3187 = vmatpush2.msra.mxu0 0.0
        %3188 = vmatprep.subr.mxu0 0.0
        %3189 = vmatpush2.msra.mxu0 0.0
        %3190 = vmatprep.subr.mxu0 0.0
        %3191 = vmatpush2.msra.mxu0 0.0
        %3192 = vmatprep.subr.mxu0 0.0
        %3193 = vmatpush2.msra.mxu0 0.0
        %3194 = vmatprep.subr.mxu0 0.0
        %3195 = vmatpush2.msra.mxu0 0.0
        %3196 = vmatprep.mubr.f32.mxu0 0.0
        %3197 = vmatmul.mubr.f32.gmra.mxu0 %v3109
        %v3198 = vpop.f32.mrf.mxu0
        %v3199 = vadd.f32 0.0, %v3198
        %v3200 = vpop.f32.mrf.mxu0
        %3201 = vmatprep.mubr.f32.mxu0 0.0
        %3202 = vmatmul.mubr.f32.gmra.mxu0 %v3112
        %v3203 = vpop.f32.mrf.mxu0
        %v3204 = vadd.f32 0.0, %v3203
        %v3205 = vpop.f32.mrf.mxu0
        %3206 = vmatprep.mubr.f32.mxu0 0.0
        %3207 = vmatmul.mubr.f32.gmra.mxu0 %v3115
        %v3208 = vpop.f32.mrf.mxu0
        %v3209 = vadd.f32 0.0, %v3208
        %v3210 = vpop.f32.mrf.mxu0
        %3211 = vmatprep.mubr.f32.mxu0 0.0
        %3212 = vmatmul.mubr.f32.gmra.mxu0 %v3118
        %v3213 = vpop.f32.mrf.mxu0
        %v3214 = vadd.f32 0.0, %v3213
        %v3215 = vpop.f32.mrf.mxu0
        %3216 = vmatprep.mubr.f32.mxu0 0.0
        %3217 = vmatmul.mubr.f32.gmra.mxu0 %v3121
        %v3218 = vpop.f32.mrf.mxu0
        %v3219 = vadd.f32 0.0, %v3218
        %v3220 = vpop.f32.mrf.mxu0
        %3221 = vmatprep.mubr.f32.mxu0 0.0
        %3222 = vmatmul.mubr.f32.gmra.mxu0 %v3124
        %v3223 = vpop.f32.mrf.mxu0
        %v3224 = vadd.f32 0.0, %v3223
        %v3225 = vpop.f32.mrf.mxu0
        %3226 = vmatprep.mubr.f32.mxu0 0.0
        %3227 = vmatmul.mubr.f32.gmra.mxu0 %v3127
        %v3228 = vpop.f32.mrf.mxu0
        %v3229 = vadd.f32 0.0, %v3228
        %v3230 = vpop.f32.mrf.mxu0
        %3231 = vmatprep.mubr.f32.mxu0 0.0
        %3232 = vmatmul.mubr.f32.gmra.mxu0 %v3130
        %v3233 = vpop.f32.mrf.mxu0
        %v3234 = vadd.f32 0.0, %v3233
        %v3235 = vpop.f32.mrf.mxu0
        %3236 = vdwg.mxu0
        %v3237 = vadd.f32 %v3078, %v3199
        %v3238 = vadd.f32 %v3079, %v3204
        %v3239 = vadd.f32 %v3080, %v3209
        %v3240 = vadd.f32 %v3081, %v3214
        %v3241 = vadd.f32 %v3082, %v3219
        %v3242 = vadd.f32 %v3083, %v3224
        %v3243 = vadd.f32 %v3084, %v3229
        %v3244 = vadd.f32 %v3085, %v3234
        %v3245 = vld [vmem:[%s6] sm:$0x1]
        %v3247 = vlaneseq
        %v3248 = vshrl.u32 %v3247, 7
        %v3249 = vsub.s32 0, %v3248
        %v3250 = vrot.slane %v3245, %v3249
        %v3252 = vadd.f32 %v3237, %v3250
        %v3253 = vadd.f32 %v3238, %v3250
        %v3254 = vadd.f32 %v3239, %v3250
        %v3255 = vadd.f32 %v3240, %v3250
        %v3256 = vadd.f32 %v3241, %v3250
        %v3257 = vadd.f32 %v3242, %v3250
        %v3258 = vadd.f32 %v3243, %v3250
        %v3259 = vadd.f32 %v3244, %v3250
        %v3260 = vsel %vm613, %v3252, 0.0
        %3261 = vadd.xlane.f32.xlu0 %v3260
        %v3262 = vpop.xlane.xlu0 %3261
        %v3263 = vsel %vm613, %v3253, 0.0
        %3264 = vadd.xlane.f32.xlu0 %v3263
        %v3265 = vpop.xlane.xlu0 %3264
        %v3266 = vsel %vm613, %v3254, 0.0
        %3267 = vadd.xlane.f32.xlu0 %v3266
        %v3268 = vpop.xlane.xlu0 %3267
        %v3269 = vsel %vm613, %v3255, 0.0
        %3270 = vadd.xlane.f32.xlu0 %v3269
        %v3271 = vpop.xlane.xlu0 %3270
        %v3272 = vsel %vm613, %v3256, 0.0
        %3273 = vadd.xlane.f32.xlu0 %v3272
        %v3274 = vpop.xlane.xlu0 %3273
        %v3275 = vsel %vm613, %v3257, 0.0
        %3276 = vadd.xlane.f32.xlu0 %v3275
        %v3277 = vpop.xlane.xlu0 %3276
        %v3278 = vsel %vm613, %v3258, 0.0
        %3279 = vadd.xlane.f32.xlu0 %v3278
        %v3280 = vpop.xlane.xlu0 %3279
        %v3281 = vsel %vm613, %v3259, 0.0
        %3282 = vadd.xlane.f32.xlu0 %v3281
        %v3283 = vpop.xlane.xlu0 %3282
        %v3284 = vrcp.pop 8.0
        %v3285 = vmul.f32 %v3262, %v3284
        %v3286 = vmul.f32 %v3265, %v3284
        %v3287 = vmul.f32 %v3268, %v3284
        %v3288 = vmul.f32 %v3271, %v3284
        %v3289 = vmul.f32 %v3274, %v3284
        %v3290 = vmul.f32 %v3277, %v3284
        %v3291 = vmul.f32 %v3280, %v3284
        %v3292 = vmul.f32 %v3283, %v3284
        %v3293 = vsub.f32 %v3252, %v3285
        %v3294 = vsub.f32 %v3253, %v3286
        %v3295 = vsub.f32 %v3254, %v3287
        %v3296 = vsub.f32 %v3255, %v3288
        %v3297 = vsub.f32 %v3256, %v3289
        %v3298 = vsub.f32 %v3257, %v3290
        %v3299 = vsub.f32 %v3258, %v3291
        %v3300 = vsub.f32 %v3259, %v3292
        %v3301 = vmul.f32 %v3293, %v3293
        %v3302 = vmul.f32 %v3294, %v3294
        %v3303 = vmul.f32 %v3295, %v3295
        %v3304 = vmul.f32 %v3296, %v3296
        %v3305 = vmul.f32 %v3297, %v3297
        %v3306 = vmul.f32 %v3298, %v3298
        %v3307 = vmul.f32 %v3299, %v3299
        %v3308 = vmul.f32 %v3300, %v3300
        %v3309 = vsel %vm613, %v3301, 0.0
        %3310 = vadd.xlane.f32.xlu0 %v3309
        %v3311 = vpop.xlane.xlu0 %3310
        %v3312 = vsel %vm613, %v3302, 0.0
        %3313 = vadd.xlane.f32.xlu0 %v3312
        %v3314 = vpop.xlane.xlu0 %3313
        %v3315 = vsel %vm613, %v3303, 0.0
        %3316 = vadd.xlane.f32.xlu0 %v3315
        %v3317 = vpop.xlane.xlu0 %3316
        %v3318 = vsel %vm613, %v3304, 0.0
        %3319 = vadd.xlane.f32.xlu0 %v3318
        %v3320 = vpop.xlane.xlu0 %3319
        %v3321 = vsel %vm613, %v3305, 0.0
        %3322 = vadd.xlane.f32.xlu0 %v3321
        %v3323 = vpop.xlane.xlu0 %3322
        %v3324 = vsel %vm613, %v3306, 0.0
        %3325 = vadd.xlane.f32.xlu0 %v3324
        %v3326 = vpop.xlane.xlu0 %3325
        %v3327 = vsel %vm613, %v3307, 0.0
        %3328 = vadd.xlane.f32.xlu0 %v3327
        %v3329 = vpop.xlane.xlu0 %3328
        %v3330 = vsel %vm613, %v3308, 0.0
        %3331 = vadd.xlane.f32.xlu0 %v3330
        %v3332 = vpop.xlane.xlu0 %3331
        %v3333 = vmul.f32 %v3311, %v3284
        %v3334 = vmul.f32 %v3314, %v3284
        %v3335 = vmul.f32 %v3317, %v3284
        %v3336 = vmul.f32 %v3320, %v3284
        %v3337 = vmul.f32 %v3323, %v3284
        %v3338 = vmul.f32 %v3326, %v3284
        %v3339 = vmul.f32 %v3329, %v3284
        %v3340 = vmul.f32 %v3332, %v3284
        %v3341 = vadd.f32 %v3333, 1e-06
        %v3342 = vadd.f32 %v3334, 1e-06
        %v3343 = vadd.f32 %v3335, 1e-06
        %v3344 = vadd.f32 %v3336, 1e-06
        %v3345 = vadd.f32 %v3337, 1e-06
        %v3346 = vadd.f32 %v3338, 1e-06
        %v3347 = vadd.f32 %v3339, 1e-06
        %v3348 = vadd.f32 %v3340, 1e-06
        %v3349 = vrsqrt.pop %v3341
        %v3350 = vrsqrt.pop %v3342
        %v3351 = vrsqrt.pop %v3343
        %v3352 = vrsqrt.pop %v3344
        %v3353 = vrsqrt.pop %v3345
        %v3354 = vrsqrt.pop %v3346
        %v3355 = vrsqrt.pop %v3347
        %v3356 = vrsqrt.pop %v3348
        %v3357 = vmul.f32 %v3293, %v3349
        %v3358 = vmul.f32 %v3294, %v3350
        %v3359 = vmul.f32 %v3295, %v3351
        %v3360 = vmul.f32 %v3296, %v3352
        %v3361 = vmul.f32 %v3297, %v3353
        %v3362 = vmul.f32 %v3298, %v3354
        %v3363 = vmul.f32 %v3299, %v3355
        %v3364 = vmul.f32 %v3300, %v3356
        %v3365 = vld [vmem:[%s7] sm:$0x1]
        %v3367 = vlaneseq
        %v3368 = vshrl.u32 %v3367, 7
        %v3369 = vsub.s32 0, %v3368
        %v3370 = vrot.slane %v3365, %v3369
        %v3372 = vmul.f32 %v3357, %v3370
        %v3373 = vmul.f32 %v3358, %v3370
        %v3374 = vmul.f32 %v3359, %v3370
        %v3375 = vmul.f32 %v3360, %v3370
        %v3376 = vmul.f32 %v3361, %v3370
        %v3377 = vmul.f32 %v3362, %v3370
        %v3378 = vmul.f32 %v3363, %v3370
        %v3379 = vmul.f32 %v3364, %v3370
        %v3380 = vld [vmem:[%s8] sm:$0x1]
        %v3382 = vlaneseq
        %v3383 = vshrl.u32 %v3382, 7
        %v3384 = vsub.s32 0, %v3383
        %v3385 = vrot.slane %v3380, %v3384
        %v3387 = vadd.f32 %v3372, %v3385
        %v3388 = vadd.f32 %v3373, %v3385
        %v3389 = vadd.f32 %v3374, %v3385
        %v3390 = vadd.f32 %v3375, %v3385
        %v3391 = vadd.f32 %v3376, %v3385
        %v3392 = vadd.f32 %v3377, %v3385
        %v3393 = vadd.f32 %v3378, %v3385
        %v3394 = vadd.f32 %v3379, %v3385
        %v3395 = vld [vmem:[%s9] sm:$0xff]
        %v3396 = vld [vmem:[%s10] sm:$0x1]
        %v3398 = vlaneseq
        %v3399 = vshrl.u32 %v3398, 7
        %v3400 = vsub.s32 0, %v3399
        %v3401 = vrot.slane %v3396, %v3400
        %v3404 = vsel %vm613, %v3387, 0
        %v3407 = vsel %vm613, %v3388, 0
        %v3410 = vsel %vm613, %v3389, 0
        %v3413 = vsel %vm613, %v3390, 0
        %v3416 = vsel %vm613, %v3391, 0
        %v3419 = vsel %vm613, %v3392, 0
        %v3422 = vsel %vm613, %v3393, 0
        %v3425 = vsel %vm613, %v3394, 0
        %3427 = vmatprep.subr.mxu0 0.0
        %3428 = vmatpush1.msra.mxu0 0.0
        %3429 = vmatprep.subr.mxu0 0.0
        %3430 = vmatpush1.msra.mxu0 0.0
        %3431 = vmatprep.subr.mxu0 0.0
        %3432 = vmatpush1.msra.mxu0 0.0
        %3433 = vmatprep.subr.mxu0 0.0
        %3434 = vmatpush1.msra.mxu0 0.0
        %3435 = vmatprep.subr.mxu0 0.0
        %3436 = vmatpush1.msra.mxu0 0.0
        %3437 = vmatprep.subr.mxu0 0.0
        %3438 = vmatpush1.msra.mxu0 0.0
        %3439 = vmatprep.subr.mxu0 0.0
        %3440 = vmatpush1.msra.mxu0 0.0
        %3441 = vmatprep.subr.mxu0 0.0
        %3442 = vmatpush1.msra.mxu0 0.0
        %3443 = vmatprep.subr.mxu0 0.0
        %3444 = vmatpush1.msra.mxu0 0.0
        %3445 = vmatprep.subr.mxu0 0.0
        %3446 = vmatpush1.msra.mxu0 0.0
        %3447 = vmatprep.subr.mxu0 0.0
        %3448 = vmatpush1.msra.mxu0 0.0
        %3449 = vmatprep.subr.mxu0 0.0
        %3450 = vmatpush1.msra.mxu0 0.0
        %3451 = vmatprep.subr.mxu0 0.0
        %3452 = vmatpush1.msra.mxu0 0.0
        %3453 = vmatprep.subr.mxu0 0.0
        %3454 = vmatpush1.msra.mxu0 0.0
        %3455 = vmatprep.subr.mxu0 0.0
        %3456 = vmatpush1.msra.mxu0 0.0
        %3457 = vmatprep.subr.mxu0 0.0
        %3458 = vmatpush1.msra.mxu0 %v3395
        %3459 = vmatprep.subr.mxu0 0.0
        %3460 = vmatpush2.msra.mxu0 0.0
        %3461 = vmatprep.subr.mxu0 0.0
        %3462 = vmatpush2.msra.mxu0 0.0
        %3463 = vmatprep.subr.mxu0 0.0
        %3464 = vmatpush2.msra.mxu0 0.0
        %3465 = vmatprep.subr.mxu0 0.0
        %3466 = vmatpush2.msra.mxu0 0.0
        %3467 = vmatprep.subr.mxu0 0.0
        %3468 = vmatpush2.msra.mxu0 0.0
        %3469 = vmatprep.subr.mxu0 0.0
        %3470 = vmatpush2.msra.mxu0 0.0
        %3471 = vmatprep.subr.mxu0 0.0
        %3472 = vmatpush2.msra.mxu0 0.0
        %3473 = vmatprep.subr.mxu0 0.0
        %3474 = vmatpush2.msra.mxu0 0.0
        %3475 = vmatprep.subr.mxu0 0.0
        %3476 = vmatpush2.msra.mxu0 0.0
        %3477 = vmatprep.subr.mxu0 0.0
        %3478 = vmatpush2.msra.mxu0 0.0
        %3479 = vmatprep.subr.mxu0 0.0
        %3480 = vmatpush2.msra.mxu0 0.0
        %3481 = vmatprep.subr.mxu0 0.0
        %3482 = vmatpush2.msra.mxu0 0.0
        %3483 = vmatprep.subr.mxu0 0.0
        %3484 = vmatpush2.msra.mxu0 0.0
        %3485 = vmatprep.subr.mxu0 0.0
        %3486 = vmatpush2.msra.mxu0 0.0
        %3487 = vmatprep.subr.mxu0 0.0
        %3488 = vmatpush2.msra.mxu0 0.0
        %3489 = vmatprep.subr.mxu0 0.0
        %3490 = vmatpush2.msra.mxu0 0.0
        %3491 = vmatprep.mubr.f32.mxu0 0.0
        %3492 = vmatmul.mubr.f32.gmra.mxu0 %v3404
        %v3493 = vpop.f32.mrf.mxu0
        %v3494 = vadd.f32 %v3401, %v3493
        %v3495 = vpop.f32.mrf.mxu0
        %3496 = vmatprep.mubr.f32.mxu0 0.0
        %3497 = vmatmul.mubr.f32.gmra.mxu0 %v3407
        %v3498 = vpop.f32.mrf.mxu0
        %v3499 = vadd.f32 %v3401, %v3498
        %v3500 = vpop.f32.mrf.mxu0
        %3501 = vmatprep.mubr.f32.mxu0 0.0
        %3502 = vmatmul.mubr.f32.gmra.mxu0 %v3410
        %v3503 = vpop.f32.mrf.mxu0
        %v3504 = vadd.f32 %v3401, %v3503
        %v3505 = vpop.f32.mrf.mxu0
        %3506 = vmatprep.mubr.f32.mxu0 0.0
        %3507 = vmatmul.mubr.f32.gmra.mxu0 %v3413
        %v3508 = vpop.f32.mrf.mxu0
        %v3509 = vadd.f32 %v3401, %v3508
        %v3510 = vpop.f32.mrf.mxu0
        %3511 = vmatprep.mubr.f32.mxu0 0.0
        %3512 = vmatmul.mubr.f32.gmra.mxu0 %v3416
        %v3513 = vpop.f32.mrf.mxu0
        %v3514 = vadd.f32 %v3401, %v3513
        %v3515 = vpop.f32.mrf.mxu0
        %3516 = vmatprep.mubr.f32.mxu0 0.0
        %3517 = vmatmul.mubr.f32.gmra.mxu0 %v3419
        %v3518 = vpop.f32.mrf.mxu0
        %v3519 = vadd.f32 %v3401, %v3518
        %v3520 = vpop.f32.mrf.mxu0
        %3521 = vmatprep.mubr.f32.mxu0 0.0
        %3522 = vmatmul.mubr.f32.gmra.mxu0 %v3422
        %v3523 = vpop.f32.mrf.mxu0
        %v3524 = vadd.f32 %v3401, %v3523
        %v3525 = vpop.f32.mrf.mxu0
        %3526 = vmatprep.mubr.f32.mxu0 0.0
        %3527 = vmatmul.mubr.f32.gmra.mxu0 %v3425
        %v3528 = vpop.f32.mrf.mxu0
        %v3529 = vadd.f32 %v3401, %v3528
        %v3530 = vpop.f32.mrf.mxu0
        %3531 = vdwg.mxu0
        %v3532 = vmul.f32 %v3494, 0.5
        %v3533 = vmul.f32 %v3499, 0.5
        %v3534 = vmul.f32 %v3504, 0.5
        %v3535 = vmul.f32 %v3509, 0.5
        %v3536 = vmul.f32 %v3514, 0.5
        %v3537 = vmul.f32 %v3519, 0.5
        %v3538 = vmul.f32 %v3524, 0.5
        %v3539 = vmul.f32 %v3529, 0.5
        %v3540 = vmul.f32 %v3494, 0.70710677
        %v3541 = vmul.f32 %v3499, 0.70710677
        %v3542 = vmul.f32 %v3504, 0.70710677
        %v3543 = vmul.f32 %v3509, 0.70710677
        %v3544 = vmul.f32 %v3514, 0.70710677
        %v3545 = vmul.f32 %v3519, 0.70710677
        %v3546 = vmul.f32 %v3524, 0.70710677
        %v3547 = vmul.f32 %v3529, 0.70710677
        %vm3548 = vcmp.ge.f32.partialorder %v3540, 0.0
        %vm3549 = vcmp.ge.f32.partialorder %v3541, 0.0
        %vm3550 = vcmp.ge.f32.partialorder %v3542, 0.0
        %vm3551 = vcmp.ge.f32.partialorder %v3543, 0.0
        %vm3552 = vcmp.ge.f32.partialorder %v3544, 0.0
        %vm3553 = vcmp.ge.f32.partialorder %v3545, 0.0
        %vm3554 = vcmp.ge.f32.partialorder %v3546, 0.0
        %vm3555 = vcmp.ge.f32.partialorder %v3547, 0.0
        %v3556 = vsel %vm3548, 1.0, -1.0
        %v3557 = vsel %vm3549, 1.0, -1.0
        %v3558 = vsel %vm3550, 1.0, -1.0
        %v3559 = vsel %vm3551, 1.0, -1.0
        %v3560 = vsel %vm3552, 1.0, -1.0
        %v3561 = vsel %vm3553, 1.0, -1.0
        %v3562 = vsel %vm3554, 1.0, -1.0
        %v3563 = vsel %vm3555, 1.0, -1.0
        %v3564 = vand.u32 2147483647, %v3540
        %v3565 = vand.u32 2147483647, %v3541
        %v3566 = vand.u32 2147483647, %v3542
        %v3567 = vand.u32 2147483647, %v3543
        %v3568 = vand.u32 2147483647, %v3544
        %v3569 = vand.u32 2147483647, %v3545
        %v3570 = vand.u32 2147483647, %v3546
        %v3571 = vand.u32 2147483647, %v3547
        %v3572 = vmul.f32 %v3564, 0.3275911
        %v3573 = vmul.f32 %v3565, 0.3275911
        %v3574 = vmul.f32 %v3566, 0.3275911
        %v3575 = vmul.f32 %v3567, 0.3275911
        %v3576 = vmul.f32 %v3568, 0.3275911
        %v3577 = vmul.f32 %v3569, 0.3275911
        %v3578 = vmul.f32 %v3570, 0.3275911
        %v3579 = vmul.f32 %v3571, 0.3275911
        %v3580 = vadd.f32 %v3572, 1.0
        %v3581 = vadd.f32 %v3573, 1.0
        %v3582 = vadd.f32 %v3574, 1.0
        %v3583 = vadd.f32 %v3575, 1.0
        %v3584 = vadd.f32 %v3576, 1.0
        %v3585 = vadd.f32 %v3577, 1.0
        %v3586 = vadd.f32 %v3578, 1.0
        %v3587 = vadd.f32 %v3579, 1.0
        %v3588 = vrcp.pop %v3580
        %v3589 = vmul.f32 1.0, %v3588
        %v3590 = vrcp.pop %v3581
        %v3591 = vmul.f32 1.0, %v3590
        %v3592 = vrcp.pop %v3582
        %v3593 = vmul.f32 1.0, %v3592
        %v3594 = vrcp.pop %v3583
        %v3595 = vmul.f32 1.0, %v3594
        %v3596 = vrcp.pop %v3584
        %v3597 = vmul.f32 1.0, %v3596
        %v3598 = vrcp.pop %v3585
        %v3599 = vmul.f32 1.0, %v3598
        %v3600 = vrcp.pop %v3586
        %v3601 = vmul.f32 1.0, %v3600
        %v3602 = vrcp.pop %v3587
        %v3603 = vmul.f32 1.0, %v3602
        %v3604 = vmul.f32 %v3589, 1.0614054
        %v3605 = vmul.f32 %v3591, 1.0614054
        %v3606 = vmul.f32 %v3593, 1.0614054
        %v3607 = vmul.f32 %v3595, 1.0614054
        %v3608 = vmul.f32 %v3597, 1.0614054
        %v3609 = vmul.f32 %v3599, 1.0614054
        %v3610 = vmul.f32 %v3601, 1.0614054
        %v3611 = vmul.f32 %v3603, 1.0614054
        %v3612 = vadd.f32 %v3604, -1.4531521
        %v3613 = vadd.f32 %v3605, -1.4531521
        %v3614 = vadd.f32 %v3606, -1.4531521
        %v3615 = vadd.f32 %v3607, -1.4531521
        %v3616 = vadd.f32 %v3608, -1.4531521
        %v3617 = vadd.f32 %v3609, -1.4531521
        %v3618 = vadd.f32 %v3610, -1.4531521
        %v3619 = vadd.f32 %v3611, -1.4531521
        %v3620 = vmul.f32 %v3589, %v3612
        %v3621 = vmul.f32 %v3591, %v3613
        %v3622 = vmul.f32 %v3593, %v3614
        %v3623 = vmul.f32 %v3595, %v3615
        %v3624 = vmul.f32 %v3597, %v3616
        %v3625 = vmul.f32 %v3599, %v3617
        %v3626 = vmul.f32 %v3601, %v3618
        %v3627 = vmul.f32 %v3603, %v3619
        %v3628 = vadd.f32 %v3620, 1.4214138
        %v3629 = vadd.f32 %v3621, 1.4214138
        %v3630 = vadd.f32 %v3622, 1.4214138
        %v3631 = vadd.f32 %v3623, 1.4214138
        %v3632 = vadd.f32 %v3624, 1.4214138
        %v3633 = vadd.f32 %v3625, 1.4214138
        %v3634 = vadd.f32 %v3626, 1.4214138
        %v3635 = vadd.f32 %v3627, 1.4214138
        %v3636 = vmul.f32 %v3589, %v3628
        %v3637 = vmul.f32 %v3591, %v3629
        %v3638 = vmul.f32 %v3593, %v3630
        %v3639 = vmul.f32 %v3595, %v3631
        %v3640 = vmul.f32 %v3597, %v3632
        %v3641 = vmul.f32 %v3599, %v3633
        %v3642 = vmul.f32 %v3601, %v3634
        %v3643 = vmul.f32 %v3603, %v3635
        %v3644 = vadd.f32 %v3636, -0.28449672
        %v3645 = vadd.f32 %v3637, -0.28449672
        %v3646 = vadd.f32 %v3638, -0.28449672
        %v3647 = vadd.f32 %v3639, -0.28449672
        %v3648 = vadd.f32 %v3640, -0.28449672
        %v3649 = vadd.f32 %v3641, -0.28449672
        %v3650 = vadd.f32 %v3642, -0.28449672
        %v3651 = vadd.f32 %v3643, -0.28449672
        %v3652 = vmul.f32 %v3589, %v3644
        %v3653 = vmul.f32 %v3591, %v3645
        %v3654 = vmul.f32 %v3593, %v3646
        %v3655 = vmul.f32 %v3595, %v3647
        %v3656 = vmul.f32 %v3597, %v3648
        %v3657 = vmul.f32 %v3599, %v3649
        %v3658 = vmul.f32 %v3601, %v3650
        %v3659 = vmul.f32 %v3603, %v3651
        %v3660 = vadd.f32 %v3652, 0.2548296
        %v3661 = vadd.f32 %v3653, 0.2548296
        %v3662 = vadd.f32 %v3654, 0.2548296
        %v3663 = vadd.f32 %v3655, 0.2548296
        %v3664 = vadd.f32 %v3656, 0.2548296
        %v3665 = vadd.f32 %v3657, 0.2548296
        %v3666 = vadd.f32 %v3658, 0.2548296
        %v3667 = vadd.f32 %v3659, 0.2548296
        %v3668 = vmul.f32 %v3589, %v3660
        %v3669 = vmul.f32 %v3591, %v3661
        %v3670 = vmul.f32 %v3593, %v3662
        %v3671 = vmul.f32 %v3595, %v3663
        %v3672 = vmul.f32 %v3597, %v3664
        %v3673 = vmul.f32 %v3599, %v3665
        %v3674 = vmul.f32 %v3601, %v3666
        %v3675 = vmul.f32 %v3603, %v3667
        %v3676 = vsub.f32 0.0, %v3564
        %v3677 = vsub.f32 0.0, %v3565
        %v3678 = vsub.f32 0.0, %v3566
        %v3679 = vsub.f32 0.0, %v3567
        %v3680 = vsub.f32 0.0, %v3568
        %v3681 = vsub.f32 0.0, %v3569
        %v3682 = vsub.f32 0.0, %v3570
        %v3683 = vsub.f32 0.0, %v3571
        %v3684 = vmul.f32 %v3676, %v3564
        %v3685 = vmul.f32 %v3677, %v3565
        %v3686 = vmul.f32 %v3678, %v3566
        %v3687 = vmul.f32 %v3679, %v3567
        %v3688 = vmul.f32 %v3680, %v3568
        %v3689 = vmul.f32 %v3681, %v3569
        %v3690 = vmul.f32 %v3682, %v3570
        %v3691 = vmul.f32 %v3683, %v3571
        %v3692 = vmul.f32 %v3684, 1.442695
        %v3693 = vpow.pop %v3692
        %v3694 = vmul.f32 %v3685, 1.442695
        %v3695 = vpow.pop %v3694
        %v3696 = vmul.f32 %v3686, 1.442695
        %v3697 = vpow.pop %v3696
        %v3698 = vmul.f32 %v3687, 1.442695
        %v3699 = vpow.pop %v3698
        %v3700 = vmul.f32 %v3688, 1.442695
        %v3701 = vpow.pop %v3700
        %v3702 = vmul.f32 %v3689, 1.442695
        %v3703 = vpow.pop %v3702
        %v3704 = vmul.f32 %v3690, 1.442695
        %v3705 = vpow.pop %v3704
        %v3706 = vmul.f32 %v3691, 1.442695
        %v3707 = vpow.pop %v3706
        %v3708 = vmul.f32 %v3668, %v3693
        %v3709 = vmul.f32 %v3669, %v3695
        %v3710 = vmul.f32 %v3670, %v3697
        %v3711 = vmul.f32 %v3671, %v3699
        %v3712 = vmul.f32 %v3672, %v3701
        %v3713 = vmul.f32 %v3673, %v3703
        %v3714 = vmul.f32 %v3674, %v3705
        %v3715 = vmul.f32 %v3675, %v3707
        %v3716 = vsub.f32 1.0, %v3708
        %v3717 = vsub.f32 1.0, %v3709
        %v3718 = vsub.f32 1.0, %v3710
        %v3719 = vsub.f32 1.0, %v3711
        %v3720 = vsub.f32 1.0, %v3712
        %v3721 = vsub.f32 1.0, %v3713
        %v3722 = vsub.f32 1.0, %v3714
        %v3723 = vsub.f32 1.0, %v3715
        %v3724 = vmul.f32 %v3556, %v3716
        %v3725 = vmul.f32 %v3557, %v3717
        %v3726 = vmul.f32 %v3558, %v3718
        %v3727 = vmul.f32 %v3559, %v3719
        %v3728 = vmul.f32 %v3560, %v3720
        %v3729 = vmul.f32 %v3561, %v3721
        %v3730 = vmul.f32 %v3562, %v3722
        %v3731 = vmul.f32 %v3563, %v3723
        %v3732 = vadd.f32 %v3724, 1.0
        %v3733 = vadd.f32 %v3725, 1.0
        %v3734 = vadd.f32 %v3726, 1.0
        %v3735 = vadd.f32 %v3727, 1.0
        %v3736 = vadd.f32 %v3728, 1.0
        %v3737 = vadd.f32 %v3729, 1.0
        %v3738 = vadd.f32 %v3730, 1.0
        %v3739 = vadd.f32 %v3731, 1.0
        %v3740 = vmul.f32 %v3532, %v3732
        %v3741 = vmul.f32 %v3533, %v3733
        %v3742 = vmul.f32 %v3534, %v3734
        %v3743 = vmul.f32 %v3535, %v3735
        %v3744 = vmul.f32 %v3536, %v3736
        %v3745 = vmul.f32 %v3537, %v3737
        %v3746 = vmul.f32 %v3538, %v3738
        %v3747 = vmul.f32 %v3539, %v3739
        %v3748 = vld [vmem:[%s11] sm:$0xff]
        %v3749 = vld [vmem:[%s11 + $0x8] sm:$0xff]
        %v3750 = vld [vmem:[%s12] sm:$0x1]
        %v3752 = vlaneseq
        %v3753 = vshrl.u32 %v3752, 7
        %v3754 = vsub.s32 0, %v3753
        %v3755 = vrot.slane %v3750, %v3754
        %v3758 = vsel %vm483, %v3740, 0
        %v3761 = vsel %vm483, %v3741, 0
        %v3764 = vsel %vm483, %v3742, 0
        %v3767 = vsel %vm483, %v3743, 0
        %v3770 = vsel %vm483, %v3744, 0
        %v3773 = vsel %vm483, %v3745, 0
        %v3776 = vsel %vm483, %v3746, 0
        %v3779 = vsel %vm483, %v3747, 0
        %3781 = vmatprep.subr.mxu0 0.0
        %3782 = vmatpush1.msra.mxu0 0.0
        %3783 = vmatprep.subr.mxu0 0.0
        %3784 = vmatpush1.msra.mxu0 0.0
        %3785 = vmatprep.subr.mxu0 0.0
        %3786 = vmatpush1.msra.mxu0 0.0
        %3787 = vmatprep.subr.mxu0 0.0
        %3788 = vmatpush1.msra.mxu0 0.0
        %3789 = vmatprep.subr.mxu0 0.0
        %3790 = vmatpush1.msra.mxu0 0.0
        %3791 = vmatprep.subr.mxu0 0.0
        %3792 = vmatpush1.msra.mxu0 0.0
        %3793 = vmatprep.subr.mxu0 0.0
        %3794 = vmatpush1.msra.mxu0 0.0
        %3795 = vmatprep.subr.mxu0 0.0
        %3796 = vmatpush1.msra.mxu0 0.0
        %3797 = vmatprep.subr.mxu0 0.0
        %3798 = vmatpush1.msra.mxu0 0.0
        %3799 = vmatprep.subr.mxu0 0.0
        %3800 = vmatpush1.msra.mxu0 0.0
        %3801 = vmatprep.subr.mxu0 0.0
        %3802 = vmatpush1.msra.mxu0 0.0
        %3803 = vmatprep.subr.mxu0 0.0
        %3804 = vmatpush1.msra.mxu0 0.0
        %3805 = vmatprep.subr.mxu0 0.0
        %3806 = vmatpush1.msra.mxu0 0.0
        %3807 = vmatprep.subr.mxu0 0.0
        %3808 = vmatpush1.msra.mxu0 0.0
        %3809 = vmatprep.subr.mxu0 0.0
        %3810 = vmatpush1.msra.mxu0 %v3749
        %3811 = vmatprep.subr.mxu0 0.0
        %3812 = vmatpush1.msra.mxu0 %v3748
        %3813 = vmatprep.subr.mxu0 0.0
        %3814 = vmatpush2.msra.mxu0 0.0
        %3815 = vmatprep.subr.mxu0 0.0
        %3816 = vmatpush2.msra.mxu0 0.0
        %3817 = vmatprep.subr.mxu0 0.0
        %3818 = vmatpush2.msra.mxu0 0.0
        %3819 = vmatprep.subr.mxu0 0.0
        %3820 = vmatpush2.msra.mxu0 0.0
        %3821 = vmatprep.subr.mxu0 0.0
        %3822 = vmatpush2.msra.mxu0 0.0
        %3823 = vmatprep.subr.mxu0 0.0
        %3824 = vmatpush2.msra.mxu0 0.0
        %3825 = vmatprep.subr.mxu0 0.0
        %3826 = vmatpush2.msra.mxu0 0.0
        %3827 = vmatprep.subr.mxu0 0.0
        %3828 = vmatpush2.msra.mxu0 0.0
        %3829 = vmatprep.subr.mxu0 0.0
        %3830 = vmatpush2.msra.mxu0 0.0
        %3831 = vmatprep.subr.mxu0 0.0
        %3832 = vmatpush2.msra.mxu0 0.0
        %3833 = vmatprep.subr.mxu0 0.0
        %3834 = vmatpush2.msra.mxu0 0.0
        %3835 = vmatprep.subr.mxu0 0.0
        %3836 = vmatpush2.msra.mxu0 0.0
        %3837 = vmatprep.subr.mxu0 0.0
        %3838 = vmatpush2.msra.mxu0 0.0
        %3839 = vmatprep.subr.mxu0 0.0
        %3840 = vmatpush2.msra.mxu0 0.0
        %3841 = vmatprep.subr.mxu0 0.0
        %3842 = vmatpush2.msra.mxu0 0.0
        %3843 = vmatprep.subr.mxu0 0.0
        %3844 = vmatpush2.msra.mxu0 0.0
        %3845 = vmatprep.mubr.f32.mxu0 0.0
        %3846 = vmatmul.mubr.f32.gmra.mxu0 %v3758
        %v3847 = vpop.f32.mrf.mxu0
        %v3848 = vadd.f32 %v3755, %v3847
        %v3849 = vpop.f32.mrf.mxu0
        %3850 = vmatprep.mubr.f32.mxu0 0.0
        %3851 = vmatmul.mubr.f32.gmra.mxu0 %v3761
        %v3852 = vpop.f32.mrf.mxu0
        %v3853 = vadd.f32 %v3755, %v3852
        %v3854 = vpop.f32.mrf.mxu0
        %3855 = vmatprep.mubr.f32.mxu0 0.0
        %3856 = vmatmul.mubr.f32.gmra.mxu0 %v3764
        %v3857 = vpop.f32.mrf.mxu0
        %v3858 = vadd.f32 %v3755, %v3857
        %v3859 = vpop.f32.mrf.mxu0
        %3860 = vmatprep.mubr.f32.mxu0 0.0
        %3861 = vmatmul.mubr.f32.gmra.mxu0 %v3767
        %v3862 = vpop.f32.mrf.mxu0
        %v3863 = vadd.f32 %v3755, %v3862
        %v3864 = vpop.f32.mrf.mxu0
        %3865 = vmatprep.mubr.f32.mxu0 0.0
        %3866 = vmatmul.mubr.f32.gmra.mxu0 %v3770
        %v3867 = vpop.f32.mrf.mxu0
        %v3868 = vadd.f32 %v3755, %v3867
        %v3869 = vpop.f32.mrf.mxu0
        %3870 = vmatprep.mubr.f32.mxu0 0.0
        %3871 = vmatmul.mubr.f32.gmra.mxu0 %v3773
        %v3872 = vpop.f32.mrf.mxu0
        %v3873 = vadd.f32 %v3755, %v3872
        %v3874 = vpop.f32.mrf.mxu0
        %3875 = vmatprep.mubr.f32.mxu0 0.0
        %3876 = vmatmul.mubr.f32.gmra.mxu0 %v3776
        %v3877 = vpop.f32.mrf.mxu0
        %v3878 = vadd.f32 %v3755, %v3877
        %v3879 = vpop.f32.mrf.mxu0
        %3880 = vmatprep.mubr.f32.mxu0 0.0
        %3881 = vmatmul.mubr.f32.gmra.mxu0 %v3779
        %v3882 = vpop.f32.mrf.mxu0
        %v3883 = vadd.f32 %v3755, %v3882
        %v3884 = vpop.f32.mrf.mxu0
        %3885 = vdwg.mxu0
        %v3886 = vld [vmem:[%s13] sm:$0x1]
        %v3888 = vlaneseq
        %v3889 = vshrl.u32 %v3888, 7
        %v3890 = vsub.s32 0, %v3889
        %v3891 = vrot.slane %v3886, %v3890
        %v3893 = vmul.f32 %v3891, %v3848
        %v3894 = vmul.f32 %v3891, %v3853
        %v3895 = vmul.f32 %v3891, %v3858
        %v3896 = vmul.f32 %v3891, %v3863
        %v3897 = vmul.f32 %v3891, %v3868
        %v3898 = vmul.f32 %v3891, %v3873
        %v3899 = vmul.f32 %v3891, %v3878
        %v3900 = vmul.f32 %v3891, %v3883
        %v3901 = vadd.f32 %v575, %v3893
        %v3902 = vadd.f32 %v580, %v3894
        %v3903 = vadd.f32 %v585, %v3895
        %v3904 = vadd.f32 %v590, %v3896
        %v3905 = vadd.f32 %v595, %v3897
        %v3906 = vadd.f32 %v600, %v3898
        %v3907 = vadd.f32 %v605, %v3899
        %v3908 = vadd.f32 %v610, %v3900
        %3909 = vst.msk [vmem:[%s460] sm:$0xff] %vm613, %v3901
        %3910 = vst.msk [vmem:[%s460 + $0x8] sm:$0xff] %vm613, %v3902
        %3911 = vst.msk [vmem:[%s460 + $0x10] sm:$0xff] %vm613, %v3903
        %3912 = vst.msk [vmem:[%s460 + $0x18] sm:$0xff] %vm613, %v3904
        %3913 = vst.msk [vmem:[%s460 + $0x20] sm:$0xff] %vm613, %v3905
        %3914 = vst.msk [vmem:[%s460 + $0x28] sm:$0xff] %vm613, %v3906
        %3915 = vst.msk [vmem:[%s460 + $0x30] sm:$0xff] %vm613, %v3907
        %3916 = vst.msk [vmem:[%s460 + $0x38] sm:$0xff] %vm613, %v3908
        %s3917 = sand.u32 %s335, 1
        %s3918 = scalar_lea.sflag [#allocation4], %s3917
        %s3919 = sand.u32 %s335, 1
        %s3920 = smul.addr %s3919, 64
        %s3921 = scalar_lea.vmem [#allocation3], %s3920
        // Predicated region
        $region77: #{tpu_custom_call.1} parent=75 // pred_check
          %p3922 = pneg %p345
        $region78: #{tpu_custom_call.1} parent=75 // pred_check_branch
          %3924 = sbr.rel (%p3922) target = $region80
        $region79: #{tpu_custom_call.1} parent=75 // pred_region
          %s3926 = ssub.s32 1024, 1024
          %3927 = vsyncadd %s3918, %s3926
          %s3928 = smul.addr %s28, 8
          %s3929 = smul.addr %s3928, 128
          %s3930 = scalar_lea.hbm %s14, %s3929
          %s3931 = sshll.u32 %s3921, 4
          %s3932 = int_to_ptr.vmem [resolvable:$true] %s3931
          %3937 = dma.vmem_to_hbm [thread:$0]  %s3932, 1024, %s3930, %s3918, 128, 128, 8
        $region80: #{tpu_custom_call.1} parent=75 // pred_fallthru
          _
      $region76: #{tpu_custom_call.1} parent=5 // pred_fallthru
        _
      %p3938 = scmp.le.s32.totalorder 2, %s23
      // Predicated region
      $region81: #{tpu_custom_call.1} parent=5 // pred_check
        %p3939 = pneg %p3938
      $region82: #{tpu_custom_call.1} parent=5 // pred_check_branch
        %3941 = sbr.rel (%p3939) target = $region84
      $region83: #{tpu_custom_call.1} parent=5 // pred_region
        %s3942 = ssub.s32 %s23, 2
        // Predicated region
        $region85: #{tpu_custom_call.1} parent=83 // pred_check
          %p3943 = pneg %p351
        $region86: #{tpu_custom_call.1} parent=83 // pred_check_branch
          %3945 = sbr.rel (%p3943) target = $region88
        $region87: #{tpu_custom_call.1} parent=83 // pred_region
          %s3946 = sand.u32 %s336, 1
          %s3947 = scalar_lea.sflag [#allocation4], %s3946
          %s3948 = sand.u32 %s336, 1
          %s3949 = smul.addr %s3948, 64
          %s3950 = scalar_lea.vmem [#allocation3], %s3949
          %3951 = dma.done %s3947, 1024
        $region88: #{tpu_custom_call.1} parent=83 // pred_fallthru
          _
      $region84: #{tpu_custom_call.1} parent=5 // pred_fallthru
        _
    $region6: #{tpu_custom_call.1} parent=1 // loop_footer
      %s27 = sadd.s32 1, %s23
    $region7: #{tpu_custom_call.1} parent=1 // loop_footer_branch
      %22 = sbr.rel target = $region3
    $region8: #{tpu_custom_call.1} parent=1 // loop_exit
      _
    %3952 = vsyncpa [#allocation4], 1
    %s3953 = scalar_lea.sflag [#allocation4], 1
    %3954 = vsyncpa %s3953, 1

</llo_original>
